<compile_context>
chip_gen: v7x
topology: tpu7x:2x2x1
jax: 0.10.0
libtpu: 0.0.40
codegen_flags: <defaults>
</compile_context>

<pallas_src>
import math
import functools

import jax
import jax.numpy as jnp
from jax import lax
from jax.experimental import pallas as pl
from jax.experimental.pallas import tpu as pltpu


# --------------------------------------------------------------------------- #
# Kernel
# --------------------------------------------------------------------------- #
def _mha_fused_kernel(q_ref, k_ref, v_ref,
                      wq_ref, bq_ref, wk_ref, bk_ref, wv_ref, bv_ref,
                      wo_ref, bo_ref,
                      out_ref,
                      kp_ref, vp_ref, ctx_ref,
                      *, h, d_k, tk):
    """One (batch, query-tile) grid step.

    q_ref             : (1, tq, D) bf16 query activations of this tile
    k_ref / v_ref     : (1, S,  D) bf16 key/value activations (full sequence)
    wq/wk/wv/wo_ref   : (D, D)     bf16 projection weights (VMEM-resident)
    bq/bk/bv/bo_ref   : (1, D)     f32  biases (1/sqrt(d_k) folded into wq/bq)
    out_ref           : (1, tq, D) f32  output tile (lane-dense)
    kp_ref / vp_ref   : (S, D)     bf16 scratch — projected K/V of this batch
    ctx_ref           : (tq, D)    bf16 scratch — concatenated per-head context
    """
    qi = pl.program_id(1)

    # ---- K/V projection: once per batch; scratch persists across the qi axis.
    @pl.when(qi == 0)
    def _project_kv():
        kp_ref[...] = (jnp.dot(k_ref[0], wk_ref[...],
                               preferred_element_type=jnp.float32)
                       + bk_ref[...]).astype(jnp.bfloat16)
        vp_ref[...] = (jnp.dot(v_ref[0], wv_ref[...],
                               preferred_element_type=jnp.float32)
                       + bv_ref[...]).astype(jnp.bfloat16)

    # ---- Q projection for this query tile (attention scale already folded in).
    q_full = (jnp.dot(q_ref[0], wq_ref[...], preferred_element_type=jnp.float32)
              + bq_ref[...]).astype(jnp.bfloat16)                   # (tq, D)

    tq = q_full.shape[0]
    S = kp_ref.shape[0]
    n_k = S // tk

    # ---- Per-head attention with KV-chunked online (flash-style) softmax.
    for hh in range(h):                                   # static unroll: heads
        lo = hh * d_k
        q_h = q_full[:, lo:lo + d_k]                       # (tq, d_k) bf16

        m_i = jnp.full((tq, 1), -jnp.inf, jnp.float32)
        l_i = jnp.zeros((tq, 1), jnp.float32)
        acc = jnp.zeros((tq, d_k), jnp.float32)
        for j in range(n_k):                               # static unroll: KV chunks
            ks = j * tk
            k_h = kp_ref[ks:ks + tk, lo:lo + d_k]          # (tk, d_k) bf16
            v_h = vp_ref[ks:ks + tk, lo:lo + d_k]          # (tk, d_k) bf16
            # Contract the last dims directly (no K-tile transpose through XLU).
            s = lax.dot_general(q_h, k_h, (((1,), (1,)), ((), ())),
                                preferred_element_type=jnp.float32)  # (tq, tk)
            m_new = jnp.maximum(m_i, jnp.max(s, axis=-1, keepdims=True))
            alpha = jnp.exp(m_i - m_new)
            p = jnp.exp(s - m_new)
            l_i = alpha * l_i + jnp.sum(p, axis=-1, keepdims=True)
            acc = alpha * acc + jnp.dot(p.astype(jnp.bfloat16), v_h,
                                        preferred_element_type=jnp.float32)
            m_i = m_new

        # Softmax normalization via the EUP reciprocal (approx) — ~free slot.
        ctx_ref[:, lo:lo + d_k] = (acc * pl.reciprocal(l_i, approx=True)
                                   ).astype(jnp.bfloat16)

    # ---- Fused concat + output projection: ONE matmul with contraction K = D.
    out_ref[0] = (jnp.dot(ctx_ref[...], wo_ref[...],
                          preferred_element_type=jnp.float32)
                  + bo_ref[...]).astype(out_ref.dtype)


# --------------------------------------------------------------------------- #
# Wrapper helpers
# --------------------------------------------------------------------------- #
def _vmem_capacity_bytes():
    try:
        return int(pltpu.get_tpu_info().vmem_capacity_bytes)
    except Exception:
        return 64 * 1024 * 1024   # conservative default (v7x per-core VMEM)


def _pick_tile(S, candidates):
    for t in candidates:
        if S % t == 0:
            return t
    return S                       # small / irregular sequence: one full tile


def _estimate_vmem_bytes(S, D, tq, tk):
    bf, f32 = 2, 4
    act_blocks = 2 * (tq * D * bf) + 2 * 2 * (S * D * bf)   # q + k + v blocks (2-buf)
    weights = 4 * D * D * bf + 4 * D * f32                  # resident weights/biases
    out_blocks = 2 * (tq * D * f32)                         # output double buffer
    scratch = 2 * S * D * bf + tq * D * bf                  # kp, vp, ctx
    working = 4 * tq * tk * f32 + 2 * tq * D * f32          # scores/exp/q_full temps
    return act_blocks + weights + out_blocks + scratch + working


def _pick_vmem_limit(required, capacity):
    limit = max(2 * required, 32 * 1024 * 1024)             # 2x margin over estimate
    ceiling = (capacity * 3) // 4                           # headroom for Mosaic scratch
    return int(min(limit, ceiling))


# --------------------------------------------------------------------------- #
# Public entry point
# --------------------------------------------------------------------------- #
def multi_headed_attention(query, key, value, params, h):
    """query/key/value: (B, S, D) float32.  params: dict of 4 (W, b) pairs with
    W stored as (in=D, out=D) (already transposed from PyTorch's (out, in))."""
    B, S, D = query.shape
    assert D % h == 0
    d_k = D // h
    scale = 1.0 / math.sqrt(d_k)

    # ---- lane-dense padding: D_pad % 128 == 0 and D_pad % h == 0, distributed
    #      per head so the head structure (and therefore the math) is preserved.
    step = 128 * h // math.gcd(128, h)
    D_pad = ((D + step - 1) // step) * step
    d_k_pad = D_pad // h
    pad_d, pad_k = D_pad - D, d_k_pad - d_k

    def pad_in_proj(w, b):
        # output columns grouped per head: (D, D) -> (D_pad, D_pad)
        w = jnp.pad(w.reshape(D, h, d_k), ((0, pad_d), (0, 0), (0, pad_k)))
        b = jnp.pad(b.reshape(h, d_k), ((0, 0), (0, pad_k)))
        return w.reshape(D_pad, D_pad), b.reshape(D_pad)

    def pad_out_proj(w, b):
        # input rows grouped per head: (D, D) -> (D_pad, D_pad); extra cols = 0
        w = jnp.pad(w.reshape(h, d_k, D), ((0, 0), (0, pad_k), (0, pad_d)))
        b = jnp.pad(b, (0, pad_d))
        return w.reshape(D_pad, D_pad), b

    # Fold the 1/sqrt(d_k) attention scale into the query projection.
    wq, bq = pad_in_proj(params["wq"] * scale, params["bq"] * scale)
    wk, bk = pad_in_proj(params["wk"], params["bk"])
    wv, bv = pad_in_proj(params["wv"], params["bv"])
    wo, bo = pad_out_proj(params["wo"], params["bo"])

    def pad_act(x):
        return jnp.pad(x, ((0, 0), (0, 0), (0, pad_d))).astype(jnp.bfloat16)

    q_bf, k_bf, v_bf = pad_act(query), pad_act(key), pad_act(value)
    wq_bf, wk_bf, wv_bf, wo_bf = (w.astype(jnp.bfloat16) for w in (wq, wk, wv, wo))
    bq2, bk2, bv2, bo2 = (b.reshape(1, D_pad).astype(jnp.float32)
                          for b in (bq, bk, bv, bo))

    # ---- tiling, adapted to the detected per-core VMEM capacity -------------
    vmem_cap = _vmem_capacity_bytes()
    tq = _pick_tile(S, (512, 256, 128) if vmem_cap > 96 * 2**20 else (256, 128))
    tk = _pick_tile(S, (512, 256, 128))   # KV-chunk: multiple of 256 preferred
    n_q = S // tq
    vmem_limit = _pick_vmem_limit(_estimate_vmem_bytes(S, D_pad, tq, tk), vmem_cap)

    kernel = functools.partial(_mha_fused_kernel, h=h, d_k=d_k_pad, tk=tk)

    def call(single_buffer_weights):
        def const_spec(shape):
            # Constant-index blocks: VMEM-resident, no re-DMA across the grid.
            if single_buffer_weights:
                return pl.BlockSpec(shape, lambda b, qi: (0, 0),
                                    pipeline_mode=pl.Buffered(1))
            return pl.BlockSpec(shape, lambda b, qi: (0, 0))

        q_spec = pl.BlockSpec((1, tq, D_pad), lambda b, qi: (b, qi, 0))
        kv_spec = pl.BlockSpec((1, S, D_pad), lambda b, qi: (b, 0, 0))
        w_spec = const_spec((D_pad, D_pad))
        b_spec = const_spec((1, D_pad))
        out_spec = pl.BlockSpec((1, tq, D_pad), lambda b, qi: (b, qi, 0))

        return pl.pallas_call(
            kernel,
            out_shape=jax.ShapeDtypeStruct((B, S, D_pad), jnp.float32),
            grid_spec=pltpu.PrefetchScalarGridSpec(
                num_scalar_prefetch=0,
                grid=(B, n_q),
                in_specs=[q_spec, kv_spec, kv_spec,
                          w_spec, b_spec, w_spec, b_spec, w_spec, b_spec,
                          w_spec, b_spec],
                out_specs=out_spec,
                scratch_shapes=[pltpu.VMEM((S, D_pad), jnp.bfloat16),   # proj K
                                pltpu.VMEM((S, D_pad), jnp.bfloat16),   # proj V
                                pltpu.VMEM((tq, D_pad), jnp.bfloat16)]  # ctx
            ),
            compiler_params=pltpu.CompilerParams(
                # qi axis must stay on one core (per-batch K/V scratch residency)
                dimension_semantics=("parallel", "arbitrary"),
                vmem_limit_bytes=vmem_limit),
        )(q_bf, k_bf, v_bf,
          wq_bf, bq2, wk_bf, bk2, wv_bf, bv2, wo_bf, bo2)

    try:
        out_pad = call(single_buffer_weights=True)
    except Exception:
        # pl.Buffered(1) (single-buffered resident weights) not supported by
        # this Pallas build — fall back to default double-buffered specs.
        out_pad = call(single_buffer_weights=False)

    return out_pad[:, :, :D]


# --------------------------------------------------------------------------- #
# Init + pure-JAX reference + self-test
# --------------------------------------------------------------------------- #
def _init_params(key, d_model):
    """Deterministic init mimicking nn.Linear(d_model, d_model) x 4.
    Weights stored as (in, out) so the kernel computes x @ W + b."""
    keys = jax.random.split(key, 8)
    bound = 1.0 / math.sqrt(d_model)

    def lin(kw, kb):
        w = jax.random.uniform(kw, (d_model, d_model), jnp.float32, -bound, bound)
        b = jax.random.uniform(kb, (d_model,), jnp.float32, -bound, bound)
        return w, b

    wq, bq = lin(keys[0], keys[1])
    wk, bk = lin(keys[2], keys[3])
    wv, bv = lin(keys[4], keys[5])
    wo, bo = lin(keys[6], keys[7])
    return dict(wq=wq, bq=bq, wk=wk, bk=bk, wv=wv, bv=bv, wo=wo, bo=bo)


def _reference(query, key, value, params, h):
    """Pure-JAX f32 reference of the PyTorch forward (eval mode, mask=None)."""
    B, S, D = query.shape
    d_k = D // h

    def proj(x, w, b):
        y = x @ w + b                                           # (B, S, D)
        return y.reshape(B, S, h, d_k).transpose(0, 2, 1, 3)    # (B, h, S, d_k)

    q = proj(query, params["wq"], params["bq"])
    k = proj(key, params["wk"], params["bk"])
    v = proj(value, params["wv"], params["bv"])

    scores = jnp.einsum("bhqd,bhkd->bhqk", q, k) / math.sqrt(d_k)
    attn = jax.nn.softmax(scores, axis=-1)
    ctx = jnp.einsum("bhqk,bhkd->bhqd", attn, v)        # (B, h, S, d_k)
    ctx = ctx.transpose(0, 2, 1, 3).reshape(B, S, D)    # (B, S, D)
    return ctx @ params["wo"] + params["bo"]


if __name__ == "__main__":
    B, S, d_model, h = 2, 8, 32, 4

    root = jax.random.PRNGKey(0)
    kq, kk, kv, kp = jax.random.split(root, 4)
    query = jax.random.normal(kq, (B, S, d_model), jnp.float32)
    key = jax.random.normal(kk, (B, S, d_model), jnp.float32)
    value = jax.random.normal(kv, (B, S, d_model), jnp.float32)
    params = _init_params(kp, d_model)

    out = multi_headed_attention(query, key, value, params, h)
    out = jax.block_until_ready(out)

    ref = _reference(query, key, value, params, h)
    assert out.shape == (B, S, d_model)
    # bf16 matmul operands (f32 accumulation) -> looser tolerance than pure f32.
    assert jnp.allclose(out, ref, atol=5e-2, rtol=5e-2), "mismatch vs reference"

    print("KERNEL_OK")
</pallas_src>

<mosaic_0001>
module attributes {stable_mosaic.version = 11 : i64} {
  func.func @_mha_fused_kernel(%arg0: i32, %arg1: i32, %arg2: memref<1x8x128xbf16, #tpu.memory_space<vmem>>, %arg3: memref<1x8x128xbf16, #tpu.memory_space<vmem>>, %arg4: memref<1x8x128xbf16, #tpu.memory_space<vmem>>, %arg5: memref<128x128xbf16, #tpu.memory_space<vmem>>, %arg6: memref<1x128xf32, #tpu.memory_space<vmem>>, %arg7: memref<128x128xbf16, #tpu.memory_space<vmem>>, %arg8: memref<1x128xf32, #tpu.memory_space<vmem>>, %arg9: memref<128x128xbf16, #tpu.memory_space<vmem>>, %arg10: memref<1x128xf32, #tpu.memory_space<vmem>>, %arg11: memref<128x128xbf16, #tpu.memory_space<vmem>>, %arg12: memref<1x128xf32, #tpu.memory_space<vmem>>, %arg13: memref<1x8x128xf32, #tpu.memory_space<vmem>>, %arg14: memref<8x128xbf16, #tpu.memory_space<vmem>>, %arg15: memref<8x128xbf16, #tpu.memory_space<vmem>>, %arg16: memref<8x128xbf16, #tpu.memory_space<vmem>>) attributes {dimension_semantics = [#tpu.dimension_semantics<parallel>, #tpu.dimension_semantics<arbitrary>], iteration_bounds = array<i64: 2, 1>, scalar_prefetch = 0 : i64, scratch_operands = 3 : i64, tpu.core_type = #tpu.core_type<tc>, window_params = [{transform_indices = @transform_0, window_bounds = array<i64: 1, 8, 128>}, {transform_indices = @transform_1, window_bounds = array<i64: 1, 8, 128>}, {transform_indices = @transform_2, window_bounds = array<i64: 1, 8, 128>}, {pipeline_mode = #tpu.pipeline_mode<synchronous>, transform_indices = @transform_3, window_bounds = array<i64: 128, 128>}, {pipeline_mode = #tpu.pipeline_mode<synchronous>, transform_indices = @transform_4, window_bounds = array<i64: 1, 128>}, {pipeline_mode = #tpu.pipeline_mode<synchronous>, transform_indices = @transform_5, window_bounds = array<i64: 128, 128>}, {pipeline_mode = #tpu.pipeline_mode<synchronous>, transform_indices = @transform_6, window_bounds = array<i64: 1, 128>}, {pipeline_mode = #tpu.pipeline_mode<synchronous>, transform_indices = @transform_7, window_bounds = array<i64: 128, 128>}, {pipeline_mode = #tpu.pipeline_mode<synchronous>, transform_indices = @transform_8, window_bounds = array<i64: 1, 128>}, {pipeline_mode = #tpu.pipeline_mode<synchronous>, transform_indices = @transform_9, window_bounds = array<i64: 128, 128>}, {pipeline_mode = #tpu.pipeline_mode<synchronous>, transform_indices = @transform_10, window_bounds = array<i64: 1, 128>}, {transform_indices = @transform_11, window_bounds = array<i64: 1, 8, 128>}]} {
    %c0_i32 = arith.constant 0 : i32
    %0 = arith.cmpi eq, %arg1, %c0_i32 : i32
    %1 = arith.extui %0 : i1 to i32
    %c0_i32_0 = arith.constant 0 : i32
    %2 = arith.cmpi ne, %1, %c0_i32_0 : i32
    scf.if %2 {
      %c0_66 = arith.constant 0 : index
      %c0_67 = arith.constant 0 : index
      %c0_68 = arith.constant 0 : index
      %136 = vector.load %arg3[%c0_66, %c0_67, %c0_68] : memref<1x8x128xbf16, #tpu.memory_space<vmem>>, vector<1x8x128xbf16>
      %137 = vector.shape_cast %136 : vector<1x8x128xbf16> to vector<8x128xbf16>
      %c0_69 = arith.constant 0 : index
      %c0_70 = arith.constant 0 : index
      %138 = vector.load %arg7[%c0_69, %c0_70] : memref<128x128xbf16, #tpu.memory_space<vmem>>, vector<128x128xbf16>
      %cst_71 = arith.constant dense<0.000000e+00> : vector<8x128xf32>
      %139 = tpu.matmul %137, %138, %cst_71 {dimension_numbers = #tpu.dot_dimension_numbers<[1], [0], [0], [1], [0, 0, 1, 1], [], []>} : vector<8x128xbf16>, vector<128x128xbf16>, vector<8x128xf32> -> vector<8x128xf32>
      %c0_72 = arith.constant 0 : index
      %c0_73 = arith.constant 0 : index
      %140 = vector.load %arg8[%c0_72, %c0_73] : memref<1x128xf32, #tpu.memory_space<vmem>>, vector<1x128xf32>
      %141 = vector.broadcast %140 : vector<1x128xf32> to vector<8x128xf32>
      %142 = arith.addf %139, %141 : vector<8x128xf32>
      %143 = arith.truncf %142 : vector<8x128xf32> to vector<8x128xbf16>
      %c0_74 = arith.constant 0 : index
      %c0_75 = arith.constant 0 : index
      %144 = vector.load %arg14[%c0_74, %c0_75] : memref<8x128xbf16, #tpu.memory_space<vmem>>, vector<8x128xbf16>
      tpu.vector_store %arg14[%c0_74, %c0_75], %143 {strides = array<i32>} : memref<8x128xbf16, #tpu.memory_space<vmem>>, vector<8x128xbf16>,
      %c0_76 = arith.constant 0 : index
      %c0_77 = arith.constant 0 : index
      %c0_78 = arith.constant 0 : index
      %145 = vector.load %arg4[%c0_76, %c0_77, %c0_78] : memref<1x8x128xbf16, #tpu.memory_space<vmem>>, vector<1x8x128xbf16>
      %146 = vector.shape_cast %145 : vector<1x8x128xbf16> to vector<8x128xbf16>
      %c0_79 = arith.constant 0 : index
      %c0_80 = arith.constant 0 : index
      %147 = vector.load %arg9[%c0_79, %c0_80] : memref<128x128xbf16, #tpu.memory_space<vmem>>, vector<128x128xbf16>
      %cst_81 = arith.constant dense<0.000000e+00> : vector<8x128xf32>
      %148 = tpu.matmul %146, %147, %cst_81 {dimension_numbers = #tpu.dot_dimension_numbers<[1], [0], [0], [1], [0, 0, 1, 1], [], []>} : vector<8x128xbf16>, vector<128x128xbf16>, vector<8x128xf32> -> vector<8x128xf32>
      %c0_82 = arith.constant 0 : index
      %c0_83 = arith.constant 0 : index
      %149 = vector.load %arg10[%c0_82, %c0_83] : memref<1x128xf32, #tpu.memory_space<vmem>>, vector<1x128xf32>
      %150 = vector.broadcast %149 : vector<1x128xf32> to vector<8x128xf32>
      %151 = arith.addf %148, %150 : vector<8x128xf32>
      %152 = arith.truncf %151 : vector<8x128xf32> to vector<8x128xbf16>
      %c0_84 = arith.constant 0 : index
      %c0_85 = arith.constant 0 : index
      %153 = vector.load %arg15[%c0_84, %c0_85] : memref<8x128xbf16, #tpu.memory_space<vmem>>, vector<8x128xbf16>
      tpu.vector_store %arg15[%c0_84, %c0_85], %152 {strides = array<i32>} : memref<8x128xbf16, #tpu.memory_space<vmem>>, vector<8x128xbf16>,
    } else {
    }
    %c0 = arith.constant 0 : index
    %c0_1 = arith.constant 0 : index
    %c0_2 = arith.constant 0 : index
    %3 = vector.load %arg2[%c0, %c0_1, %c0_2] : memref<1x8x128xbf16, #tpu.memory_space<vmem>>, vector<1x8x128xbf16>
    %4 = vector.shape_cast %3 : vector<1x8x128xbf16> to vector<8x128xbf16>
    %c0_3 = arith.constant 0 : index
    %c0_4 = arith.constant 0 : index
    %5 = vector.load %arg5[%c0_3, %c0_4] : memref<128x128xbf16, #tpu.memory_space<vmem>>, vector<128x128xbf16>
    %cst = arith.constant dense<0.000000e+00> : vector<8x128xf32>
    %6 = tpu.matmul %4, %5, %cst {dimension_numbers = #tpu.dot_dimension_numbers<[1], [0], [0], [1], [0, 0, 1, 1], [], []>} : vector<8x128xbf16>, vector<128x128xbf16>, vector<8x128xf32> -> vector<8x128xf32>
    %c0_5 = arith.constant 0 : index
    %c0_6 = arith.constant 0 : index
    %7 = vector.load %arg6[%c0_5, %c0_6] : memref<1x128xf32, #tpu.memory_space<vmem>>, vector<1x128xf32>
    %8 = vector.broadcast %7 : vector<1x128xf32> to vector<8x128xf32>
    %9 = arith.addf %6, %8 : vector<8x128xf32>
    %10 = arith.truncf %9 : vector<8x128xf32> to vector<8x128xbf16>
    %11 = vector.extract_strided_slice %10 {offsets = [0, 0], sizes = [8, 32], strides = [1, 1]} : vector<8x128xbf16> to vector<8x32xbf16>
    %cst_7 = arith.constant 0xFF800000 : f32
    %12 = vector.broadcast %cst_7 : f32 to vector<8x1xf32>
    %cst_8 = arith.constant 0.000000e+00 : f32
    %13 = vector.broadcast %cst_8 : f32 to vector<8x1xf32>
    %cst_9 = arith.constant 0.000000e+00 : f32
    %14 = vector.broadcast %cst_9 : f32 to vector<8x32xf32>
    %c0_10 = arith.constant 0 : index
    %c0_11 = arith.constant 0 : index
    %15 = vector.load %arg14[%c0_10, %c0_11] : memref<8x128xbf16, #tpu.memory_space<vmem>>, vector<8x32xbf16>
    %c0_12 = arith.constant 0 : index
    %c0_13 = arith.constant 0 : index
    %16 = vector.load %arg15[%c0_12, %c0_13] : memref<8x128xbf16, #tpu.memory_space<vmem>>, vector<8x32xbf16>
    %cst_14 = arith.constant dense<0.000000e+00> : vector<8x8xf32>
    %17 = tpu.matmul %11, %15, %cst_14 {dimension_numbers = #tpu.dot_dimension_numbers<[1], [1], [0], [0], [0, 0, 1, 0], [], []>} : vector<8x32xbf16>, vector<8x32xbf16>, vector<8x8xf32> -> vector<8x8xf32>
    %cst_15 = arith.constant dense<0xFF800000> : vector<8xf32>
    %18 = vector.multi_reduction <maximumf>, %17, %cst_15 [1] : vector<8x8xf32> to vector<8xf32>
    %19 = vector.shape_cast %18 : vector<8xf32> to vector<8x1xf32>
    %20 = arith.maximumf %12, %19 : vector<8x1xf32>
    %21 = arith.subf %12, %20 : vector<8x1xf32>
    %22 = math.exp %21 : vector<8x1xf32>
    %23 = vector.broadcast %20 : vector<8x1xf32> to vector<8x8xf32>
    %24 = arith.subf %17, %23 : vector<8x8xf32>
    %25 = math.exp %24 : vector<8x8xf32>
    %26 = arith.mulf %22, %13 : vector<8x1xf32>
    %cst_16 = arith.constant dense<0.000000e+00> : vector<8xf32>
    %27 = vector.multi_reduction <add>, %25, %cst_16 [1] : vector<8x8xf32> to vector<8xf32>
    %28 = vector.shape_cast %27 : vector<8xf32> to vector<8x1xf32>
    %29 = arith.addf %26, %28 : vector<8x1xf32>
    %30 = vector.broadcast %22 : vector<8x1xf32> to vector<8x32xf32>
    %31 = arith.mulf %30, %14 : vector<8x32xf32>
    %32 = arith.truncf %25 : vector<8x8xf32> to vector<8x8xbf16>
    %cst_17 = arith.constant dense<0.000000e+00> : vector<8x32xf32>
    %33 = tpu.matmul %32, %16, %cst_17 {dimension_numbers = #tpu.dot_dimension_numbers<[1], [0], [0], [1], [0, 0, 1, 1], [], []>} : vector<8x8xbf16>, vector<8x32xbf16>, vector<8x32xf32> -> vector<8x32xf32>
    %34 = arith.addf %31, %33 : vector<8x32xf32>
    %35 = tpu.reciprocal %29 {approx = true} : vector<8x1xf32> -> vector<8x1xf32>
    %36 = vector.broadcast %35 : vector<8x1xf32> to vector<8x32xf32>
    %37 = arith.mulf %34, %36 : vector<8x32xf32>
    %38 = arith.truncf %37 : vector<8x32xf32> to vector<8x32xbf16>
    %c0_18 = arith.constant 0 : index
    %c0_19 = arith.constant 0 : index
    %39 = vector.load %arg16[%c0_18, %c0_19] : memref<8x128xbf16, #tpu.memory_space<vmem>>, vector<8x32xbf16>
    tpu.vector_store %arg16[%c0_18, %c0_19], %38 {strides = array<i32>} : memref<8x128xbf16, #tpu.memory_space<vmem>>, vector<8x32xbf16>,
    %40 = vector.extract_strided_slice %10 {offsets = [0, 32], sizes = [8, 32], strides = [1, 1]} : vector<8x128xbf16> to vector<8x32xbf16>
    %cst_20 = arith.constant 0xFF800000 : f32
    %41 = vector.broadcast %cst_20 : f32 to vector<8x1xf32>
    %cst_21 = arith.constant 0.000000e+00 : f32
    %42 = vector.broadcast %cst_21 : f32 to vector<8x1xf32>
    %cst_22 = arith.constant 0.000000e+00 : f32
    %43 = vector.broadcast %cst_22 : f32 to vector<8x32xf32>
    %c0_23 = arith.constant 0 : index
    %c32 = arith.constant 32 : index
    %44 = vector.load %arg14[%c0_23, %c32] : memref<8x128xbf16, #tpu.memory_space<vmem>>, vector<8x32xbf16>
    %c0_24 = arith.constant 0 : index
    %c32_25 = arith.constant 32 : index
    %45 = vector.load %arg15[%c0_24, %c32_25] : memref<8x128xbf16, #tpu.memory_space<vmem>>, vector<8x32xbf16>
    %cst_26 = arith.constant dense<0.000000e+00> : vector<8x8xf32>
    %46 = tpu.matmul %40, %44, %cst_26 {dimension_numbers = #tpu.dot_dimension_numbers<[1], [1], [0], [0], [0, 0, 1, 0], [], []>} : vector<8x32xbf16>, vector<8x32xbf16>, vector<8x8xf32> -> vector<8x8xf32>
    %cst_27 = arith.constant dense<0xFF800000> : vector<8xf32>
    %47 = vector.multi_reduction <maximumf>, %46, %cst_27 [1] : vector<8x8xf32> to vector<8xf32>
    %48 = vector.shape_cast %47 : vector<8xf32> to vector<8x1xf32>
    %49 = arith.maximumf %41, %48 : vector<8x1xf32>
    %50 = arith.subf %41, %49 : vector<8x1xf32>
    %51 = math.exp %50 : vector<8x1xf32>
    %52 = vector.broadcast %49 : vector<8x1xf32> to vector<8x8xf32>
    %53 = arith.subf %46, %52 : vector<8x8xf32>
    %54 = math.exp %53 : vector<8x8xf32>
    %55 = arith.mulf %51, %42 : vector<8x1xf32>
    %cst_28 = arith.constant dense<0.000000e+00> : vector<8xf32>
    %56 = vector.multi_reduction <add>, %54, %cst_28 [1] : vector<8x8xf32> to vector<8xf32>
    %57 = vector.shape_cast %56 : vector<8xf32> to vector<8x1xf32>
    %58 = arith.addf %55, %57 : vector<8x1xf32>
    %59 = vector.broadcast %51 : vector<8x1xf32> to vector<8x32xf32>
    %60 = arith.mulf %59, %43 : vector<8x32xf32>
    %61 = arith.truncf %54 : vector<8x8xf32> to vector<8x8xbf16>
    %cst_29 = arith.constant dense<0.000000e+00> : vector<8x32xf32>
    %62 = tpu.matmul %61, %45, %cst_29 {dimension_numbers = #tpu.dot_dimension_numbers<[1], [0], [0], [1], [0, 0, 1, 1], [], []>} : vector<8x8xbf16>, vector<8x32xbf16>, vector<8x32xf32> -> vector<8x32xf32>
    %63 = arith.addf %60, %62 : vector<8x32xf32>
    %64 = tpu.reciprocal %58 {approx = true} : vector<8x1xf32> -> vector<8x1xf32>
    %65 = vector.broadcast %64 : vector<8x1xf32> to vector<8x32xf32>
    %66 = arith.mulf %63, %65 : vector<8x32xf32>
    %67 = arith.truncf %66 : vector<8x32xf32> to vector<8x32xbf16>
    %c0_30 = arith.constant 0 : index
    %c32_31 = arith.constant 32 : index
    %68 = vector.load %arg16[%c0_30, %c32_31] : memref<8x128xbf16, #tpu.memory_space<vmem>>, vector<8x32xbf16>
    tpu.vector_store %arg16[%c0_30, %c32_31], %67 {strides = array<i32>} : memref<8x128xbf16, #tpu.memory_space<vmem>>, vector<8x32xbf16>,
    %69 = vector.extract_strided_slice %10 {offsets = [0, 64], sizes = [8, 32], strides = [1, 1]} : vector<8x128xbf16> to vector<8x32xbf16>
    %cst_32 = arith.constant 0xFF800000 : f32
    %70 = vector.broadcast %cst_32 : f32 to vector<8x1xf32>
    %cst_33 = arith.constant 0.000000e+00 : f32
    %71 = vector.broadcast %cst_33 : f32 to vector<8x1xf32>
    %cst_34 = arith.constant 0.000000e+00 : f32
    %72 = vector.broadcast %cst_34 : f32 to vector<8x32xf32>
    %c0_35 = arith.constant 0 : index
    %c64 = arith.constant 64 : index
    %73 = vector.load %arg14[%c0_35, %c64] : memref<8x128xbf16, #tpu.memory_space<vmem>>, vector<8x32xbf16>
    %c0_36 = arith.constant 0 : index
    %c64_37 = arith.constant 64 : index
    %74 = vector.load %arg15[%c0_36, %c64_37] : memref<8x128xbf16, #tpu.memory_space<vmem>>, vector<8x32xbf16>
    %cst_38 = arith.constant dense<0.000000e+00> : vector<8x8xf32>
    %75 = tpu.matmul %69, %73, %cst_38 {dimension_numbers = #tpu.dot_dimension_numbers<[1], [1], [0], [0], [0, 0, 1, 0], [], []>} : vector<8x32xbf16>, vector<8x32xbf16>, vector<8x8xf32> -> vector<8x8xf32>
    %cst_39 = arith.constant dense<0xFF800000> : vector<8xf32>
    %76 = vector.multi_reduction <maximumf>, %75, %cst_39 [1] : vector<8x8xf32> to vector<8xf32>
    %77 = vector.shape_cast %76 : vector<8xf32> to vector<8x1xf32>
    %78 = arith.maximumf %70, %77 : vector<8x1xf32>
    %79 = arith.subf %70, %78 : vector<8x1xf32>
    %80 = math.exp %79 : vector<8x1xf32>
    %81 = vector.broadcast %78 : vector<8x1xf32> to vector<8x8xf32>
    %82 = arith.subf %75, %81 : vector<8x8xf32>
    %83 = math.exp %82 : vector<8x8xf32>
    %84 = arith.mulf %80, %71 : vector<8x1xf32>
    %cst_40 = arith.constant dense<0.000000e+00> : vector<8xf32>
    %85 = vector.multi_reduction <add>, %83, %cst_40 [1] : vector<8x8xf32> to vector<8xf32>
    %86 = vector.shape_cast %85 : vector<8xf32> to vector<8x1xf32>
    %87 = arith.addf %84, %86 : vector<8x1xf32>
    %88 = vector.broadcast %80 : vector<8x1xf32> to vector<8x32xf32>
    %89 = arith.mulf %88, %72 : vector<8x32xf32>
    %90 = arith.truncf %83 : vector<8x8xf32> to vector<8x8xbf16>
    %cst_41 = arith.constant dense<0.000000e+00> : vector<8x32xf32>
    %91 = tpu.matmul %90, %74, %cst_41 {dimension_numbers = #tpu.dot_dimension_numbers<[1], [0], [0], [1], [0, 0, 1, 1], [], []>} : vector<8x8xbf16>, vector<8x32xbf16>, vector<8x32xf32> -> vector<8x32xf32>
    %92 = arith.addf %89, %91 : vector<8x32xf32>
    %93 = tpu.reciprocal %87 {approx = true} : vector<8x1xf32> -> vector<8x1xf32>
    %94 = vector.broadcast %93 : vector<8x1xf32> to vector<8x32xf32>
    %95 = arith.mulf %92, %94 : vector<8x32xf32>
    %96 = arith.truncf %95 : vector<8x32xf32> to vector<8x32xbf16>
    %c0_42 = arith.constant 0 : index
    %c64_43 = arith.constant 64 : index
    %97 = vector.load %arg16[%c0_42, %c64_43] : memref<8x128xbf16, #tpu.memory_space<vmem>>, vector<8x32xbf16>
    tpu.vector_store %arg16[%c0_42, %c64_43], %96 {strides = array<i32>} : memref<8x128xbf16, #tpu.memory_space<vmem>>, vector<8x32xbf16>,
    %98 = vector.extract_strided_slice %10 {offsets = [0, 96], sizes = [8, 32], strides = [1, 1]} : vector<8x128xbf16> to vector<8x32xbf16>
    %cst_44 = arith.constant 0xFF800000 : f32
    %99 = vector.broadcast %cst_44 : f32 to vector<8x1xf32>
    %cst_45 = arith.constant 0.000000e+00 : f32
    %100 = vector.broadcast %cst_45 : f32 to vector<8x1xf32>
    %cst_46 = arith.constant 0.000000e+00 : f32
    %101 = vector.broadcast %cst_46 : f32 to vector<8x32xf32>
    %c0_47 = arith.constant 0 : index
    %c96 = arith.constant 96 : index
    %102 = vector.load %arg14[%c0_47, %c96] : memref<8x128xbf16, #tpu.memory_space<vmem>>, vector<8x32xbf16>
    %c0_48 = arith.constant 0 : index
    %c96_49 = arith.constant 96 : index
    %103 = vector.load %arg15[%c0_48, %c96_49] : memref<8x128xbf16, #tpu.memory_space<vmem>>, vector<8x32xbf16>
    %cst_50 = arith.constant dense<0.000000e+00> : vector<8x8xf32>
    %104 = tpu.matmul %98, %102, %cst_50 {dimension_numbers = #tpu.dot_dimension_numbers<[1], [1], [0], [0], [0, 0, 1, 0], [], []>} : vector<8x32xbf16>, vector<8x32xbf16>, vector<8x8xf32> -> vector<8x8xf32>
    %cst_51 = arith.constant dense<0xFF800000> : vector<8xf32>
    %105 = vector.multi_reduction <maximumf>, %104, %cst_51 [1] : vector<8x8xf32> to vector<8xf32>
    %106 = vector.shape_cast %105 : vector<8xf32> to vector<8x1xf32>
    %107 = arith.maximumf %99, %106 : vector<8x1xf32>
    %108 = arith.subf %99, %107 : vector<8x1xf32>
    %109 = math.exp %108 : vector<8x1xf32>
    %110 = vector.broadcast %107 : vector<8x1xf32> to vector<8x8xf32>
    %111 = arith.subf %104, %110 : vector<8x8xf32>
    %112 = math.exp %111 : vector<8x8xf32>
    %113 = arith.mulf %109, %100 : vector<8x1xf32>
    %cst_52 = arith.constant dense<0.000000e+00> : vector<8xf32>
    %114 = vector.multi_reduction <add>, %112, %cst_52 [1] : vector<8x8xf32> to vector<8xf32>
    %115 = vector.shape_cast %114 : vector<8xf32> to vector<8x1xf32>
    %116 = arith.addf %113, %115 : vector<8x1xf32>
    %117 = vector.broadcast %109 : vector<8x1xf32> to vector<8x32xf32>
    %118 = arith.mulf %117, %101 : vector<8x32xf32>
    %119 = arith.truncf %112 : vector<8x8xf32> to vector<8x8xbf16>
    %cst_53 = arith.constant dense<0.000000e+00> : vector<8x32xf32>
    %120 = tpu.matmul %119, %103, %cst_53 {dimension_numbers = #tpu.dot_dimension_numbers<[1], [0], [0], [1], [0, 0, 1, 1], [], []>} : vector<8x8xbf16>, vector<8x32xbf16>, vector<8x32xf32> -> vector<8x32xf32>
    %121 = arith.addf %118, %120 : vector<8x32xf32>
    %122 = tpu.reciprocal %116 {approx = true} : vector<8x1xf32> -> vector<8x1xf32>
    %123 = vector.broadcast %122 : vector<8x1xf32> to vector<8x32xf32>
    %124 = arith.mulf %121, %123 : vector<8x32xf32>
    %125 = arith.truncf %124 : vector<8x32xf32> to vector<8x32xbf16>
    %c0_54 = arith.constant 0 : index
    %c96_55 = arith.constant 96 : index
    %126 = vector.load %arg16[%c0_54, %c96_55] : memref<8x128xbf16, #tpu.memory_space<vmem>>, vector<8x32xbf16>
    tpu.vector_store %arg16[%c0_54, %c96_55], %125 {strides = array<i32>} : memref<8x128xbf16, #tpu.memory_space<vmem>>, vector<8x32xbf16>,
    %c0_56 = arith.constant 0 : index
    %c0_57 = arith.constant 0 : index
    %127 = vector.load %arg16[%c0_56, %c0_57] : memref<8x128xbf16, #tpu.memory_space<vmem>>, vector<8x128xbf16>
    %c0_58 = arith.constant 0 : index
    %c0_59 = arith.constant 0 : index
    %128 = vector.load %arg11[%c0_58, %c0_59] : memref<128x128xbf16, #tpu.memory_space<vmem>>, vector<128x128xbf16>
    %cst_60 = arith.constant dense<0.000000e+00> : vector<8x128xf32>
    %129 = tpu.matmul %127, %128, %cst_60 {dimension_numbers = #tpu.dot_dimension_numbers<[1], [0], [0], [1], [0, 0, 1, 1], [], []>} : vector<8x128xbf16>, vector<128x128xbf16>, vector<8x128xf32> -> vector<8x128xf32>
    %c0_61 = arith.constant 0 : index
    %c0_62 = arith.constant 0 : index
    %130 = vector.load %arg12[%c0_61, %c0_62] : memref<1x128xf32, #tpu.memory_space<vmem>>, vector<1x128xf32>
    %131 = vector.broadcast %130 : vector<1x128xf32> to vector<8x128xf32>
    %132 = arith.addf %129, %131 : vector<8x128xf32>
    %c0_63 = arith.constant 0 : index
    %c0_64 = arith.constant 0 : index
    %c0_65 = arith.constant 0 : index
    %133 = vector.load %arg13[%c0_63, %c0_64, %c0_65] : memref<1x8x128xf32, #tpu.memory_space<vmem>>, vector<1x8x128xf32>
    %134 = vector.shape_cast %133 : vector<1x8x128xf32> to vector<8x128xf32>
    %135 = vector.shape_cast %132 : vector<8x128xf32> to vector<1x8x128xf32>
    tpu.vector_store %arg13[%c0_63, %c0_64, %c0_65], %135 {strides = array<i32>} : memref<1x8x128xf32, #tpu.memory_space<vmem>>, vector<1x8x128xf32>,
    return
  }
  func.func @transform_0(%arg0: i32, %arg1: i32) -> (i32, i32, i32) {
    %c0_i32 = arith.constant 0 : i32
    %c0_i32_0 = arith.constant 0 : i32
    return %arg0, %arg1, %c0_i32 : i32, i32, i32
  }
  func.func @transform_1(%arg0: i32, %arg1: i32) -> (i32, i32, i32) {
    %c0_i32 = arith.constant 0 : i32
    %c0_i32_0 = arith.constant 0 : i32
    %c0_i32_1 = arith.constant 0 : i32
    return %arg0, %c0_i32, %c0_i32_0 : i32, i32, i32
  }
  func.func @transform_2(%arg0: i32, %arg1: i32) -> (i32, i32, i32) {
    %c0_i32 = arith.constant 0 : i32
    %c0_i32_0 = arith.constant 0 : i32
    %c0_i32_1 = arith.constant 0 : i32
    return %arg0, %c0_i32, %c0_i32_0 : i32, i32, i32
  }
  func.func @transform_3(%arg0: i32, %arg1: i32) -> (i32, i32) {
    %c0_i32 = arith.constant 0 : i32
    %c0_i32_0 = arith.constant 0 : i32
    %c0_i32_1 = arith.constant 0 : i32
    return %c0_i32, %c0_i32_0 : i32, i32
  }
  func.func @transform_4(%arg0: i32, %arg1: i32) -> (i32, i32) {
    %c0_i32 = arith.constant 0 : i32
    %c0_i32_0 = arith.constant 0 : i32
    %c0_i32_1 = arith.constant 0 : i32
    return %c0_i32, %c0_i32_0 : i32, i32
  }
  func.func @transform_5(%arg0: i32, %arg1: i32) -> (i32, i32) {
    %c0_i32 = arith.constant 0 : i32
    %c0_i32_0 = arith.constant 0 : i32
    %c0_i32_1 = arith.constant 0 : i32
    return %c0_i32, %c0_i32_0 : i32, i32
  }
  func.func @transform_6(%arg0: i32, %arg1: i32) -> (i32, i32) {
    %c0_i32 = arith.constant 0 : i32
    %c0_i32_0 = arith.constant 0 : i32
    %c0_i32_1 = arith.constant 0 : i32
    return %c0_i32, %c0_i32_0 : i32, i32
  }
  func.func @transform_7(%arg0: i32, %arg1: i32) -> (i32, i32) {
    %c0_i32 = arith.constant 0 : i32
    %c0_i32_0 = arith.constant 0 : i32
    %c0_i32_1 = arith.constant 0 : i32
    return %c0_i32, %c0_i32_0 : i32, i32
  }
  func.func @transform_8(%arg0: i32, %arg1: i32) -> (i32, i32) {
    %c0_i32 = arith.constant 0 : i32
    %c0_i32_0 = arith.constant 0 : i32
    %c0_i32_1 = arith.constant 0 : i32
    return %c0_i32, %c0_i32_0 : i32, i32
  }
  func.func @transform_9(%arg0: i32, %arg1: i32) -> (i32, i32) {
    %c0_i32 = arith.constant 0 : i32
    %c0_i32_0 = arith.constant 0 : i32
    %c0_i32_1 = arith.constant 0 : i32
    return %c0_i32, %c0_i32_0 : i32, i32
  }
  func.func @transform_10(%arg0: i32, %arg1: i32) -> (i32, i32) {
    %c0_i32 = arith.constant 0 : i32
    %c0_i32_0 = arith.constant 0 : i32
    %c0_i32_1 = arith.constant 0 : i32
    return %c0_i32, %c0_i32_0 : i32, i32
  }
  func.func @transform_11(%arg0: i32, %arg1: i32) -> (i32, i32, i32) {
    %c0_i32 = arith.constant 0 : i32
    %c0_i32_0 = arith.constant 0 : i32
    return %arg0, %arg1, %c0_i32 : i32, i32, i32
  }
}

module attributes {stable_mosaic.version = 11 : i64} {
  func.func @_mha_fused_kernel(%arg0: i32, %arg1: i32, %arg2: memref<1x8x128xbf16, #tpu.memory_space<vmem>>, %arg3: memref<1x8x128xbf16, #tpu.memory_space<vmem>>, %arg4: memref<1x8x128xbf16, #tpu.memory_space<vmem>>, %arg5: memref<128x128xbf16, #tpu.memory_space<vmem>>, %arg6: memref<1x128xf32, #tpu.memory_space<vmem>>, %arg7: memref<128x128xbf16, #tpu.memory_space<vmem>>, %arg8: memref<1x128xf32, #tpu.memory_space<vmem>>, %arg9: memref<128x128xbf16, #tpu.memory_space<vmem>>, %arg10: memref<1x128xf32, #tpu.memory_space<vmem>>, %arg11: memref<128x128xbf16, #tpu.memory_space<vmem>>, %arg12: memref<1x128xf32, #tpu.memory_space<vmem>>, %arg13: memref<1x8x128xf32, #tpu.memory_space<vmem>>, %arg14: memref<8x128xbf16, #tpu.memory_space<vmem>>, %arg15: memref<8x128xbf16, #tpu.memory_space<vmem>>, %arg16: memref<8x128xbf16, #tpu.memory_space<vmem>>) attributes {dimension_semantics = [#tpu.dimension_semantics<parallel>, #tpu.dimension_semantics<arbitrary>], iteration_bounds = array<i64: 2, 1>, scalar_prefetch = 0 : i64, scratch_operands = 3 : i64, tpu.core_type = #tpu.core_type<tc>, window_params = [{transform_indices = @transform_0, window_bounds = array<i64: 1, 8, 128>}, {transform_indices = @transform_1, window_bounds = array<i64: 1, 8, 128>}, {transform_indices = @transform_2, window_bounds = array<i64: 1, 8, 128>}, {pipeline_mode = #tpu.pipeline_mode<synchronous>, transform_indices = @transform_3, window_bounds = array<i64: 128, 128>}, {pipeline_mode = #tpu.pipeline_mode<synchronous>, transform_indices = @transform_4, window_bounds = array<i64: 1, 128>}, {pipeline_mode = #tpu.pipeline_mode<synchronous>, transform_indices = @transform_5, window_bounds = array<i64: 128, 128>}, {pipeline_mode = #tpu.pipeline_mode<synchronous>, transform_indices = @transform_6, window_bounds = array<i64: 1, 128>}, {pipeline_mode = #tpu.pipeline_mode<synchronous>, transform_indices = @transform_7, window_bounds = array<i64: 128, 128>}, {pipeline_mode = #tpu.pipeline_mode<synchronous>, transform_indices = @transform_8, window_bounds = array<i64: 1, 128>}, {pipeline_mode = #tpu.pipeline_mode<synchronous>, transform_indices = @transform_9, window_bounds = array<i64: 128, 128>}, {pipeline_mode = #tpu.pipeline_mode<synchronous>, transform_indices = @transform_10, window_bounds = array<i64: 1, 128>}, {transform_indices = @transform_11, window_bounds = array<i64: 1, 8, 128>}]} {
    %c0_i32 = arith.constant 0 : i32
    %0 = arith.cmpi eq, %arg1, %c0_i32 : i32
    %1 = arith.extui %0 : i1 to i32
    %c0_i32_0 = arith.constant 0 : i32
    %2 = arith.cmpi ne, %1, %c0_i32_0 : i32
    scf.if %2 {
      %c0_66 = arith.constant 0 : index
      %c0_67 = arith.constant 0 : index
      %c0_68 = arith.constant 0 : index
      %136 = vector.load %arg3[%c0_66, %c0_67, %c0_68] : memref<1x8x128xbf16, #tpu.memory_space<vmem>>, vector<1x8x128xbf16>
      %137 = vector.shape_cast %136 : vector<1x8x128xbf16> to vector<8x128xbf16>
      %c0_69 = arith.constant 0 : index
      %c0_70 = arith.constant 0 : index
      %138 = vector.load %arg7[%c0_69, %c0_70] : memref<128x128xbf16, #tpu.memory_space<vmem>>, vector<128x128xbf16>
      %cst_71 = arith.constant dense<0.000000e+00> : vector<8x128xf32>
      %139 = tpu.matmul %137, %138, %cst_71 {dimension_numbers = #tpu.dot_dimension_numbers<[1], [0], [0], [1], [0, 0, 1, 1], [], []>} : vector<8x128xbf16>, vector<128x128xbf16>, vector<8x128xf32> -> vector<8x128xf32>
      %c0_72 = arith.constant 0 : index
      %c0_73 = arith.constant 0 : index
      %140 = vector.load %arg8[%c0_72, %c0_73] : memref<1x128xf32, #tpu.memory_space<vmem>>, vector<1x128xf32>
      %141 = vector.broadcast %140 : vector<1x128xf32> to vector<8x128xf32>
      %142 = arith.addf %139, %141 : vector<8x128xf32>
      %143 = arith.truncf %142 : vector<8x128xf32> to vector<8x128xbf16>
      %c0_74 = arith.constant 0 : index
      %c0_75 = arith.constant 0 : index
      %144 = vector.load %arg14[%c0_74, %c0_75] : memref<8x128xbf16, #tpu.memory_space<vmem>>, vector<8x128xbf16>
      tpu.vector_store %arg14[%c0_74, %c0_75], %143 {strides = array<i32>} : memref<8x128xbf16, #tpu.memory_space<vmem>>, vector<8x128xbf16>,
      %c0_76 = arith.constant 0 : index
      %c0_77 = arith.constant 0 : index
      %c0_78 = arith.constant 0 : index
      %145 = vector.load %arg4[%c0_76, %c0_77, %c0_78] : memref<1x8x128xbf16, #tpu.memory_space<vmem>>, vector<1x8x128xbf16>
      %146 = vector.shape_cast %145 : vector<1x8x128xbf16> to vector<8x128xbf16>
      %c0_79 = arith.constant 0 : index
      %c0_80 = arith.constant 0 : index
      %147 = vector.load %arg9[%c0_79, %c0_80] : memref<128x128xbf16, #tpu.memory_space<vmem>>, vector<128x128xbf16>
      %cst_81 = arith.constant dense<0.000000e+00> : vector<8x128xf32>
      %148 = tpu.matmul %146, %147, %cst_81 {dimension_numbers = #tpu.dot_dimension_numbers<[1], [0], [0], [1], [0, 0, 1, 1], [], []>} : vector<8x128xbf16>, vector<128x128xbf16>, vector<8x128xf32> -> vector<8x128xf32>
      %c0_82 = arith.constant 0 : index
      %c0_83 = arith.constant 0 : index
      %149 = vector.load %arg10[%c0_82, %c0_83] : memref<1x128xf32, #tpu.memory_space<vmem>>, vector<1x128xf32>
      %150 = vector.broadcast %149 : vector<1x128xf32> to vector<8x128xf32>
      %151 = arith.addf %148, %150 : vector<8x128xf32>
      %152 = arith.truncf %151 : vector<8x128xf32> to vector<8x128xbf16>
      %c0_84 = arith.constant 0 : index
      %c0_85 = arith.constant 0 : index
      %153 = vector.load %arg15[%c0_84, %c0_85] : memref<8x128xbf16, #tpu.memory_space<vmem>>, vector<8x128xbf16>
      tpu.vector_store %arg15[%c0_84, %c0_85], %152 {strides = array<i32>} : memref<8x128xbf16, #tpu.memory_space<vmem>>, vector<8x128xbf16>,
    } else {
    }
    %c0 = arith.constant 0 : index
    %c0_1 = arith.constant 0 : index
    %c0_2 = arith.constant 0 : index
    %3 = vector.load %arg2[%c0, %c0_1, %c0_2] : memref<1x8x128xbf16, #tpu.memory_space<vmem>>, vector<1x8x128xbf16>
    %4 = vector.shape_cast %3 : vector<1x8x128xbf16> to vector<8x128xbf16>
    %c0_3 = arith.constant 0 : index
    %c0_4 = arith.constant 0 : index
    %5 = vector.load %arg5[%c0_3, %c0_4] : memref<128x128xbf16, #tpu.memory_space<vmem>>, vector<128x128xbf16>
    %cst = arith.constant dense<0.000000e+00> : vector<8x128xf32>
    %6 = tpu.matmul %4, %5, %cst {dimension_numbers = #tpu.dot_dimension_numbers<[1], [0], [0], [1], [0, 0, 1, 1], [], []>} : vector<8x128xbf16>, vector<128x128xbf16>, vector<8x128xf32> -> vector<8x128xf32>
    %c0_5 = arith.constant 0 : index
    %c0_6 = arith.constant 0 : index
    %7 = vector.load %arg6[%c0_5, %c0_6] : memref<1x128xf32, #tpu.memory_space<vmem>>, vector<1x128xf32>
    %8 = vector.broadcast %7 : vector<1x128xf32> to vector<8x128xf32>
    %9 = arith.addf %6, %8 : vector<8x128xf32>
    %10 = arith.truncf %9 : vector<8x128xf32> to vector<8x128xbf16>
    %11 = vector.extract_strided_slice %10 {offsets = [0, 0], sizes = [8, 32], strides = [1, 1]} : vector<8x128xbf16> to vector<8x32xbf16>
    %cst_7 = arith.constant 0xFF800000 : f32
    %12 = vector.broadcast %cst_7 : f32 to vector<8x1xf32>
    %cst_8 = arith.constant 0.000000e+00 : f32
    %13 = vector.broadcast %cst_8 : f32 to vector<8x1xf32>
    %cst_9 = arith.constant 0.000000e+00 : f32
    %14 = vector.broadcast %cst_9 : f32 to vector<8x32xf32>
    %c0_10 = arith.constant 0 : index
    %c0_11 = arith.constant 0 : index
    %15 = vector.load %arg14[%c0_10, %c0_11] : memref<8x128xbf16, #tpu.memory_space<vmem>>, vector<8x32xbf16>
    %c0_12 = arith.constant 0 : index
    %c0_13 = arith.constant 0 : index
    %16 = vector.load %arg15[%c0_12, %c0_13] : memref<8x128xbf16, #tpu.memory_space<vmem>>, vector<8x32xbf16>
    %cst_14 = arith.constant dense<0.000000e+00> : vector<8x8xf32>
    %17 = tpu.matmul %11, %15, %cst_14 {dimension_numbers = #tpu.dot_dimension_numbers<[1], [1], [0], [0], [0, 0, 1, 0], [], []>} : vector<8x32xbf16>, vector<8x32xbf16>, vector<8x8xf32> -> vector<8x8xf32>
    %cst_15 = arith.constant dense<0xFF800000> : vector<8xf32>
    %18 = vector.multi_reduction <maximumf>, %17, %cst_15 [1] : vector<8x8xf32> to vector<8xf32>
    %19 = vector.shape_cast %18 : vector<8xf32> to vector<8x1xf32>
    %20 = arith.maximumf %12, %19 : vector<8x1xf32>
    %21 = arith.subf %12, %20 : vector<8x1xf32>
    %22 = math.exp %21 : vector<8x1xf32>
    %23 = vector.broadcast %20 : vector<8x1xf32> to vector<8x8xf32>
    %24 = arith.subf %17, %23 : vector<8x8xf32>
    %25 = math.exp %24 : vector<8x8xf32>
    %26 = arith.mulf %22, %13 : vector<8x1xf32>
    %cst_16 = arith.constant dense<0.000000e+00> : vector<8xf32>
    %27 = vector.multi_reduction <add>, %25, %cst_16 [1] : vector<8x8xf32> to vector<8xf32>
    %28 = vector.shape_cast %27 : vector<8xf32> to vector<8x1xf32>
    %29 = arith.addf %26, %28 : vector<8x1xf32>
    %30 = vector.broadcast %22 : vector<8x1xf32> to vector<8x32xf32>
    %31 = arith.mulf %30, %14 : vector<8x32xf32>
    %32 = arith.truncf %25 : vector<8x8xf32> to vector<8x8xbf16>
    %cst_17 = arith.constant dense<0.000000e+00> : vector<8x32xf32>
    %33 = tpu.matmul %32, %16, %cst_17 {dimension_numbers = #tpu.dot_dimension_numbers<[1], [0], [0], [1], [0, 0, 1, 1], [], []>} : vector<8x8xbf16>, vector<8x32xbf16>, vector<8x32xf32> -> vector<8x32xf32>
    %34 = arith.addf %31, %33 : vector<8x32xf32>
    %35 = tpu.reciprocal %29 {approx = true} : vector<8x1xf32> -> vector<8x1xf32>
    %36 = vector.broadcast %35 : vector<8x1xf32> to vector<8x32xf32>
    %37 = arith.mulf %34, %36 : vector<8x32xf32>
    %38 = arith.truncf %37 : vector<8x32xf32> to vector<8x32xbf16>
    %c0_18 = arith.constant 0 : index
    %c0_19 = arith.constant 0 : index
    %39 = vector.load %arg16[%c0_18, %c0_19] : memref<8x128xbf16, #tpu.memory_space<vmem>>, vector<8x32xbf16>
    tpu.vector_store %arg16[%c0_18, %c0_19], %38 {strides = array<i32>} : memref<8x128xbf16, #tpu.memory_space<vmem>>, vector<8x32xbf16>,
    %40 = vector.extract_strided_slice %10 {offsets = [0, 32], sizes = [8, 32], strides = [1, 1]} : vector<8x128xbf16> to vector<8x32xbf16>
    %cst_20 = arith.constant 0xFF800000 : f32
    %41 = vector.broadcast %cst_20 : f32 to vector<8x1xf32>
    %cst_21 = arith.constant 0.000000e+00 : f32
    %42 = vector.broadcast %cst_21 : f32 to vector<8x1xf32>
    %cst_22 = arith.constant 0.000000e+00 : f32
    %43 = vector.broadcast %cst_22 : f32 to vector<8x32xf32>
    %c0_23 = arith.constant 0 : index
    %c32 = arith.constant 32 : index
    %44 = vector.load %arg14[%c0_23, %c32] : memref<8x128xbf16, #tpu.memory_space<vmem>>, vector<8x32xbf16>
    %c0_24 = arith.constant 0 : index
    %c32_25 = arith.constant 32 : index
    %45 = vector.load %arg15[%c0_24, %c32_25] : memref<8x128xbf16, #tpu.memory_space<vmem>>, vector<8x32xbf16>
    %cst_26 = arith.constant dense<0.000000e+00> : vector<8x8xf32>
    %46 = tpu.matmul %40, %44, %cst_26 {dimension_numbers = #tpu.dot_dimension_numbers<[1], [1], [0], [0], [0, 0, 1, 0], [], []>} : vector<8x32xbf16>, vector<8x32xbf16>, vector<8x8xf32> -> vector<8x8xf32>
    %cst_27 = arith.constant dense<0xFF800000> : vector<8xf32>
    %47 = vector.multi_reduction <maximumf>, %46, %cst_27 [1] : vector<8x8xf32> to vector<8xf32>
    %48 = vector.shape_cast %47 : vector<8xf32> to vector<8x1xf32>
    %49 = arith.maximumf %41, %48 : vector<8x1xf32>
    %50 = arith.subf %41, %49 : vector<8x1xf32>
    %51 = math.exp %50 : vector<8x1xf32>
    %52 = vector.broadcast %49 : vector<8x1xf32> to vector<8x8xf32>
    %53 = arith.subf %46, %52 : vector<8x8xf32>
    %54 = math.exp %53 : vector<8x8xf32>
    %55 = arith.mulf %51, %42 : vector<8x1xf32>
    %cst_28 = arith.constant dense<0.000000e+00> : vector<8xf32>
    %56 = vector.multi_reduction <add>, %54, %cst_28 [1] : vector<8x8xf32> to vector<8xf32>
    %57 = vector.shape_cast %56 : vector<8xf32> to vector<8x1xf32>
    %58 = arith.addf %55, %57 : vector<8x1xf32>
    %59 = vector.broadcast %51 : vector<8x1xf32> to vector<8x32xf32>
    %60 = arith.mulf %59, %43 : vector<8x32xf32>
    %61 = arith.truncf %54 : vector<8x8xf32> to vector<8x8xbf16>
    %cst_29 = arith.constant dense<0.000000e+00> : vector<8x32xf32>
    %62 = tpu.matmul %61, %45, %cst_29 {dimension_numbers = #tpu.dot_dimension_numbers<[1], [0], [0], [1], [0, 0, 1, 1], [], []>} : vector<8x8xbf16>, vector<8x32xbf16>, vector<8x32xf32> -> vector<8x32xf32>
    %63 = arith.addf %60, %62 : vector<8x32xf32>
    %64 = tpu.reciprocal %58 {approx = true} : vector<8x1xf32> -> vector<8x1xf32>
    %65 = vector.broadcast %64 : vector<8x1xf32> to vector<8x32xf32>
    %66 = arith.mulf %63, %65 : vector<8x32xf32>
    %67 = arith.truncf %66 : vector<8x32xf32> to vector<8x32xbf16>
    %c0_30 = arith.constant 0 : index
    %c32_31 = arith.constant 32 : index
    %68 = vector.load %arg16[%c0_30, %c32_31] : memref<8x128xbf16, #tpu.memory_space<vmem>>, vector<8x32xbf16>
    tpu.vector_store %arg16[%c0_30, %c32_31], %67 {strides = array<i32>} : memref<8x128xbf16, #tpu.memory_space<vmem>>, vector<8x32xbf16>,
    %69 = vector.extract_strided_slice %10 {offsets = [0, 64], sizes = [8, 32], strides = [1, 1]} : vector<8x128xbf16> to vector<8x32xbf16>
    %cst_32 = arith.constant 0xFF800000 : f32
    %70 = vector.broadcast %cst_32 : f32 to vector<8x1xf32>
    %cst_33 = arith.constant 0.000000e+00 : f32
    %71 = vector.broadcast %cst_33 : f32 to vector<8x1xf32>
    %cst_34 = arith.constant 0.000000e+00 : f32
    %72 = vector.broadcast %cst_34 : f32 to vector<8x32xf32>
    %c0_35 = arith.constant 0 : index
    %c64 = arith.constant 64 : index
    %73 = vector.load %arg14[%c0_35, %c64] : memref<8x128xbf16, #tpu.memory_space<vmem>>, vector<8x32xbf16>
    %c0_36 = arith.constant 0 : index
    %c64_37 = arith.constant 64 : index
    %74 = vector.load %arg15[%c0_36, %c64_37] : memref<8x128xbf16, #tpu.memory_space<vmem>>, vector<8x32xbf16>
    %cst_38 = arith.constant dense<0.000000e+00> : vector<8x8xf32>
    %75 = tpu.matmul %69, %73, %cst_38 {dimension_numbers = #tpu.dot_dimension_numbers<[1], [1], [0], [0], [0, 0, 1, 0], [], []>} : vector<8x32xbf16>, vector<8x32xbf16>, vector<8x8xf32> -> vector<8x8xf32>
    %cst_39 = arith.constant dense<0xFF800000> : vector<8xf32>
    %76 = vector.multi_reduction <maximumf>, %75, %cst_39 [1] : vector<8x8xf32> to vector<8xf32>
    %77 = vector.shape_cast %76 : vector<8xf32> to vector<8x1xf32>
    %78 = arith.maximumf %70, %77 : vector<8x1xf32>
    %79 = arith.subf %70, %78 : vector<8x1xf32>
    %80 = math.exp %79 : vector<8x1xf32>
    %81 = vector.broadcast %78 : vector<8x1xf32> to vector<8x8xf32>
    %82 = arith.subf %75, %81 : vector<8x8xf32>
    %83 = math.exp %82 : vector<8x8xf32>
    %84 = arith.mulf %80, %71 : vector<8x1xf32>
    %cst_40 = arith.constant dense<0.000000e+00> : vector<8xf32>
    %85 = vector.multi_reduction <add>, %83, %cst_40 [1] : vector<8x8xf32> to vector<8xf32>
    %86 = vector.shape_cast %85 : vector<8xf32> to vector<8x1xf32>
    %87 = arith.addf %84, %86 : vector<8x1xf32>
    %88 = vector.broadcast %80 : vector<8x1xf32> to vector<8x32xf32>
    %89 = arith.mulf %88, %72 : vector<8x32xf32>
    %90 = arith.truncf %83 : vector<8x8xf32> to vector<8x8xbf16>
    %cst_41 = arith.constant dense<0.000000e+00> : vector<8x32xf32>
    %91 = tpu.matmul %90, %74, %cst_41 {dimension_numbers = #tpu.dot_dimension_numbers<[1], [0], [0], [1], [0, 0, 1, 1], [], []>} : vector<8x8xbf16>, vector<8x32xbf16>, vector<8x32xf32> -> vector<8x32xf32>
    %92 = arith.addf %89, %91 : vector<8x32xf32>
    %93 = tpu.reciprocal %87 {approx = true} : vector<8x1xf32> -> vector<8x1xf32>
    %94 = vector.broadcast %93 : vector<8x1xf32> to vector<8x32xf32>
    %95 = arith.mulf %92, %94 : vector<8x32xf32>
    %96 = arith.truncf %95 : vector<8x32xf32> to vector<8x32xbf16>
    %c0_42 = arith.constant 0 : index
    %c64_43 = arith.constant 64 : index
    %97 = vector.load %arg16[%c0_42, %c64_43] : memref<8x128xbf16, #tpu.memory_space<vmem>>, vector<8x32xbf16>
    tpu.vector_store %arg16[%c0_42, %c64_43], %96 {strides = array<i32>} : memref<8x128xbf16, #tpu.memory_space<vmem>>, vector<8x32xbf16>,
    %98 = vector.extract_strided_slice %10 {offsets = [0, 96], sizes = [8, 32], strides = [1, 1]} : vector<8x128xbf16> to vector<8x32xbf16>
    %cst_44 = arith.constant 0xFF800000 : f32
    %99 = vector.broadcast %cst_44 : f32 to vector<8x1xf32>
    %cst_45 = arith.constant 0.000000e+00 : f32
    %100 = vector.broadcast %cst_45 : f32 to vector<8x1xf32>
    %cst_46 = arith.constant 0.000000e+00 : f32
    %101 = vector.broadcast %cst_46 : f32 to vector<8x32xf32>
    %c0_47 = arith.constant 0 : index
    %c96 = arith.constant 96 : index
    %102 = vector.load %arg14[%c0_47, %c96] : memref<8x128xbf16, #tpu.memory_space<vmem>>, vector<8x32xbf16>
    %c0_48 = arith.constant 0 : index
    %c96_49 = arith.constant 96 : index
    %103 = vector.load %arg15[%c0_48, %c96_49] : memref<8x128xbf16, #tpu.memory_space<vmem>>, vector<8x32xbf16>
    %cst_50 = arith.constant dense<0.000000e+00> : vector<8x8xf32>
    %104 = tpu.matmul %98, %102, %cst_50 {dimension_numbers = #tpu.dot_dimension_numbers<[1], [1], [0], [0], [0, 0, 1, 0], [], []>} : vector<8x32xbf16>, vector<8x32xbf16>, vector<8x8xf32> -> vector<8x8xf32>
    %cst_51 = arith.constant dense<0xFF800000> : vector<8xf32>
    %105 = vector.multi_reduction <maximumf>, %104, %cst_51 [1] : vector<8x8xf32> to vector<8xf32>
    %106 = vector.shape_cast %105 : vector<8xf32> to vector<8x1xf32>
    %107 = arith.maximumf %99, %106 : vector<8x1xf32>
    %108 = arith.subf %99, %107 : vector<8x1xf32>
    %109 = math.exp %108 : vector<8x1xf32>
    %110 = vector.broadcast %107 : vector<8x1xf32> to vector<8x8xf32>
    %111 = arith.subf %104, %110 : vector<8x8xf32>
    %112 = math.exp %111 : vector<8x8xf32>
    %113 = arith.mulf %109, %100 : vector<8x1xf32>
    %cst_52 = arith.constant dense<0.000000e+00> : vector<8xf32>
    %114 = vector.multi_reduction <add>, %112, %cst_52 [1] : vector<8x8xf32> to vector<8xf32>
    %115 = vector.shape_cast %114 : vector<8xf32> to vector<8x1xf32>
    %116 = arith.addf %113, %115 : vector<8x1xf32>
    %117 = vector.broadcast %109 : vector<8x1xf32> to vector<8x32xf32>
    %118 = arith.mulf %117, %101 : vector<8x32xf32>
    %119 = arith.truncf %112 : vector<8x8xf32> to vector<8x8xbf16>
    %cst_53 = arith.constant dense<0.000000e+00> : vector<8x32xf32>
    %120 = tpu.matmul %119, %103, %cst_53 {dimension_numbers = #tpu.dot_dimension_numbers<[1], [0], [0], [1], [0, 0, 1, 1], [], []>} : vector<8x8xbf16>, vector<8x32xbf16>, vector<8x32xf32> -> vector<8x32xf32>
    %121 = arith.addf %118, %120 : vector<8x32xf32>
    %122 = tpu.reciprocal %116 {approx = true} : vector<8x1xf32> -> vector<8x1xf32>
    %123 = vector.broadcast %122 : vector<8x1xf32> to vector<8x32xf32>
    %124 = arith.mulf %121, %123 : vector<8x32xf32>
    %125 = arith.truncf %124 : vector<8x32xf32> to vector<8x32xbf16>
    %c0_54 = arith.constant 0 : index
    %c96_55 = arith.constant 96 : index
    %126 = vector.load %arg16[%c0_54, %c96_55] : memref<8x128xbf16, #tpu.memory_space<vmem>>, vector<8x32xbf16>
    tpu.vector_store %arg16[%c0_54, %c96_55], %125 {strides = array<i32>} : memref<8x128xbf16, #tpu.memory_space<vmem>>, vector<8x32xbf16>,
    %c0_56 = arith.constant 0 : index
    %c0_57 = arith.constant 0 : index
    %127 = vector.load %arg16[%c0_56, %c0_57] : memref<8x128xbf16, #tpu.memory_space<vmem>>, vector<8x128xbf16>
    %c0_58 = arith.constant 0 : index
    %c0_59 = arith.constant 0 : index
    %128 = vector.load %arg11[%c0_58, %c0_59] : memref<128x128xbf16, #tpu.memory_space<vmem>>, vector<128x128xbf16>
    %cst_60 = arith.constant dense<0.000000e+00> : vector<8x128xf32>
    %129 = tpu.matmul %127, %128, %cst_60 {dimension_numbers = #tpu.dot_dimension_numbers<[1], [0], [0], [1], [0, 0, 1, 1], [], []>} : vector<8x128xbf16>, vector<128x128xbf16>, vector<8x128xf32> -> vector<8x128xf32>
    %c0_61 = arith.constant 0 : index
    %c0_62 = arith.constant 0 : index
    %130 = vector.load %arg12[%c0_61, %c0_62] : memref<1x128xf32, #tpu.memory_space<vmem>>, vector<1x128xf32>
    %131 = vector.broadcast %130 : vector<1x128xf32> to vector<8x128xf32>
    %132 = arith.addf %129, %131 : vector<8x128xf32>
    %c0_63 = arith.constant 0 : index
    %c0_64 = arith.constant 0 : index
    %c0_65 = arith.constant 0 : index
    %133 = vector.load %arg13[%c0_63, %c0_64, %c0_65] : memref<1x8x128xf32, #tpu.memory_space<vmem>>, vector<1x8x128xf32>
    %134 = vector.shape_cast %133 : vector<1x8x128xf32> to vector<8x128xf32>
    %135 = vector.shape_cast %132 : vector<8x128xf32> to vector<1x8x128xf32>
    tpu.vector_store %arg13[%c0_63, %c0_64, %c0_65], %135 {strides = array<i32>} : memref<1x8x128xf32, #tpu.memory_space<vmem>>, vector<1x8x128xf32>,
    return
  }
  func.func @transform_0(%arg0: i32, %arg1: i32) -> (i32, i32, i32) {
    %c0_i32 = arith.constant 0 : i32
    %c0_i32_0 = arith.constant 0 : i32
    return %arg0, %arg1, %c0_i32 : i32, i32, i32
  }
  func.func @transform_1(%arg0: i32, %arg1: i32) -> (i32, i32, i32) {
    %c0_i32 = arith.constant 0 : i32
    %c0_i32_0 = arith.constant 0 : i32
    %c0_i32_1 = arith.constant 0 : i32
    return %arg0, %c0_i32, %c0_i32_0 : i32, i32, i32
  }
  func.func @transform_2(%arg0: i32, %arg1: i32) -> (i32, i32, i32) {
    %c0_i32 = arith.constant 0 : i32
    %c0_i32_0 = arith.constant 0 : i32
    %c0_i32_1 = arith.constant 0 : i32
    return %arg0, %c0_i32, %c0_i32_0 : i32, i32, i32
  }
  func.func @transform_3(%arg0: i32, %arg1: i32) -> (i32, i32) {
    %c0_i32 = arith.constant 0 : i32
    %c0_i32_0 = arith.constant 0 : i32
    %c0_i32_1 = arith.constant 0 : i32
    return %c0_i32, %c0_i32_0 : i32, i32
  }
  func.func @transform_4(%arg0: i32, %arg1: i32) -> (i32, i32) {
    %c0_i32 = arith.constant 0 : i32
    %c0_i32_0 = arith.constant 0 : i32
    %c0_i32_1 = arith.constant 0 : i32
    return %c0_i32, %c0_i32_0 : i32, i32
  }
  func.func @transform_5(%arg0: i32, %arg1: i32) -> (i32, i32) {
    %c0_i32 = arith.constant 0 : i32
    %c0_i32_0 = arith.constant 0 : i32
    %c0_i32_1 = arith.constant 0 : i32
    return %c0_i32, %c0_i32_0 : i32, i32
  }
  func.func @transform_6(%arg0: i32, %arg1: i32) -> (i32, i32) {
    %c0_i32 = arith.constant 0 : i32
    %c0_i32_0 = arith.constant 0 : i32
    %c0_i32_1 = arith.constant 0 : i32
    return %c0_i32, %c0_i32_0 : i32, i32
  }
  func.func @transform_7(%arg0: i32, %arg1: i32) -> (i32, i32) {
    %c0_i32 = arith.constant 0 : i32
    %c0_i32_0 = arith.constant 0 : i32
    %c0_i32_1 = arith.constant 0 : i32
    return %c0_i32, %c0_i32_0 : i32, i32
  }
  func.func @transform_8(%arg0: i32, %arg1: i32) -> (i32, i32) {
    %c0_i32 = arith.constant 0 : i32
    %c0_i32_0 = arith.constant 0 : i32
    %c0_i32_1 = arith.constant 0 : i32
    return %c0_i32, %c0_i32_0 : i32, i32
  }
  func.func @transform_9(%arg0: i32, %arg1: i32) -> (i32, i32) {
    %c0_i32 = arith.constant 0 : i32
    %c0_i32_0 = arith.constant 0 : i32
    %c0_i32_1 = arith.constant 0 : i32
    return %c0_i32, %c0_i32_0 : i32, i32
  }
  func.func @transform_10(%arg0: i32, %arg1: i32) -> (i32, i32) {
    %c0_i32 = arith.constant 0 : i32
    %c0_i32_0 = arith.constant 0 : i32
    %c0_i32_1 = arith.constant 0 : i32
    return %c0_i32, %c0_i32_0 : i32, i32
  }
  func.func @transform_11(%arg0: i32, %arg1: i32) -> (i32, i32, i32) {
    %c0_i32 = arith.constant 0 : i32
    %c0_i32_0 = arith.constant 0 : i32
    return %arg0, %arg1, %c0_i32 : i32, i32, i32
  }
}

</mosaic_0001>

<llo_original>
// kernel: tpu_custom_call.1
$region0: #{tpu_custom_call.1}
  #allocation0 [shape = 'u32[]', space=smem, size = 0x4, offset = 0x4, fixed_abs, tag = 'smem constant byte address 0x4 - core index']
  #allocation1 [shape = 'u32[144,128]{1,0:T(1,128)}', space=vmem, size = 0x12000, scoped, tag = 'internal scratch']
  #allocation2 [shape = 'bf16[8,128]{1,0:T(8,128)(2,1)}', space=vmem, size = 0x800, scoped, tag = 'scratch operand']
  #allocation3 [shape = 'bf16[8,128]{1,0:T(8,128)(2,1)}', space=vmem, size = 0x800, scoped, tag = 'scratch operand']
  #allocation4 [shape = 'bf16[8,128]{1,0:T(8,128)(2,1)}', space=vmem, size = 0x800, scoped, tag = 'scratch operand']
  %s0 = inlined_call_operand.hbm [shape: bf16[2,8,128], index: 0, kind: input, shape index: {}]
  %s1 = inlined_call_operand.hbm [shape: bf16[2,8,128], index: 1, kind: input, shape index: {}]
  %s2 = inlined_call_operand.hbm [shape: bf16[2,8,128], index: 2, kind: input, shape index: {}]
  %s3 = inlined_call_operand.hbm [shape: bf16[128,128], index: 3, kind: input, shape index: {}]
  %s4 = inlined_call_operand.vmem [shape: f32[1,128], index: 4, kind: input, shape index: {}]
  %s5 = inlined_call_operand.hbm [shape: bf16[128,128], index: 5, kind: input, shape index: {}]
  %s6 = inlined_call_operand.vmem [shape: f32[1,128], index: 6, kind: input, shape index: {}]
  %s7 = inlined_call_operand.hbm [shape: bf16[128,128], index: 7, kind: input, shape index: {}]
  %s8 = inlined_call_operand.vmem [shape: f32[1,128], index: 8, kind: input, shape index: {}]
  %s9 = inlined_call_operand.hbm [shape: bf16[128,128], index: 9, kind: input, shape index: {}]
  %s10 = inlined_call_operand.vmem [shape: f32[1,128], index: 10, kind: input, shape index: {}]
  %s11 = inlined_call_operand.hbm [shape: f32[2,8,128], index: 11, kind: output, shape index: {}]
  %s12 = sld [smem:[#allocation0]]
  $region109: #{tpu_custom_call.1} parent=0
    _
  %s14 = ssub.s32 1, %s12
  %s15 = scalar_select 0, %s14, %s12
  $region1: #{tpu_custom_call.1} parent=0
    #allocation5 [shape = 'u8[4096]{0}', space=vmem, size = 0x1000, scoped, tag = 'input window, operand 0']
    #allocation6 [shape = 's32[2]{0}', space=sflag, size = 0x8, scoped, tag = 'scoped memory for tpu_custom_call.1']
    #allocation7 [shape = 's32[2]{0}', space=sflag, size = 0x8, scoped, tag = 'scoped memory for tpu_custom_call.1']
    #allocation8 [shape = 'u8[4096]{0}', space=vmem, size = 0x1000, scoped, tag = 'input window, operand 1']
    #allocation9 [shape = 's32[2]{0}', space=sflag, size = 0x8, scoped, tag = 'scoped memory for tpu_custom_call.1']
    #allocation10 [shape = 'u8[4096]{0}', space=vmem, size = 0x1000, scoped, tag = 'input window, operand 2']
    #allocation11 [shape = 'u8[32768]{0}', space=vmem, size = 0x8000, scoped, tag = 'input window, operand 3, single buffered']
    #allocation12 [shape = 's32[1]{0}', space=sflag, size = 0x4, scoped, tag = 'scoped memory for tpu_custom_call.1']
    #allocation13 [shape = 'u8[32768]{0}', space=vmem, size = 0x8000, scoped, tag = 'input window, operand 5, single buffered']
    #allocation14 [shape = 'u8[32768]{0}', space=vmem, size = 0x8000, scoped, tag = 'input window, operand 7, single buffered']
    #allocation15 [shape = 's32[1]{0}', space=sflag, size = 0x4, scoped, tag = 'scoped memory for tpu_custom_call.1']
    #allocation16 [shape = 'u8[32768]{0}', space=vmem, size = 0x8000, scoped, tag = 'input window, operand 9, single buffered']
    #allocation17 [shape = 'u8[8192]{0}', space=vmem, size = 0x2000, scoped, tag = 'output window, operand 0']
    %16 = vsyncpa [#allocation6], 0
    %s17 = scalar_lea.sflag [#allocation6], 1
    %18 = vsyncpa %s17, 0
    %19 = vsyncpa [#allocation9], 0
    %s20 = scalar_lea.sflag [#allocation9], 1
    %21 = vsyncpa %s20, 0
    %22 = vsyncpa [#allocation12], 0
    %23 = vsyncpa [#allocation15], 0
    %24 = vsyncpa [#allocation7], 0
    %s25 = scalar_lea.sflag [#allocation7], 1
    %26 = vsyncpa %s25, 0
    loop: start=0, step=1, limit=4
    $region2: #{tpu_custom_call.1} parent=1 // loop_pre_header
      _
    $region3: #{tpu_custom_call.1} parent=1 // loop_header
      %s28 = sphi 0, %s32
      %p29 = scmp.ge.s32.totalorder %s28, 4
      %s35 = sphi 0, %s47
      %s36 = sphi 0, %s43
      %s37 = sphi 0, %s35
      %s38 = sphi 0, %s36
      %s39 = sphi 0, %s37
      %s40 = sphi 0, %s38
      %s52 = sphi 0, %s54
      %s55 = sphi 0, %s52
      %s56 = sphi 0, %s55
      %s72 = sphi 0, %s56
      %s78 = sphi 0, %s80
      %s81 = sphi 0, %s78
      %s82 = sphi 0, %s81
      %s98 = sphi 0, %s82
      %s104 = sphi 0, %s106
      %s107 = sphi 0, %s104
      %s108 = sphi 0, %s107
      %s124 = sphi 0, %s108
      %s128 = sphi 0, %s128
      %s130 = sphi 0, %s128
      %s131 = sphi 0, %s130
      %s145 = sphi 0, %s131
      %s149 = sphi 0, %s149
      %s151 = sphi 0, %s149
      %s152 = sphi 0, %s151
      %s166 = sphi 0, %s152
      %s170 = sphi 0, %s170
      %s172 = sphi 0, %s170
      %s173 = sphi 0, %s172
      %s187 = sphi 0, %s173
      %s191 = sphi 0, %s191
      %s193 = sphi 0, %s191
      %s194 = sphi 0, %s193
      %s208 = sphi 0, %s194
      %s212 = sphi 0, %s212
      %s214 = sphi 0, %s212
      %s215 = sphi 0, %s214
      %s229 = sphi 0, %s215
      %s233 = sphi 0, %s233
      %s235 = sphi 0, %s233
      %s236 = sphi 0, %s235
      %s250 = sphi 0, %s236
      %s254 = sphi 0, %s254
      %s256 = sphi 0, %s254
      %s257 = sphi 0, %s256
      %s271 = sphi 0, %s257
      %s275 = sphi 0, %s275
      %s277 = sphi 0, %s275
      %s278 = sphi 0, %s277
      %s292 = sphi 0, %s278
      %s300 = sphi 0, %s302
      %s303 = sphi 0, %s300
      %s304 = sphi 0, %s303
      %s320 = sphi 0, %s304
    $region4: #{tpu_custom_call.1} parent=1 // loop_header_branch
      %31 = sbr.rel (%p29) target = $region8
    $region5: #{tpu_custom_call.1} parent=1 // loop_body
      %s33 = ssub.s32 %s28, 1
      %s34 = ssub.s32 %s28, 2
      %s41 = sadd.s32 1, %s36
      %p42 = scmp.ge.s32.totalorder %s41, 1
      %s43 = scalar_select %p42, 0, %s41
      %s44 = sadd.s32 1, %s35
      %s45 = scalar_select %p42, %s44, %s35
      %p46 = scmp.ge.s32.totalorder %s45, 2
      %s47 = scalar_select %p46, 0, %s45
      %s48 = ssub.s32 %s35, %s47
      %s49 = ssub.s32 %s36, %s43
      %s50 = sor.u32 %s48, %s49
      %p51 = scmp.eq.s32.totalorder %s50, 0
      %s53 = sadd.s32 %s52, 1
      %s54 = scalar_select %p51, %s52, %s53
      %p57 = pneg %p51
      %p58 = scmp.eq.s32.totalorder %s28, 1
      %p59 = por %p57, %p58
      %p60 = scmp.ne.s32.totalorder %s52, %s55
      %p61 = scmp.eq.s32.totalorder %s28, 0
      %p62 = por %p60, %p61
      %p63 = scmp.ne.s32.totalorder %s52, %s55
      %p64 = scmp.eq.s32.totalorder %s33, 1
      %p65 = por %p63, %p64
      %p66 = scmp.ne.s32.totalorder %s55, %s56
      %p67 = scmp.eq.s32.totalorder %s33, 0
      %p68 = por %p66, %p67
      %p69 = scmp.ne.s32.totalorder %s55, %s56
      %p70 = scmp.eq.s32.totalorder %s34, 1
      %p71 = por %p69, %p70
      %p73 = scmp.ne.s32.totalorder %s56, %s72
      %p74 = scmp.eq.s32.totalorder %s34, 0
      %p75 = por %p73, %p74
      %s76 = ssub.s32 %s35, %s47
      %p77 = scmp.eq.s32.totalorder %s76, 0
      %s79 = sadd.s32 %s78, 1
      %s80 = scalar_select %p77, %s78, %s79
      %p83 = pneg %p77
      %p84 = scmp.eq.s32.totalorder %s28, 1
      %p85 = por %p83, %p84
      %p86 = scmp.ne.s32.totalorder %s78, %s81
      %p87 = scmp.eq.s32.totalorder %s28, 0
      %p88 = por %p86, %p87
      %p89 = scmp.ne.s32.totalorder %s78, %s81
      %p90 = scmp.eq.s32.totalorder %s33, 1
      %p91 = por %p89, %p90
      %p92 = scmp.ne.s32.totalorder %s81, %s82
      %p93 = scmp.eq.s32.totalorder %s33, 0
      %p94 = por %p92, %p93
      %p95 = scmp.ne.s32.totalorder %s81, %s82
      %p96 = scmp.eq.s32.totalorder %s34, 1
      %p97 = por %p95, %p96
      %p99 = scmp.ne.s32.totalorder %s82, %s98
      %p100 = scmp.eq.s32.totalorder %s34, 0
      %p101 = por %p99, %p100
      %s102 = ssub.s32 %s35, %s47
      %p103 = scmp.eq.s32.totalorder %s102, 0
      %s105 = sadd.s32 %s104, 1
      %s106 = scalar_select %p103, %s104, %s105
      %p109 = pneg %p103
      %p110 = scmp.eq.s32.totalorder %s28, 1
      %p111 = por %p109, %p110
      %p112 = scmp.ne.s32.totalorder %s104, %s107
      %p113 = scmp.eq.s32.totalorder %s28, 0
      %p114 = por %p112, %p113
      %p115 = scmp.ne.s32.totalorder %s104, %s107
      %p116 = scmp.eq.s32.totalorder %s33, 1
      %p117 = por %p115, %p116
      %p118 = scmp.ne.s32.totalorder %s107, %s108
      %p119 = scmp.eq.s32.totalorder %s33, 0
      %p120 = por %p118, %p119
      %p121 = scmp.ne.s32.totalorder %s107, %s108
      %p122 = scmp.eq.s32.totalorder %s34, 1
      %p123 = por %p121, %p122
      %p125 = scmp.ne.s32.totalorder %s108, %s124
      %p126 = scmp.eq.s32.totalorder %s34, 0
      %p127 = por %p125, %p126
      %s129 = sadd.s32 %s128, 1
      %p132 = scmp.eq.s32.totalorder %s28, 1
      %p133 = scmp.ne.s32.totalorder %s128, %s130
      %p134 = scmp.eq.s32.totalorder %s28, 0
      %p135 = por %p133, %p134
      %p136 = scmp.ne.s32.totalorder %s128, %s130
      %p137 = scmp.eq.s32.totalorder %s33, 1
      %p138 = por %p136, %p137
      %p139 = scmp.ne.s32.totalorder %s130, %s131
      %p140 = scmp.eq.s32.totalorder %s33, 0
      %p141 = por %p139, %p140
      %p142 = scmp.ne.s32.totalorder %s130, %s131
      %p143 = scmp.eq.s32.totalorder %s34, 1
      %p144 = por %p142, %p143
      %p146 = scmp.ne.s32.totalorder %s131, %s145
      %p147 = scmp.eq.s32.totalorder %s34, 0
      %p148 = por %p146, %p147
      %s150 = sadd.s32 %s149, 1
      %p153 = scmp.eq.s32.totalorder %s28, 1
      %p154 = scmp.ne.s32.totalorder %s149, %s151
      %p155 = scmp.eq.s32.totalorder %s28, 0
      %p156 = por %p154, %p155
      %p157 = scmp.ne.s32.totalorder %s149, %s151
      %p158 = scmp.eq.s32.totalorder %s33, 1
      %p159 = por %p157, %p158
      %p160 = scmp.ne.s32.totalorder %s151, %s152
      %p161 = scmp.eq.s32.totalorder %s33, 0
      %p162 = por %p160, %p161
      %p163 = scmp.ne.s32.totalorder %s151, %s152
      %p164 = scmp.eq.s32.totalorder %s34, 1
      %p165 = por %p163, %p164
      %p167 = scmp.ne.s32.totalorder %s152, %s166
      %p168 = scmp.eq.s32.totalorder %s34, 0
      %p169 = por %p167, %p168
      %s171 = sadd.s32 %s170, 1
      %p174 = scmp.eq.s32.totalorder %s28, 1
      %p175 = scmp.ne.s32.totalorder %s170, %s172
      %p176 = scmp.eq.s32.totalorder %s28, 0
      %p177 = por %p175, %p176
      %p178 = scmp.ne.s32.totalorder %s170, %s172
      %p179 = scmp.eq.s32.totalorder %s33, 1
      %p180 = por %p178, %p179
      %p181 = scmp.ne.s32.totalorder %s172, %s173
      %p182 = scmp.eq.s32.totalorder %s33, 0
      %p183 = por %p181, %p182
      %p184 = scmp.ne.s32.totalorder %s172, %s173
      %p185 = scmp.eq.s32.totalorder %s34, 1
      %p186 = por %p184, %p185
      %p188 = scmp.ne.s32.totalorder %s173, %s187
      %p189 = scmp.eq.s32.totalorder %s34, 0
      %p190 = por %p188, %p189
      %s192 = sadd.s32 %s191, 1
      %p195 = scmp.eq.s32.totalorder %s28, 1
      %p196 = scmp.ne.s32.totalorder %s191, %s193
      %p197 = scmp.eq.s32.totalorder %s28, 0
      %p198 = por %p196, %p197
      %p199 = scmp.ne.s32.totalorder %s191, %s193
      %p200 = scmp.eq.s32.totalorder %s33, 1
      %p201 = por %p199, %p200
      %p202 = scmp.ne.s32.totalorder %s193, %s194
      %p203 = scmp.eq.s32.totalorder %s33, 0
      %p204 = por %p202, %p203
      %p205 = scmp.ne.s32.totalorder %s193, %s194
      %p206 = scmp.eq.s32.totalorder %s34, 1
      %p207 = por %p205, %p206
      %p209 = scmp.ne.s32.totalorder %s194, %s208
      %p210 = scmp.eq.s32.totalorder %s34, 0
      %p211 = por %p209, %p210
      %s213 = sadd.s32 %s212, 1
      %p216 = scmp.eq.s32.totalorder %s28, 1
      %p217 = scmp.ne.s32.totalorder %s212, %s214
      %p218 = scmp.eq.s32.totalorder %s28, 0
      %p219 = por %p217, %p218
      %p220 = scmp.ne.s32.totalorder %s212, %s214
      %p221 = scmp.eq.s32.totalorder %s33, 1
      %p222 = por %p220, %p221
      %p223 = scmp.ne.s32.totalorder %s214, %s215
      %p224 = scmp.eq.s32.totalorder %s33, 0
      %p225 = por %p223, %p224
      %p226 = scmp.ne.s32.totalorder %s214, %s215
      %p227 = scmp.eq.s32.totalorder %s34, 1
      %p228 = por %p226, %p227
      %p230 = scmp.ne.s32.totalorder %s215, %s229
      %p231 = scmp.eq.s32.totalorder %s34, 0
      %p232 = por %p230, %p231
      %s234 = sadd.s32 %s233, 1
      %p237 = scmp.eq.s32.totalorder %s28, 1
      %p238 = scmp.ne.s32.totalorder %s233, %s235
      %p239 = scmp.eq.s32.totalorder %s28, 0
      %p240 = por %p238, %p239
      %p241 = scmp.ne.s32.totalorder %s233, %s235
      %p242 = scmp.eq.s32.totalorder %s33, 1
      %p243 = por %p241, %p242
      %p244 = scmp.ne.s32.totalorder %s235, %s236
      %p245 = scmp.eq.s32.totalorder %s33, 0
      %p246 = por %p244, %p245
      %p247 = scmp.ne.s32.totalorder %s235, %s236
      %p248 = scmp.eq.s32.totalorder %s34, 1
      %p249 = por %p247, %p248
      %p251 = scmp.ne.s32.totalorder %s236, %s250
      %p252 = scmp.eq.s32.totalorder %s34, 0
      %p253 = por %p251, %p252
      %s255 = sadd.s32 %s254, 1
      %p258 = scmp.eq.s32.totalorder %s28, 1
      %p259 = scmp.ne.s32.totalorder %s254, %s256
      %p260 = scmp.eq.s32.totalorder %s28, 0
      %p261 = por %p259, %p260
      %p262 = scmp.ne.s32.totalorder %s254, %s256
      %p263 = scmp.eq.s32.totalorder %s33, 1
      %p264 = por %p262, %p263
      %p265 = scmp.ne.s32.totalorder %s256, %s257
      %p266 = scmp.eq.s32.totalorder %s33, 0
      %p267 = por %p265, %p266
      %p268 = scmp.ne.s32.totalorder %s256, %s257
      %p269 = scmp.eq.s32.totalorder %s34, 1
      %p270 = por %p268, %p269
      %p272 = scmp.ne.s32.totalorder %s257, %s271
      %p273 = scmp.eq.s32.totalorder %s34, 0
      %p274 = por %p272, %p273
      %s276 = sadd.s32 %s275, 1
      %p279 = scmp.eq.s32.totalorder %s28, 1
      %p280 = scmp.ne.s32.totalorder %s275, %s277
      %p281 = scmp.eq.s32.totalorder %s28, 0
      %p282 = por %p280, %p281
      %p283 = scmp.ne.s32.totalorder %s275, %s277
      %p284 = scmp.eq.s32.totalorder %s33, 1
      %p285 = por %p283, %p284
      %p286 = scmp.ne.s32.totalorder %s277, %s278
      %p287 = scmp.eq.s32.totalorder %s33, 0
      %p288 = por %p286, %p287
      %p289 = scmp.ne.s32.totalorder %s277, %s278
      %p290 = scmp.eq.s32.totalorder %s34, 1
      %p291 = por %p289, %p290
      %p293 = scmp.ne.s32.totalorder %s278, %s292
      %p294 = scmp.eq.s32.totalorder %s34, 0
      %p295 = por %p293, %p294
      %s296 = ssub.s32 %s35, %s47
      %s297 = ssub.s32 %s36, %s43
      %s298 = sor.u32 %s296, %s297
      %p299 = scmp.eq.s32.totalorder %s298, 0
      %s301 = sadd.s32 %s300, 1
      %s302 = scalar_select %p299, %s300, %s301
      %p305 = pneg %p299
      %p306 = scmp.eq.s32.totalorder %s28, 1
      %p307 = por %p305, %p306
      %p308 = scmp.ne.s32.totalorder %s300, %s303
      %p309 = scmp.eq.s32.totalorder %s28, 0
      %p310 = por %p308, %p309
      %p311 = scmp.ne.s32.totalorder %s300, %s303
      %p312 = scmp.eq.s32.totalorder %s33, 1
      %p313 = por %p311, %p312
      %p314 = scmp.ne.s32.totalorder %s303, %s304
      %p315 = scmp.eq.s32.totalorder %s33, 0
      %p316 = por %p314, %p315
      %p317 = scmp.ne.s32.totalorder %s303, %s304
      %p318 = scmp.eq.s32.totalorder %s34, 1
      %p319 = por %p317, %p318
      %p321 = scmp.ne.s32.totalorder %s304, %s320
      %p322 = scmp.eq.s32.totalorder %s34, 0
      %p323 = por %p321, %p322
      %p324 = scmp.le.s32.totalorder 1, %s28
      %p325 = scmp.lt.s32.totalorder %s28, 3
      %p326 = pnand %p324, %p325
      %p327 = pneg %p326
      // Predicated region
      $region9: #{tpu_custom_call.1} parent=5 // pred_check
        _
      $region10: #{tpu_custom_call.1} parent=5 // pred_check_branch
        %329 = sbr.rel (%p326) target = $region12
      $region11: #{tpu_custom_call.1} parent=5 // pred_region
        %s330 = ssub.s32 %s28, 1
        // Predicated region
        $region13: #{tpu_custom_call.1} parent=11 // pred_check
          %p331 = pneg %p141
        $region14: #{tpu_custom_call.1} parent=11 // pred_check_branch
          %333 = sbr.rel (%p331) target = $region16
        $region15: #{tpu_custom_call.1} parent=11 // pred_region
          %s335 = ssub.s32 1024, 1024
          %336 = vsyncadd [#allocation12], %s335
          %s337 = sshll.u32 [#allocation11], 4
          %s338 = int_to_ptr.vmem [resolvable:$true] %s337
          %343 = dma.hbm_to_vmem [thread:$0]  %s3, 1024, %s338, [#allocation12], 64, 64, 4
        $region16: #{tpu_custom_call.1} parent=11 // pred_fallthru
          _
        // Predicated region
        $region17: #{tpu_custom_call.1} parent=11 // pred_check
          %p344 = pneg %p162
        $region18: #{tpu_custom_call.1} parent=11 // pred_check_branch
          %346 = sbr.rel (%p344) target = $region20
        $region19: #{tpu_custom_call.1} parent=11 // pred_region
          _
        $region20: #{tpu_custom_call.1} parent=11 // pred_fallthru
          _
        // Predicated region
        $region21: #{tpu_custom_call.1} parent=11 // pred_check
          %p347 = pneg %p183
        $region22: #{tpu_custom_call.1} parent=11 // pred_check_branch
          %349 = sbr.rel (%p347) target = $region24
        $region23: #{tpu_custom_call.1} parent=11 // pred_region
          %s351 = ssub.s32 1024, 1024
          %352 = vsyncadd [#allocation12], %s351
          %s353 = sshll.u32 [#allocation13], 4
          %s354 = int_to_ptr.vmem [resolvable:$true] %s353
          %359 = dma.hbm_to_vmem [thread:$0]  %s5, 1024, %s354, [#allocation12], 64, 64, 4
        $region24: #{tpu_custom_call.1} parent=11 // pred_fallthru
          _
        // Predicated region
        $region25: #{tpu_custom_call.1} parent=11 // pred_check
          %p360 = pneg %p204
        $region26: #{tpu_custom_call.1} parent=11 // pred_check_branch
          %362 = sbr.rel (%p360) target = $region28
        $region27: #{tpu_custom_call.1} parent=11 // pred_region
          _
        $region28: #{tpu_custom_call.1} parent=11 // pred_fallthru
          _
        // Predicated region
        $region29: #{tpu_custom_call.1} parent=11 // pred_check
          %p363 = pneg %p225
        $region30: #{tpu_custom_call.1} parent=11 // pred_check_branch
          %365 = sbr.rel (%p363) target = $region32
        $region31: #{tpu_custom_call.1} parent=11 // pred_region
          %s367 = ssub.s32 1024, 1024
          %368 = vsyncadd [#allocation15], %s367
          %s369 = sshll.u32 [#allocation14], 4
          %s370 = int_to_ptr.vmem [resolvable:$true] %s369
          %375 = dma.hbm_to_vmem [thread:$0]  %s7, 1024, %s370, [#allocation15], 64, 64, 4
        $region32: #{tpu_custom_call.1} parent=11 // pred_fallthru
          _
        // Predicated region
        $region33: #{tpu_custom_call.1} parent=11 // pred_check
          %p376 = pneg %p246
        $region34: #{tpu_custom_call.1} parent=11 // pred_check_branch
          %378 = sbr.rel (%p376) target = $region36
        $region35: #{tpu_custom_call.1} parent=11 // pred_region
          _
        $region36: #{tpu_custom_call.1} parent=11 // pred_fallthru
          _
        // Predicated region
        $region37: #{tpu_custom_call.1} parent=11 // pred_check
          %p379 = pneg %p267
        $region38: #{tpu_custom_call.1} parent=11 // pred_check_branch
          %381 = sbr.rel (%p379) target = $region40
        $region39: #{tpu_custom_call.1} parent=11 // pred_region
          %s383 = ssub.s32 1024, 1024
          %384 = vsyncadd [#allocation15], %s383
          %s385 = sshll.u32 [#allocation16], 4
          %s386 = int_to_ptr.vmem [resolvable:$true] %s385
          %391 = dma.hbm_to_vmem [thread:$0]  %s9, 1024, %s386, [#allocation15], 64, 64, 4
        $region40: #{tpu_custom_call.1} parent=11 // pred_fallthru
          _
        // Predicated region
        $region41: #{tpu_custom_call.1} parent=11 // pred_check
          %p392 = pneg %p288
        $region42: #{tpu_custom_call.1} parent=11 // pred_check_branch
          %394 = sbr.rel (%p392) target = $region44
        $region43: #{tpu_custom_call.1} parent=11 // pred_region
          _
        $region44: #{tpu_custom_call.1} parent=11 // pred_fallthru
          _
      $region12: #{tpu_custom_call.1} parent=5 // pred_fallthru
        _
      %p395 = scmp.lt.s32.totalorder %s28, 2
      // Predicated region
      $region45: #{tpu_custom_call.1} parent=5 // pred_check
        %p396 = pneg %p395
      $region46: #{tpu_custom_call.1} parent=5 // pred_check_branch
        %398 = sbr.rel (%p396) target = $region48
      $region47: #{tpu_custom_call.1} parent=5 // pred_region
        // Predicated region
        $region49: #{tpu_custom_call.1} parent=47 // pred_check
          %p399 = pneg %p62
        $region50: #{tpu_custom_call.1} parent=47 // pred_check_branch
          %401 = sbr.rel (%p399) target = $region52
        $region51: #{tpu_custom_call.1} parent=47 // pred_region
          %s402 = sand.u32 %s52, 1
          %s403 = scalar_lea.sflag [#allocation6], %s402
          %s404 = sand.u32 %s52, 1
          %s405 = smul.addr %s404, 4
          %s406 = scalar_lea.vmem [#allocation5], %s405
          %s408 = ssub.s32 64, 64
          %409 = vsyncadd %s403, %s408
          %s410 = sadd.s32 %s36, %s35
          %s411 = smul.addr %s410, 64
          %s412 = scalar_lea.hbm %s0, %s411
          %s414 = sshll.u32 %s406, 4
          %s415 = int_to_ptr.vmem [resolvable:$true] %s414
          %417 = dma.hbm_to_vmem [thread:$0]  %s412, 64, %s415, %s403
        $region52: #{tpu_custom_call.1} parent=47 // pred_fallthru
          _
        // Predicated region
        $region53: #{tpu_custom_call.1} parent=47 // pred_check
          %p418 = pneg %p88
        $region54: #{tpu_custom_call.1} parent=47 // pred_check_branch
          %420 = sbr.rel (%p418) target = $region56
        $region55: #{tpu_custom_call.1} parent=47 // pred_region
          %s421 = sand.u32 %s28, 1
          %s422 = scalar_lea.sflag [#allocation9], %s421
          %s423 = sand.u32 %s78, 1
          %s424 = smul.addr %s423, 4
          %s425 = scalar_lea.vmem [#allocation8], %s424
          %s427 = ssub.s32 64, 64
          %428 = vsyncadd %s422, %s427
          %s429 = smul.addr %s35, 64
          %s430 = scalar_lea.hbm %s1, %s429
          %s432 = sshll.u32 %s425, 4
          %s433 = int_to_ptr.vmem [resolvable:$true] %s432
          %435 = dma.hbm_to_vmem [thread:$0]  %s430, 64, %s433, %s422
        $region56: #{tpu_custom_call.1} parent=47 // pred_fallthru
          _
        // Predicated region
        $region57: #{tpu_custom_call.1} parent=47 // pred_check
          %p436 = pneg %p114
        $region58: #{tpu_custom_call.1} parent=47 // pred_check_branch
          %438 = sbr.rel (%p436) target = $region60
        $region59: #{tpu_custom_call.1} parent=47 // pred_region
          %s439 = sand.u32 %s28, 1
          %s440 = scalar_lea.sflag [#allocation9], %s439
          %s441 = sand.u32 %s104, 1
          %s442 = smul.addr %s441, 4
          %s443 = scalar_lea.vmem [#allocation10], %s442
          %s445 = ssub.s32 64, 64
          %446 = vsyncadd %s440, %s445
          %s447 = smul.addr %s35, 64
          %s448 = scalar_lea.hbm %s2, %s447
          %s450 = sshll.u32 %s443, 4
          %s451 = int_to_ptr.vmem [resolvable:$true] %s450
          %453 = dma.hbm_to_vmem [thread:$0]  %s448, 64, %s451, %s440
        $region60: #{tpu_custom_call.1} parent=47 // pred_fallthru
          _
      $region48: #{tpu_custom_call.1} parent=5 // pred_fallthru
        _
      %p454 = scmp.le.s32.totalorder 1, %s28
      %p455 = scmp.lt.s32.totalorder %s28, 3
      %p456 = pnand %p454, %p455
      %p457 = pneg %p456
      // Predicated region
      $region61: #{tpu_custom_call.1} parent=5 // pred_check
        _
      $region62: #{tpu_custom_call.1} parent=5 // pred_check_branch
        %459 = sbr.rel (%p456) target = $region64
      $region63: #{tpu_custom_call.1} parent=5 // pred_region
        %s460 = ssub.s32 %s28, 1
        %s461 = sand.u32 %s55, 1
        %s462 = scalar_lea.sflag [#allocation6], %s461
        %s463 = sand.u32 %s55, 1
        %s464 = smul.addr %s463, 4
        %s465 = scalar_lea.vmem [#allocation5], %s464
        // Predicated region
        $region65: #{tpu_custom_call.1} parent=63 // pred_check
          %p466 = pneg %p68
        $region66: #{tpu_custom_call.1} parent=63 // pred_check_branch
          %468 = sbr.rel (%p466) target = $region68
        $region67: #{tpu_custom_call.1} parent=63 // pred_region
          %469 = dma.done %s462, 64
        $region68: #{tpu_custom_call.1} parent=63 // pred_fallthru
          _
        %s470 = sand.u32 %s33, 1
        %s471 = scalar_lea.sflag [#allocation9], %s470
        %s472 = sand.u32 %s81, 1
        %s473 = smul.addr %s472, 4
        %s474 = scalar_lea.vmem [#allocation8], %s473
        // Predicated region
        $region69: #{tpu_custom_call.1} parent=63 // pred_check
          %p475 = pneg %p94
        $region70: #{tpu_custom_call.1} parent=63 // pred_check_branch
          %477 = sbr.rel (%p475) target = $region72
        $region71: #{tpu_custom_call.1} parent=63 // pred_region
          %478 = dma.done %s471, 64
        $region72: #{tpu_custom_call.1} parent=63 // pred_fallthru
          _
        %s479 = sand.u32 %s33, 1
        %s480 = scalar_lea.sflag [#allocation9], %s479
        %s481 = sand.u32 %s107, 1
        %s482 = smul.addr %s481, 4
        %s483 = scalar_lea.vmem [#allocation10], %s482
        // Predicated region
        $region73: #{tpu_custom_call.1} parent=63 // pred_check
          %p484 = pneg %p120
        $region74: #{tpu_custom_call.1} parent=63 // pred_check_branch
          %486 = sbr.rel (%p484) target = $region76
        $region75: #{tpu_custom_call.1} parent=63 // pred_region
          %487 = dma.done %s480, 64
        $region76: #{tpu_custom_call.1} parent=63 // pred_fallthru
          _
        // Predicated region
        $region77: #{tpu_custom_call.1} parent=63 // pred_check
          %p488 = pneg %p141
        $region78: #{tpu_custom_call.1} parent=63 // pred_check_branch
          %490 = sbr.rel (%p488) target = $region80
        $region79: #{tpu_custom_call.1} parent=63 // pred_region
          %491 = dma.done [#allocation12], 1024
        $region80: #{tpu_custom_call.1} parent=63 // pred_fallthru
          _
        // Predicated region
        $region81: #{tpu_custom_call.1} parent=63 // pred_check
          %p492 = pneg %p183
        $region82: #{tpu_custom_call.1} parent=63 // pred_check_branch
          %494 = sbr.rel (%p492) target = $region84
        $region83: #{tpu_custom_call.1} parent=63 // pred_region
          %495 = dma.done [#allocation12], 1024
        $region84: #{tpu_custom_call.1} parent=63 // pred_fallthru
          _
        // Predicated region
        $region85: #{tpu_custom_call.1} parent=63 // pred_check
          %p496 = pneg %p225
        $region86: #{tpu_custom_call.1} parent=63 // pred_check_branch
          %498 = sbr.rel (%p496) target = $region88
        $region87: #{tpu_custom_call.1} parent=63 // pred_region
          %499 = dma.done [#allocation15], 1024
        $region88: #{tpu_custom_call.1} parent=63 // pred_fallthru
          _
        // Predicated region
        $region89: #{tpu_custom_call.1} parent=63 // pred_check
          %p500 = pneg %p267
        $region90: #{tpu_custom_call.1} parent=63 // pred_check_branch
          %502 = sbr.rel (%p500) target = $region92
        $region91: #{tpu_custom_call.1} parent=63 // pred_region
          %503 = dma.done [#allocation15], 1024
        $region92: #{tpu_custom_call.1} parent=63 // pred_fallthru
          _
        %s504 = sand.u32 %s55, 1
        %s505 = scalar_lea.sflag [#allocation6], %s504
        %s506 = sand.u32 %s55, 1
        %s507 = smul.addr %s506, 4
        %s508 = scalar_lea.vmem [#allocation5], %s507
        %p509 = pneg %p68
        %p510 = pneg %p65
        %s511 = sand.u32 %s33, 1
        %s512 = scalar_lea.sflag [#allocation9], %s511
        %s513 = sand.u32 %s81, 1
        %s514 = smul.addr %s513, 4
        %s515 = scalar_lea.vmem [#allocation8], %s514
        %p516 = pneg %p94
        %p517 = pneg %p91
        %s518 = sand.u32 %s33, 1
        %s519 = scalar_lea.sflag [#allocation9], %s518
        %s520 = sand.u32 %s107, 1
        %s521 = smul.addr %s520, 4
        %s522 = scalar_lea.vmem [#allocation10], %s521
        %p523 = pneg %p120
        %p524 = pneg %p117
        %p525 = pneg %p141
        %p526 = pneg %p138
        %p527 = pneg %p162
        %p528 = pneg %p159
        %p529 = pneg %p183
        %p530 = pneg %p180
        %p531 = pneg %p204
        %p532 = pneg %p201
        %p533 = pneg %p225
        %p534 = pneg %p222
        %p535 = pneg %p246
        %p536 = pneg %p243
        %p537 = pneg %p267
        %p538 = pneg %p264
        %p539 = pneg %p288
        %p540 = pneg %p285
        %p541 = pneg %p316
        %p542 = pneg %p313
        %s543 = sand.u32 %s303, 1
        %s544 = scalar_lea.sflag [#allocation7], %s543
        %s545 = sand.u32 %s303, 1
        %s546 = smul.addr %s545, 8
        %s547 = scalar_lea.vmem [#allocation17], %s546
        %p549 = scmp.eq.s32.totalorder %s38, 0
        // Predicated region
        $region93: #{tpu_custom_call.1} parent=63 // pred_check
          %p550 = pneg %p549
        $region94: #{tpu_custom_call.1} parent=63 // pred_check_branch
          %552 = sbr.rel (%p550) target = $region96
        $region95: #{tpu_custom_call.1} parent=63 // pred_region
          %v553 = vld [vmem:[%s474] sm:$0xf]
          %v554 = vld [vmem:[#allocation13] sm:$0xf]
          %v555 = vld [vmem:[#allocation13 + $0x4] sm:$0xf]
          %v556 = vld [vmem:[#allocation13 + $0x8] sm:$0xf]
          %v557 = vld [vmem:[#allocation13 + $0xc] sm:$0xf]
          %v558 = vld [vmem:[#allocation13 + $0x10] sm:$0xf]
          %v559 = vld [vmem:[#allocation13 + $0x14] sm:$0xf]
          %v560 = vld [vmem:[#allocation13 + $0x18] sm:$0xf]
          %v561 = vld [vmem:[#allocation13 + $0x1c] sm:$0xf]
          %v562 = vld [vmem:[#allocation13 + $0x20] sm:$0xf]
          %v563 = vld [vmem:[#allocation13 + $0x24] sm:$0xf]
          %v564 = vld [vmem:[#allocation13 + $0x28] sm:$0xf]
          %v565 = vld [vmem:[#allocation13 + $0x2c] sm:$0xf]
          %v566 = vld [vmem:[#allocation13 + $0x30] sm:$0xf]
          %v567 = vld [vmem:[#allocation13 + $0x34] sm:$0xf]
          %v568 = vld [vmem:[#allocation13 + $0x38] sm:$0xf]
          %v569 = vld [vmem:[#allocation13 + $0x3c] sm:$0xf]
          %v570 = vld [vmem:[%s6] sm:$0x1]
          %v572 = vlaneseq
          %v573 = vshrl.u32 %v572, 7
          %v574 = vsub.s32 0, %v573
          %v575 = vrot.slane %v570, %v574
          %v593 = vunpack.c.l.b16 %v554
          %v594 = vunpack.c.l.b16 %v555
          %v595 = vunpack.c.l.b16 %v556
          %v596 = vunpack.c.l.b16 %v557
          %v597 = vunpack.c.l.b16 %v558
          %v598 = vunpack.c.l.b16 %v559
          %v599 = vunpack.c.l.b16 %v560
          %v600 = vunpack.c.l.b16 %v561
          %v601 = vunpack.c.l.b16 %v562
          %v602 = vunpack.c.l.b16 %v563
          %v603 = vunpack.c.l.b16 %v564
          %v604 = vunpack.c.l.b16 %v565
          %v605 = vunpack.c.l.b16 %v566
          %v606 = vunpack.c.l.b16 %v567
          %v607 = vunpack.c.l.b16 %v568
          %v608 = vunpack.c.l.b16 %v569
          %v609 = vpack.c.b16 %v594, %v593
          %v610 = vpack.c.b16 %v596, %v595
          %v611 = vpack.c.b16 %v598, %v597
          %v612 = vpack.c.b16 %v600, %v599
          %v613 = vpack.c.b16 %v602, %v601
          %v614 = vpack.c.b16 %v604, %v603
          %v615 = vpack.c.b16 %v606, %v605
          %v616 = vpack.c.b16 %v608, %v607
          %625 = vmatprep.subr.bf16.mxu0 0
          %626 = vmatpush1.bf16.msra.mxu0 %v609
          %627 = vmatprep.subr.bf16.mxu0 0
          %628 = vmatpush1.bf16.msra.mxu0 %v610
          %629 = vmatprep.subr.bf16.mxu0 0
          %630 = vmatpush1.bf16.msra.mxu0 %v611
          %631 = vmatprep.subr.bf16.mxu0 0
          %632 = vmatpush1.bf16.msra.mxu0 %v612
          %633 = vmatprep.subr.bf16.mxu0 0
          %634 = vmatpush1.bf16.msra.mxu0 %v613
          %635 = vmatprep.subr.bf16.mxu0 0
          %636 = vmatpush1.bf16.msra.mxu0 %v614
          %637 = vmatprep.subr.bf16.mxu0 0
          %638 = vmatpush1.bf16.msra.mxu0 %v615
          %639 = vmatprep.subr.bf16.mxu0 0
          %640 = vmatpush1.bf16.msra.mxu0 %v616
          %641 = vmatprep.subr.bf16.mxu0 0
          %642 = vmatpush1.bf16.msra.mxu0 0
          %643 = vmatprep.subr.bf16.mxu0 0
          %644 = vmatpush1.bf16.msra.mxu0 0
          %645 = vmatprep.subr.bf16.mxu0 0
          %646 = vmatpush1.bf16.msra.mxu0 0
          %647 = vmatprep.subr.bf16.mxu0 0
          %648 = vmatpush1.bf16.msra.mxu0 0
          %649 = vmatprep.subr.bf16.mxu0 0
          %650 = vmatpush1.bf16.msra.mxu0 0
          %651 = vmatprep.subr.bf16.mxu0 0
          %652 = vmatpush1.bf16.msra.mxu0 0
          %653 = vmatprep.subr.bf16.mxu0 0
          %654 = vmatpush1.bf16.msra.mxu0 0
          %655 = vmatprep.subr.bf16.mxu0 0
          %656 = vmatpush1.bf16.msra.mxu0 0
          %657 = vmatprep.mubr.bf16.mxu0 0
          %658 = vmatmul.mubr.bf16.gmra.mrb[0].mxu0 %v553
          %v659 = vpop.f32.mrb[0].mxu0
          %v660 = vadd.f32 %v575, %v659
          %v661 = vpop.f32.mrb[0].mxu0
          %v662 = vpop.f32.mrb[0].mxu0
          %v663 = vpop.f32.mrb[0].mxu0
          %664 = vdwg.mxu0
          %v665 = vpack.c.bf16 %v660, %v660
          %666 = vst [vmem:[#allocation2] sm:$0xf] %v665
          %v667 = vld [vmem:[%s483] sm:$0xf]
          %v668 = vld [vmem:[#allocation14] sm:$0xf]
          %v669 = vld [vmem:[#allocation14 + $0x4] sm:$0xf]
          %v670 = vld [vmem:[#allocation14 + $0x8] sm:$0xf]
          %v671 = vld [vmem:[#allocation14 + $0xc] sm:$0xf]
          %v672 = vld [vmem:[#allocation14 + $0x10] sm:$0xf]
          %v673 = vld [vmem:[#allocation14 + $0x14] sm:$0xf]
          %v674 = vld [vmem:[#allocation14 + $0x18] sm:$0xf]
          %v675 = vld [vmem:[#allocation14 + $0x1c] sm:$0xf]
          %v676 = vld [vmem:[#allocation14 + $0x20] sm:$0xf]
          %v677 = vld [vmem:[#allocation14 + $0x24] sm:$0xf]
          %v678 = vld [vmem:[#allocation14 + $0x28] sm:$0xf]
          %v679 = vld [vmem:[#allocation14 + $0x2c] sm:$0xf]
          %v680 = vld [vmem:[#allocation14 + $0x30] sm:$0xf]
          %v681 = vld [vmem:[#allocation14 + $0x34] sm:$0xf]
          %v682 = vld [vmem:[#allocation14 + $0x38] sm:$0xf]
          %v683 = vld [vmem:[#allocation14 + $0x3c] sm:$0xf]
          %v684 = vld [vmem:[%s8] sm:$0x1]
          %v686 = vlaneseq
          %v687 = vshrl.u32 %v686, 7
          %v688 = vsub.s32 0, %v687
          %v689 = vrot.slane %v684, %v688
          %v707 = vunpack.c.l.b16 %v668
          %v708 = vunpack.c.l.b16 %v669
          %v709 = vunpack.c.l.b16 %v670
          %v710 = vunpack.c.l.b16 %v671
          %v711 = vunpack.c.l.b16 %v672
          %v712 = vunpack.c.l.b16 %v673
          %v713 = vunpack.c.l.b16 %v674
          %v714 = vunpack.c.l.b16 %v675
          %v715 = vunpack.c.l.b16 %v676
          %v716 = vunpack.c.l.b16 %v677
          %v717 = vunpack.c.l.b16 %v678
          %v718 = vunpack.c.l.b16 %v679
          %v719 = vunpack.c.l.b16 %v680
          %v720 = vunpack.c.l.b16 %v681
          %v721 = vunpack.c.l.b16 %v682
          %v722 = vunpack.c.l.b16 %v683
          %v723 = vpack.c.b16 %v708, %v707
          %v724 = vpack.c.b16 %v710, %v709
          %v725 = vpack.c.b16 %v712, %v711
          %v726 = vpack.c.b16 %v714, %v713
          %v727 = vpack.c.b16 %v716, %v715
          %v728 = vpack.c.b16 %v718, %v717
          %v729 = vpack.c.b16 %v720, %v719
          %v730 = vpack.c.b16 %v722, %v721
          %739 = vmatprep.subr.bf16.mxu0 0
          %740 = vmatpush1.bf16.msra.mxu0 %v723
          %741 = vmatprep.subr.bf16.mxu0 0
          %742 = vmatpush1.bf16.msra.mxu0 %v724
          %743 = vmatprep.subr.bf16.mxu0 0
          %744 = vmatpush1.bf16.msra.mxu0 %v725
          %745 = vmatprep.subr.bf16.mxu0 0
          %746 = vmatpush1.bf16.msra.mxu0 %v726
          %747 = vmatprep.subr.bf16.mxu0 0
          %748 = vmatpush1.bf16.msra.mxu0 %v727
          %749 = vmatprep.subr.bf16.mxu0 0
          %750 = vmatpush1.bf16.msra.mxu0 %v728
          %751 = vmatprep.subr.bf16.mxu0 0
          %752 = vmatpush1.bf16.msra.mxu0 %v729
          %753 = vmatprep.subr.bf16.mxu0 0
          %754 = vmatpush1.bf16.msra.mxu0 %v730
          %755 = vmatprep.subr.bf16.mxu0 0
          %756 = vmatpush1.bf16.msra.mxu0 0
          %757 = vmatprep.subr.bf16.mxu0 0
          %758 = vmatpush1.bf16.msra.mxu0 0
          %759 = vmatprep.subr.bf16.mxu0 0
          %760 = vmatpush1.bf16.msra.mxu0 0
          %761 = vmatprep.subr.bf16.mxu0 0
          %762 = vmatpush1.bf16.msra.mxu0 0
          %763 = vmatprep.subr.bf16.mxu0 0
          %764 = vmatpush1.bf16.msra.mxu0 0
          %765 = vmatprep.subr.bf16.mxu0 0
          %766 = vmatpush1.bf16.msra.mxu0 0
          %767 = vmatprep.subr.bf16.mxu0 0
          %768 = vmatpush1.bf16.msra.mxu0 0
          %769 = vmatprep.subr.bf16.mxu0 0
          %770 = vmatpush1.bf16.msra.mxu0 0
          %771 = vmatprep.mubr.bf16.mxu0 0
          %772 = vmatmul.mubr.bf16.gmra.mrb[0].mxu0 %v667
          %v773 = vpop.f32.mrb[0].mxu0
          %v774 = vadd.f32 %v689, %v773
          %v775 = vpop.f32.mrb[0].mxu0
          %v776 = vpop.f32.mrb[0].mxu0
          %v777 = vpop.f32.mrb[0].mxu0
          %778 = vdwg.mxu0
          %v779 = vpack.c.bf16 %v774, %v774
          %780 = vst [vmem:[#allocation3] sm:$0xf] %v779
        $region96: #{tpu_custom_call.1} parent=63 // pred_fallthru
          _
        %v781 = vld [vmem:[%s465] sm:$0xf]
        %v782 = vld [vmem:[#allocation11] sm:$0xf]
        %v783 = vld [vmem:[#allocation11 + $0x4] sm:$0xf]
        %v784 = vld [vmem:[#allocation11 + $0x8] sm:$0xf]
        %v785 = vld [vmem:[#allocation11 + $0xc] sm:$0xf]
        %v786 = vld [vmem:[#allocation11 + $0x10] sm:$0xf]
        %v787 = vld [vmem:[#allocation11 + $0x14] sm:$0xf]
        %v788 = vld [vmem:[#allocation11 + $0x18] sm:$0xf]
        %v789 = vld [vmem:[#allocation11 + $0x1c] sm:$0xf]
        %v790 = vld [vmem:[#allocation11 + $0x20] sm:$0xf]
        %v791 = vld [vmem:[#allocation11 + $0x24] sm:$0xf]
        %v792 = vld [vmem:[#allocation11 + $0x28] sm:$0xf]
        %v793 = vld [vmem:[#allocation11 + $0x2c] sm:$0xf]
        %v794 = vld [vmem:[#allocation11 + $0x30] sm:$0xf]
        %v795 = vld [vmem:[#allocation11 + $0x34] sm:$0xf]
        %v796 = vld [vmem:[#allocation11 + $0x38] sm:$0xf]
        %v797 = vld [vmem:[#allocation11 + $0x3c] sm:$0xf]
        %v798 = vld [vmem:[%s4] sm:$0x1]
        %v800 = vlaneseq
        %v801 = vshrl.u32 %v800, 7
        %v802 = vsub.s32 0, %v801
        %v803 = vrot.slane %v798, %v802
        %v821 = vunpack.c.l.b16 %v782
        %v822 = vunpack.c.l.b16 %v783
        %v823 = vunpack.c.l.b16 %v784
        %v824 = vunpack.c.l.b16 %v785
        %v825 = vunpack.c.l.b16 %v786
        %v826 = vunpack.c.l.b16 %v787
        %v827 = vunpack.c.l.b16 %v788
        %v828 = vunpack.c.l.b16 %v789
        %v829 = vunpack.c.l.b16 %v790
        %v830 = vunpack.c.l.b16 %v791
        %v831 = vunpack.c.l.b16 %v792
        %v832 = vunpack.c.l.b16 %v793
        %v833 = vunpack.c.l.b16 %v794
        %v834 = vunpack.c.l.b16 %v795
        %v835 = vunpack.c.l.b16 %v796
        %v836 = vunpack.c.l.b16 %v797
        %v837 = vpack.c.b16 %v822, %v821
        %v838 = vpack.c.b16 %v824, %v823
        %v839 = vpack.c.b16 %v826, %v825
        %v840 = vpack.c.b16 %v828, %v827
        %v841 = vpack.c.b16 %v830, %v829
        %v842 = vpack.c.b16 %v832, %v831
        %v843 = vpack.c.b16 %v834, %v833
        %v844 = vpack.c.b16 %v836, %v835
        %853 = vmatprep.subr.bf16.mxu0 0
        %854 = vmatpush1.bf16.msra.mxu0 %v837
        %855 = vmatprep.subr.bf16.mxu0 0
        %856 = vmatpush1.bf16.msra.mxu0 %v838
        %857 = vmatprep.subr.bf16.mxu0 0
        %858 = vmatpush1.bf16.msra.mxu0 %v839
        %859 = vmatprep.subr.bf16.mxu0 0
        %860 = vmatpush1.bf16.msra.mxu0 %v840
        %861 = vmatprep.subr.bf16.mxu0 0
        %862 = vmatpush1.bf16.msra.mxu0 %v841
        %863 = vmatprep.subr.bf16.mxu0 0
        %864 = vmatpush1.bf16.msra.mxu0 %v842
        %865 = vmatprep.subr.bf16.mxu0 0
        %866 = vmatpush1.bf16.msra.mxu0 %v843
        %867 = vmatprep.subr.bf16.mxu0 0
        %868 = vmatpush1.bf16.msra.mxu0 %v844
        %869 = vmatprep.subr.bf16.mxu0 0
        %870 = vmatpush1.bf16.msra.mxu0 0
        %871 = vmatprep.subr.bf16.mxu0 0
        %872 = vmatpush1.bf16.msra.mxu0 0
        %873 = vmatprep.subr.bf16.mxu0 0
        %874 = vmatpush1.bf16.msra.mxu0 0
        %875 = vmatprep.subr.bf16.mxu0 0
        %876 = vmatpush1.bf16.msra.mxu0 0
        %877 = vmatprep.subr.bf16.mxu0 0
        %878 = vmatpush1.bf16.msra.mxu0 0
        %879 = vmatprep.subr.bf16.mxu0 0
        %880 = vmatpush1.bf16.msra.mxu0 0
        %881 = vmatprep.subr.bf16.mxu0 0
        %882 = vmatpush1.bf16.msra.mxu0 0
        %883 = vmatprep.subr.bf16.mxu0 0
        %884 = vmatpush1.bf16.msra.mxu0 0
        %885 = vmatprep.mubr.bf16.mxu0 0
        %886 = vmatmul.mubr.bf16.gmra.mrb[0].mxu0 %v781
        %v887 = vpop.f32.mrb[0].mxu0
        %v888 = vadd.f32 %v803, %v887
        %v889 = vpop.f32.mrb[0].mxu0
        %v890 = vpop.f32.mrb[0].mxu0
        %v891 = vpop.f32.mrb[0].mxu0
        %892 = vdwg.mxu0
        %v893 = vpack.c.bf16 %v888, %v888
        %v894 = vld [vmem:[#allocation2] sm:$0xf]
        %v895 = vld [vmem:[#allocation3] sm:$0xf]
        %vm896 = vcmask 261120
        %v898 = vsel %vm896, %v893, 0
        %v901 = vsel %vm896, %v894, 0
        %903 = vmatprep.subr.bf16.mxu0 0
        %904 = vmatpush1.bf16.xpose.msra.mxu0 %v901
        %905 = vmatprep.subr.bf16.mxu0 0
        %906 = vmatpush1.bf16.xpose.msra.mxu0 0
        %907 = vmatprep.subr.bf16.mxu0 0
        %908 = vmatpush1.bf16.xpose.msra.mxu0 0
        %909 = vmatprep.subr.bf16.mxu0 0
        %910 = vmatpush1.bf16.xpose.msra.mxu0 0
        %911 = vmatprep.subr.bf16.mxu0 0
        %912 = vmatpush1.bf16.xpose.msra.mxu0 0
        %913 = vmatprep.subr.bf16.mxu0 0
        %914 = vmatpush1.bf16.xpose.msra.mxu0 0
        %915 = vmatprep.subr.bf16.mxu0 0
        %916 = vmatpush1.bf16.xpose.msra.mxu0 0
        %917 = vmatprep.subr.bf16.mxu0 0
        %918 = vmatpush1.bf16.xpose.msra.mxu0 0
        %919 = vmatprep.subr.bf16.mxu0 0
        %920 = vmatpush1.bf16.xpose.msra.mxu0 0
        %921 = vmatprep.subr.bf16.mxu0 0
        %922 = vmatpush1.bf16.xpose.msra.mxu0 0
        %923 = vmatprep.subr.bf16.mxu0 0
        %924 = vmatpush1.bf16.xpose.msra.mxu0 0
        %925 = vmatprep.subr.bf16.mxu0 0
        %926 = vmatpush1.bf16.xpose.msra.mxu0 0
        %927 = vmatprep.subr.bf16.mxu0 0
        %928 = vmatpush1.bf16.xpose.msra.mxu0 0
        %929 = vmatprep.subr.bf16.mxu0 0
        %930 = vmatpush1.bf16.xpose.msra.mxu0 0
        %931 = vmatprep.subr.bf16.mxu0 0
        %932 = vmatpush1.bf16.xpose.msra.mxu0 0
        %933 = vmatprep.subr.bf16.mxu0 0
        %934 = vmatpush1.bf16.xpose.msra.mxu0 0
        %935 = vmatprep.mubr.bf16.mxu0 0
        %936 = vmatmul.mubr.bf16.gmra.mrb[0].mxu0 %v898
        %v937 = vpop.f32.mrb[0].mxu0
        %v938 = vadd.f32 0.0, %v937
        %v939 = vpop.f32.mrb[0].mxu0
        %v940 = vpop.f32.mrb[0].mxu0
        %v941 = vpop.f32.mrb[0].mxu0
        %942 = vdwg.mxu0
        %vm943 = vcmask 64512
        %v944 = vsel %vm943, %v938, -inf
        %945 = vmax.xlane.f32.xlu0 %v944
        %v946 = vpop.xlane.xlu0 %945
        %v947 = vsub.f32 -inf, %v946
        %v948 = vmul.f32 %v947, 1.442695
        %v949 = vpow.pop %v948
        %v950 = vsub.f32 %v938, %v946
        %v951 = vmul.f32 %v950, 1.442695
        %v952 = vpow.pop %v951
        %v953 = vmul.f32 %v949, 0.0
        %v954 = vsel %vm943, %v952, 0.0
        %955 = vadd.xlane.f32.xlu0 %v954
        %v956 = vpop.xlane.xlu0 %955
        %v957 = vadd.f32 %v953, %v956
        %v958 = vpack.c.bf16 %v952, %v952
        %v960 = vsel %vm943, %v958, 0
        %vm962 = vcmask 1043456
        %v964 = vsel %vm962, %v895, 0
        %966 = vmatprep.subr.bf16.mxu0 0
        %967 = vmatpush1.bf16.msra.mxu0 %v964
        %968 = vmatprep.subr.bf16.mxu0 0
        %969 = vmatpush1.bf16.msra.mxu0 0
        %970 = vmatprep.subr.bf16.mxu0 0
        %971 = vmatpush1.bf16.msra.mxu0 0
        %972 = vmatprep.subr.bf16.mxu0 0
        %973 = vmatpush1.bf16.msra.mxu0 0
        %974 = vmatprep.subr.bf16.mxu0 0
        %975 = vmatpush1.bf16.msra.mxu0 0
        %976 = vmatprep.subr.bf16.mxu0 0
        %977 = vmatpush1.bf16.msra.mxu0 0
        %978 = vmatprep.subr.bf16.mxu0 0
        %979 = vmatpush1.bf16.msra.mxu0 0
        %980 = vmatprep.subr.bf16.mxu0 0
        %981 = vmatpush1.bf16.msra.mxu0 0
        %982 = vmatprep.subr.bf16.mxu0 0
        %983 = vmatpush1.bf16.msra.mxu0 0
        %984 = vmatprep.subr.bf16.mxu0 0
        %985 = vmatpush1.bf16.msra.mxu0 0
        %986 = vmatprep.subr.bf16.mxu0 0
        %987 = vmatpush1.bf16.msra.mxu0 0
        %988 = vmatprep.subr.bf16.mxu0 0
        %989 = vmatpush1.bf16.msra.mxu0 0
        %990 = vmatprep.subr.bf16.mxu0 0
        %991 = vmatpush1.bf16.msra.mxu0 0
        %992 = vmatprep.subr.bf16.mxu0 0
        %993 = vmatpush1.bf16.msra.mxu0 0
        %994 = vmatprep.subr.bf16.mxu0 0
        %995 = vmatpush1.bf16.msra.mxu0 0
        %996 = vmatprep.subr.bf16.mxu0 0
        %997 = vmatpush1.bf16.msra.mxu0 0
        %998 = vmatprep.mubr.bf16.mxu0 0
        %999 = vmatmul.mubr.bf16.gmra.mrb[0].mxu0 %v960
        %v1000 = vpop.f32.mrb[0].mxu0
        %v1001 = vadd.f32 0.0, %v1000
        %v1002 = vpop.f32.mrb[0].mxu0
        %v1003 = vpop.f32.mrb[0].mxu0
        %v1004 = vpop.f32.mrb[0].mxu0
        %1005 = vdwg.mxu0
        %v1006 = vadd.f32 %v953, %v1001
        %v1007 = vrcp.pop %v957
        %v1008 = vmul.f32 %v1006, %v1007
        %v1009 = vpack.c.bf16 %v1008, %v1008
        %vm1010 = vcmask 257024
        %1011 = vst.msk [vmem:[#allocation4] sm:$0xf] %vm1010, %v1009
        %v1012 = vld [vmem:[#allocation2] sm:$0xf]
        %v1013 = vld [vmem:[#allocation3] sm:$0xf]
        %1015 = vrot.lane.b32.xlu0 %v893, 96
        %v1016 = vpop.permute.xlu0 %1015
        %v1018 = vunpack.c.l.b16 %v1012
        %v1019 = vpack.c.b16 %v1018, %v1018
        %1020 = vrot.lane.b32.xlu0 %v1019, 96
        %v1021 = vpop.permute.xlu0 %1020
        %v1023 = vsel %vm896, %v1016, 0
        %v1026 = vsel %vm896, %v1021, 0
        %1028 = vmatprep.subr.bf16.mxu0 0
        %1029 = vmatpush1.bf16.xpose.msra.mxu0 %v1026
        %1030 = vmatprep.subr.bf16.mxu0 0
        %1031 = vmatpush1.bf16.xpose.msra.mxu0 0
        %1032 = vmatprep.subr.bf16.mxu0 0
        %1033 = vmatpush1.bf16.xpose.msra.mxu0 0
        %1034 = vmatprep.subr.bf16.mxu0 0
        %1035 = vmatpush1.bf16.xpose.msra.mxu0 0
        %1036 = vmatprep.subr.bf16.mxu0 0
        %1037 = vmatpush1.bf16.xpose.msra.mxu0 0
        %1038 = vmatprep.subr.bf16.mxu0 0
        %1039 = vmatpush1.bf16.xpose.msra.mxu0 0
        %1040 = vmatprep.subr.bf16.mxu0 0
        %1041 = vmatpush1.bf16.xpose.msra.mxu0 0
        %1042 = vmatprep.subr.bf16.mxu0 0
        %1043 = vmatpush1.bf16.xpose.msra.mxu0 0
        %1044 = vmatprep.subr.bf16.mxu0 0
        %1045 = vmatpush1.bf16.xpose.msra.mxu0 0
        %1046 = vmatprep.subr.bf16.mxu0 0
        %1047 = vmatpush1.bf16.xpose.msra.mxu0 0
        %1048 = vmatprep.subr.bf16.mxu0 0
        %1049 = vmatpush1.bf16.xpose.msra.mxu0 0
        %1050 = vmatprep.subr.bf16.mxu0 0
        %1051 = vmatpush1.bf16.xpose.msra.mxu0 0
        %1052 = vmatprep.subr.bf16.mxu0 0
        %1053 = vmatpush1.bf16.xpose.msra.mxu0 0
        %1054 = vmatprep.subr.bf16.mxu0 0
        %1055 = vmatpush1.bf16.xpose.msra.mxu0 0
        %1056 = vmatprep.subr.bf16.mxu0 0
        %1057 = vmatpush1.bf16.xpose.msra.mxu0 0
        %1058 = vmatprep.subr.bf16.mxu0 0
        %1059 = vmatpush1.bf16.xpose.msra.mxu0 0
        %1060 = vmatprep.mubr.bf16.mxu0 0
        %1061 = vmatmul.mubr.bf16.gmra.mrb[0].mxu0 %v1023
        %v1062 = vpop.f32.mrb[0].mxu0
        %v1063 = vadd.f32 0.0, %v1062
        %v1064 = vpop.f32.mrb[0].mxu0
        %v1065 = vpop.f32.mrb[0].mxu0
        %v1066 = vpop.f32.mrb[0].mxu0
        %1067 = vdwg.mxu0
        %v1068 = vsel %vm943, %v1063, -inf
        %1069 = vmax.xlane.f32.xlu0 %v1068
        %v1070 = vpop.xlane.xlu0 %1069
        %v1071 = vsub.f32 -inf, %v1070
        %v1072 = vmul.f32 %v1071, 1.442695
        %v1073 = vpow.pop %v1072
        %v1074 = vsub.f32 %v1063, %v1070
        %v1075 = vmul.f32 %v1074, 1.442695
        %v1076 = vpow.pop %v1075
        %v1077 = vmul.f32 %v1073, 0.0
        %v1078 = vsel %vm943, %v1076, 0.0
        %1079 = vadd.xlane.f32.xlu0 %v1078
        %v1080 = vpop.xlane.xlu0 %1079
        %v1081 = vadd.f32 %v1077, %v1080
        %v1082 = vpack.c.bf16 %v1076, %v1076
        %v1084 = vunpack.c.l.b16 %v1013
        %v1085 = vpack.c.b16 %v1084, %v1084
        %1086 = vrot.lane.b32.xlu0 %v1085, 96
        %v1087 = vpop.permute.xlu0 %1086
        %v1089 = vsel %vm943, %v1082, 0
        %v1092 = vsel %vm962, %v1087, 0
        %1094 = vmatprep.subr.bf16.mxu0 0
        %1095 = vmatpush1.bf16.msra.mxu0 %v1092
        %1096 = vmatprep.subr.bf16.mxu0 0
        %1097 = vmatpush1.bf16.msra.mxu0 0
        %1098 = vmatprep.subr.bf16.mxu0 0
        %1099 = vmatpush1.bf16.msra.mxu0 0
        %1100 = vmatprep.subr.bf16.mxu0 0
        %1101 = vmatpush1.bf16.msra.mxu0 0
        %1102 = vmatprep.subr.bf16.mxu0 0
        %1103 = vmatpush1.bf16.msra.mxu0 0
        %1104 = vmatprep.subr.bf16.mxu0 0
        %1105 = vmatpush1.bf16.msra.mxu0 0
        %1106 = vmatprep.subr.bf16.mxu0 0
        %1107 = vmatpush1.bf16.msra.mxu0 0
        %1108 = vmatprep.subr.bf16.mxu0 0
        %1109 = vmatpush1.bf16.msra.mxu0 0
        %1110 = vmatprep.subr.bf16.mxu0 0
        %1111 = vmatpush1.bf16.msra.mxu0 0
        %1112 = vmatprep.subr.bf16.mxu0 0
        %1113 = vmatpush1.bf16.msra.mxu0 0
        %1114 = vmatprep.subr.bf16.mxu0 0
        %1115 = vmatpush1.bf16.msra.mxu0 0
        %1116 = vmatprep.subr.bf16.mxu0 0
        %1117 = vmatpush1.bf16.msra.mxu0 0
        %1118 = vmatprep.subr.bf16.mxu0 0
        %1119 = vmatpush1.bf16.msra.mxu0 0
        %1120 = vmatprep.subr.bf16.mxu0 0
        %1121 = vmatpush1.bf16.msra.mxu0 0
        %1122 = vmatprep.subr.bf16.mxu0 0
        %1123 = vmatpush1.bf16.msra.mxu0 0
        %1124 = vmatprep.subr.bf16.mxu0 0
        %1125 = vmatpush1.bf16.msra.mxu0 0
        %1126 = vmatprep.mubr.bf16.mxu0 0
        %1127 = vmatmul.mubr.bf16.gmra.mrb[0].mxu0 %v1089
        %v1128 = vpop.f32.mrb[0].mxu0
        %v1129 = vadd.f32 0.0, %v1128
        %v1130 = vpop.f32.mrb[0].mxu0
        %v1131 = vpop.f32.mrb[0].mxu0
        %v1132 = vpop.f32.mrb[0].mxu0
        %1133 = vdwg.mxu0
        %v1134 = vadd.f32 %v1077, %v1129
        %v1135 = vrcp.pop %v1081
        %v1136 = vmul.f32 %v1134, %v1135
        %v1137 = vpack.c.bf16 %v1136, %v1136
        %v1139 = vunpack.c.l.b16 %v1137
        %v1140 = vpack.c.b16 %v1139, %v1139
        %1141 = vrot.lane.b32.xlu0 %v1140, 32
        %v1142 = vpop.permute.xlu0 %1141
        %vm1144 = vcmask 519424
        %1145 = vst.msk [vmem:[#allocation4] sm:$0xf] %vm1144, %v1142
        %v1146 = vld [vmem:[#allocation2] sm:$0xf]
        %v1147 = vld [vmem:[#allocation3] sm:$0xf]
        %1148 = vrot.lane.b32.xlu0 %v893, 64
        %v1149 = vpop.permute.xlu0 %1148
        %v1151 = vunpack.c.l.b16 %v1146
        %v1152 = vpack.c.b16 %v1151, %v1151
        %1153 = vrot.lane.b32.xlu0 %v1152, 64
        %v1154 = vpop.permute.xlu0 %1153
        %v1156 = vsel %vm896, %v1149, 0
        %v1159 = vsel %vm896, %v1154, 0
        %1161 = vmatprep.subr.bf16.mxu0 0
        %1162 = vmatpush1.bf16.xpose.msra.mxu0 %v1159
        %1163 = vmatprep.subr.bf16.mxu0 0
        %1164 = vmatpush1.bf16.xpose.msra.mxu0 0
        %1165 = vmatprep.subr.bf16.mxu0 0
        %1166 = vmatpush1.bf16.xpose.msra.mxu0 0
        %1167 = vmatprep.subr.bf16.mxu0 0
        %1168 = vmatpush1.bf16.xpose.msra.mxu0 0
        %1169 = vmatprep.subr.bf16.mxu0 0
        %1170 = vmatpush1.bf16.xpose.msra.mxu0 0
        %1171 = vmatprep.subr.bf16.mxu0 0
        %1172 = vmatpush1.bf16.xpose.msra.mxu0 0
        %1173 = vmatprep.subr.bf16.mxu0 0
        %1174 = vmatpush1.bf16.xpose.msra.mxu0 0
        %1175 = vmatprep.subr.bf16.mxu0 0
        %1176 = vmatpush1.bf16.xpose.msra.mxu0 0
        %1177 = vmatprep.subr.bf16.mxu0 0
        %1178 = vmatpush1.bf16.xpose.msra.mxu0 0
        %1179 = vmatprep.subr.bf16.mxu0 0
        %1180 = vmatpush1.bf16.xpose.msra.mxu0 0
        %1181 = vmatprep.subr.bf16.mxu0 0
        %1182 = vmatpush1.bf16.xpose.msra.mxu0 0
        %1183 = vmatprep.subr.bf16.mxu0 0
        %1184 = vmatpush1.bf16.xpose.msra.mxu0 0
        %1185 = vmatprep.subr.bf16.mxu0 0
        %1186 = vmatpush1.bf16.xpose.msra.mxu0 0
        %1187 = vmatprep.subr.bf16.mxu0 0
        %1188 = vmatpush1.bf16.xpose.msra.mxu0 0
        %1189 = vmatprep.subr.bf16.mxu0 0
        %1190 = vmatpush1.bf16.xpose.msra.mxu0 0
        %1191 = vmatprep.subr.bf16.mxu0 0
        %1192 = vmatpush1.bf16.xpose.msra.mxu0 0
        %1193 = vmatprep.mubr.bf16.mxu0 0
        %1194 = vmatmul.mubr.bf16.gmra.mrb[0].mxu0 %v1156
        %v1195 = vpop.f32.mrb[0].mxu0
        %v1196 = vadd.f32 0.0, %v1195
        %v1197 = vpop.f32.mrb[0].mxu0
        %v1198 = vpop.f32.mrb[0].mxu0
        %v1199 = vpop.f32.mrb[0].mxu0
        %1200 = vdwg.mxu0
        %v1201 = vsel %vm943, %v1196, -inf
        %1202 = vmax.xlane.f32.xlu0 %v1201
        %v1203 = vpop.xlane.xlu0 %1202
        %v1204 = vsub.f32 -inf, %v1203
        %v1205 = vmul.f32 %v1204, 1.442695
        %v1206 = vpow.pop %v1205
        %v1207 = vsub.f32 %v1196, %v1203
        %v1208 = vmul.f32 %v1207, 1.442695
        %v1209 = vpow.pop %v1208
        %v1210 = vmul.f32 %v1206, 0.0
        %v1211 = vsel %vm943, %v1209, 0.0
        %1212 = vadd.xlane.f32.xlu0 %v1211
        %v1213 = vpop.xlane.xlu0 %1212
        %v1214 = vadd.f32 %v1210, %v1213
        %v1215 = vpack.c.bf16 %v1209, %v1209
        %v1217 = vunpack.c.l.b16 %v1147
        %v1218 = vpack.c.b16 %v1217, %v1217
        %1219 = vrot.lane.b32.xlu0 %v1218, 64
        %v1220 = vpop.permute.xlu0 %1219
        %v1222 = vsel %vm943, %v1215, 0
        %v1225 = vsel %vm962, %v1220, 0
        %1227 = vmatprep.subr.bf16.mxu0 0
        %1228 = vmatpush1.bf16.msra.mxu0 %v1225
        %1229 = vmatprep.subr.bf16.mxu0 0
        %1230 = vmatpush1.bf16.msra.mxu0 0
        %1231 = vmatprep.subr.bf16.mxu0 0
        %1232 = vmatpush1.bf16.msra.mxu0 0
        %1233 = vmatprep.subr.bf16.mxu0 0
        %1234 = vmatpush1.bf16.msra.mxu0 0
        %1235 = vmatprep.subr.bf16.mxu0 0
        %1236 = vmatpush1.bf16.msra.mxu0 0
        %1237 = vmatprep.subr.bf16.mxu0 0
        %1238 = vmatpush1.bf16.msra.mxu0 0
        %1239 = vmatprep.subr.bf16.mxu0 0
        %1240 = vmatpush1.bf16.msra.mxu0 0
        %1241 = vmatprep.subr.bf16.mxu0 0
        %1242 = vmatpush1.bf16.msra.mxu0 0
        %1243 = vmatprep.subr.bf16.mxu0 0
        %1244 = vmatpush1.bf16.msra.mxu0 0
        %1245 = vmatprep.subr.bf16.mxu0 0
        %1246 = vmatpush1.bf16.msra.mxu0 0
        %1247 = vmatprep.subr.bf16.mxu0 0
        %1248 = vmatpush1.bf16.msra.mxu0 0
        %1249 = vmatprep.subr.bf16.mxu0 0
        %1250 = vmatpush1.bf16.msra.mxu0 0
        %1251 = vmatprep.subr.bf16.mxu0 0
        %1252 = vmatpush1.bf16.msra.mxu0 0
        %1253 = vmatprep.subr.bf16.mxu0 0
        %1254 = vmatpush1.bf16.msra.mxu0 0
        %1255 = vmatprep.subr.bf16.mxu0 0
        %1256 = vmatpush1.bf16.msra.mxu0 0
        %1257 = vmatprep.subr.bf16.mxu0 0
        %1258 = vmatpush1.bf16.msra.mxu0 0
        %1259 = vmatprep.mubr.bf16.mxu0 0
        %1260 = vmatmul.mubr.bf16.gmra.mrb[0].mxu0 %v1222
        %v1261 = vpop.f32.mrb[0].mxu0
        %v1262 = vadd.f32 0.0, %v1261
        %v1263 = vpop.f32.mrb[0].mxu0
        %v1264 = vpop.f32.mrb[0].mxu0
        %v1265 = vpop.f32.mrb[0].mxu0
        %1266 = vdwg.mxu0
        %v1267 = vadd.f32 %v1210, %v1262
        %v1268 = vrcp.pop %v1214
        %v1269 = vmul.f32 %v1267, %v1268
        %v1270 = vpack.c.bf16 %v1269, %v1269
        %v1272 = vunpack.c.l.b16 %v1270
        %v1273 = vpack.c.b16 %v1272, %v1272
        %1274 = vrot.lane.b32.xlu0 %v1273, 64
        %v1275 = vpop.permute.xlu0 %1274
        %vm1277 = vcmask 781824
        %1278 = vst.msk [vmem:[#allocation4] sm:$0xf] %vm1277, %v1275
        %v1279 = vld [vmem:[#allocation2] sm:$0xf]
        %v1280 = vld [vmem:[#allocation3] sm:$0xf]
        %1281 = vrot.lane.b32.xlu0 %v893, 32
        %v1282 = vpop.permute.xlu0 %1281
        %v1284 = vunpack.c.l.b16 %v1279
        %v1285 = vpack.c.b16 %v1284, %v1284
        %1286 = vrot.lane.b32.xlu0 %v1285, 32
        %v1287 = vpop.permute.xlu0 %1286
        %v1289 = vsel %vm896, %v1282, 0
        %v1292 = vsel %vm896, %v1287, 0
        %1294 = vmatprep.subr.bf16.mxu0 0
        %1295 = vmatpush1.bf16.xpose.msra.mxu0 %v1292
        %1296 = vmatprep.subr.bf16.mxu0 0
        %1297 = vmatpush1.bf16.xpose.msra.mxu0 0
        %1298 = vmatprep.subr.bf16.mxu0 0
        %1299 = vmatpush1.bf16.xpose.msra.mxu0 0
        %1300 = vmatprep.subr.bf16.mxu0 0
        %1301 = vmatpush1.bf16.xpose.msra.mxu0 0
        %1302 = vmatprep.subr.bf16.mxu0 0
        %1303 = vmatpush1.bf16.xpose.msra.mxu0 0
        %1304 = vmatprep.subr.bf16.mxu0 0
        %1305 = vmatpush1.bf16.xpose.msra.mxu0 0
        %1306 = vmatprep.subr.bf16.mxu0 0
        %1307 = vmatpush1.bf16.xpose.msra.mxu0 0
        %1308 = vmatprep.subr.bf16.mxu0 0
        %1309 = vmatpush1.bf16.xpose.msra.mxu0 0
        %1310 = vmatprep.subr.bf16.mxu0 0
        %1311 = vmatpush1.bf16.xpose.msra.mxu0 0
        %1312 = vmatprep.subr.bf16.mxu0 0
        %1313 = vmatpush1.bf16.xpose.msra.mxu0 0
        %1314 = vmatprep.subr.bf16.mxu0 0
        %1315 = vmatpush1.bf16.xpose.msra.mxu0 0
        %1316 = vmatprep.subr.bf16.mxu0 0
        %1317 = vmatpush1.bf16.xpose.msra.mxu0 0
        %1318 = vmatprep.subr.bf16.mxu0 0
        %1319 = vmatpush1.bf16.xpose.msra.mxu0 0
        %1320 = vmatprep.subr.bf16.mxu0 0
        %1321 = vmatpush1.bf16.xpose.msra.mxu0 0
        %1322 = vmatprep.subr.bf16.mxu0 0
        %1323 = vmatpush1.bf16.xpose.msra.mxu0 0
        %1324 = vmatprep.subr.bf16.mxu0 0
        %1325 = vmatpush1.bf16.xpose.msra.mxu0 0
        %1326 = vmatprep.mubr.bf16.mxu0 0
        %1327 = vmatmul.mubr.bf16.gmra.mrb[0].mxu0 %v1289
        %v1328 = vpop.f32.mrb[0].mxu0
        %v1329 = vadd.f32 0.0, %v1328
        %v1330 = vpop.f32.mrb[0].mxu0
        %v1331 = vpop.f32.mrb[0].mxu0
        %v1332 = vpop.f32.mrb[0].mxu0
        %1333 = vdwg.mxu0
        %v1334 = vsel %vm943, %v1329, -inf
        %1335 = vmax.xlane.f32.xlu0 %v1334
        %v1336 = vpop.xlane.xlu0 %1335
        %v1337 = vsub.f32 -inf, %v1336
        %v1338 = vmul.f32 %v1337, 1.442695
        %v1339 = vpow.pop %v1338
        %v1340 = vsub.f32 %v1329, %v1336
        %v1341 = vmul.f32 %v1340, 1.442695
        %v1342 = vpow.pop %v1341
        %v1343 = vmul.f32 %v1339, 0.0
        %v1344 = vsel %vm943, %v1342, 0.0
        %1345 = vadd.xlane.f32.xlu0 %v1344
        %v1346 = vpop.xlane.xlu0 %1345
        %v1347 = vadd.f32 %v1343, %v1346
        %v1348 = vpack.c.bf16 %v1342, %v1342
        %v1350 = vunpack.c.l.b16 %v1280
        %v1351 = vpack.c.b16 %v1350, %v1350
        %1352 = vrot.lane.b32.xlu0 %v1351, 32
        %v1353 = vpop.permute.xlu0 %1352
        %v1355 = vsel %vm943, %v1348, 0
        %v1358 = vsel %vm962, %v1353, 0
        %1360 = vmatprep.subr.bf16.mxu0 0
        %1361 = vmatpush1.bf16.msra.mxu0 %v1358
        %1362 = vmatprep.subr.bf16.mxu0 0
        %1363 = vmatpush1.bf16.msra.mxu0 0
        %1364 = vmatprep.subr.bf16.mxu0 0
        %1365 = vmatpush1.bf16.msra.mxu0 0
        %1366 = vmatprep.subr.bf16.mxu0 0
        %1367 = vmatpush1.bf16.msra.mxu0 0
        %1368 = vmatprep.subr.bf16.mxu0 0
        %1369 = vmatpush1.bf16.msra.mxu0 0
        %1370 = vmatprep.subr.bf16.mxu0 0
        %1371 = vmatpush1.bf16.msra.mxu0 0
        %1372 = vmatprep.subr.bf16.mxu0 0
        %1373 = vmatpush1.bf16.msra.mxu0 0
        %1374 = vmatprep.subr.bf16.mxu0 0
        %1375 = vmatpush1.bf16.msra.mxu0 0
        %1376 = vmatprep.subr.bf16.mxu0 0
        %1377 = vmatpush1.bf16.msra.mxu0 0
        %1378 = vmatprep.subr.bf16.mxu0 0
        %1379 = vmatpush1.bf16.msra.mxu0 0
        %1380 = vmatprep.subr.bf16.mxu0 0
        %1381 = vmatpush1.bf16.msra.mxu0 0
        %1382 = vmatprep.subr.bf16.mxu0 0
        %1383 = vmatpush1.bf16.msra.mxu0 0
        %1384 = vmatprep.subr.bf16.mxu0 0
        %1385 = vmatpush1.bf16.msra.mxu0 0
        %1386 = vmatprep.subr.bf16.mxu0 0
        %1387 = vmatpush1.bf16.msra.mxu0 0
        %1388 = vmatprep.subr.bf16.mxu0 0
        %1389 = vmatpush1.bf16.msra.mxu0 0
        %1390 = vmatprep.subr.bf16.mxu0 0
        %1391 = vmatpush1.bf16.msra.mxu0 0
        %1392 = vmatprep.mubr.bf16.mxu0 0
        %1393 = vmatmul.mubr.bf16.gmra.mrb[0].mxu0 %v1355
        %v1394 = vpop.f32.mrb[0].mxu0
        %v1395 = vadd.f32 0.0, %v1394
        %v1396 = vpop.f32.mrb[0].mxu0
        %v1397 = vpop.f32.mrb[0].mxu0
        %v1398 = vpop.f32.mrb[0].mxu0
        %1399 = vdwg.mxu0
        %v1400 = vadd.f32 %v1343, %v1395
        %v1401 = vrcp.pop %v1347
        %v1402 = vmul.f32 %v1400, %v1401
        %v1403 = vpack.c.bf16 %v1402, %v1402
        %v1405 = vunpack.c.l.b16 %v1403
        %v1406 = vpack.c.b16 %v1405, %v1405
        %1407 = vrot.lane.b32.xlu0 %v1406, 96
        %v1408 = vpop.permute.xlu0 %1407
        %vm1410 = vcmask 1044224
        %1411 = vst.msk [vmem:[#allocation4] sm:$0xf] %vm1410, %v1408
        %v1412 = vld [vmem:[#allocation4] sm:$0xf]
        %v1413 = vld [vmem:[#allocation16] sm:$0xf]
        %v1414 = vld [vmem:[#allocation16 + $0x4] sm:$0xf]
        %v1415 = vld [vmem:[#allocation16 + $0x8] sm:$0xf]
        %v1416 = vld [vmem:[#allocation16 + $0xc] sm:$0xf]
        %v1417 = vld [vmem:[#allocation16 + $0x10] sm:$0xf]
        %v1418 = vld [vmem:[#allocation16 + $0x14] sm:$0xf]
        %v1419 = vld [vmem:[#allocation16 + $0x18] sm:$0xf]
        %v1420 = vld [vmem:[#allocation16 + $0x1c] sm:$0xf]
        %v1421 = vld [vmem:[#allocation16 + $0x20] sm:$0xf]
        %v1422 = vld [vmem:[#allocation16 + $0x24] sm:$0xf]
        %v1423 = vld [vmem:[#allocation16 + $0x28] sm:$0xf]
        %v1424 = vld [vmem:[#allocation16 + $0x2c] sm:$0xf]
        %v1425 = vld [vmem:[#allocation16 + $0x30] sm:$0xf]
        %v1426 = vld [vmem:[#allocation16 + $0x34] sm:$0xf]
        %v1427 = vld [vmem:[#allocation16 + $0x38] sm:$0xf]
        %v1428 = vld [vmem:[#allocation16 + $0x3c] sm:$0xf]
        %v1429 = vld [vmem:[%s10] sm:$0x1]
        %v1431 = vlaneseq
        %v1432 = vshrl.u32 %v1431, 7
        %v1433 = vsub.s32 0, %v1432
        %v1434 = vrot.slane %v1429, %v1433
        %v1452 = vunpack.c.l.b16 %v1413
        %v1453 = vunpack.c.l.b16 %v1414
        %v1454 = vunpack.c.l.b16 %v1415
        %v1455 = vunpack.c.l.b16 %v1416
        %v1456 = vunpack.c.l.b16 %v1417
        %v1457 = vunpack.c.l.b16 %v1418
        %v1458 = vunpack.c.l.b16 %v1419
        %v1459 = vunpack.c.l.b16 %v1420
        %v1460 = vunpack.c.l.b16 %v1421
        %v1461 = vunpack.c.l.b16 %v1422
        %v1462 = vunpack.c.l.b16 %v1423
        %v1463 = vunpack.c.l.b16 %v1424
        %v1464 = vunpack.c.l.b16 %v1425
        %v1465 = vunpack.c.l.b16 %v1426
        %v1466 = vunpack.c.l.b16 %v1427
        %v1467 = vunpack.c.l.b16 %v1428
        %v1468 = vpack.c.b16 %v1453, %v1452
        %v1469 = vpack.c.b16 %v1455, %v1454
        %v1470 = vpack.c.b16 %v1457, %v1456
        %v1471 = vpack.c.b16 %v1459, %v1458
        %v1472 = vpack.c.b16 %v1461, %v1460
        %v1473 = vpack.c.b16 %v1463, %v1462
        %v1474 = vpack.c.b16 %v1465, %v1464
        %v1475 = vpack.c.b16 %v1467, %v1466
        %1484 = vmatprep.subr.bf16.mxu0 0
        %1485 = vmatpush1.bf16.msra.mxu0 %v1468
        %1486 = vmatprep.subr.bf16.mxu0 0
        %1487 = vmatpush1.bf16.msra.mxu0 %v1469
        %1488 = vmatprep.subr.bf16.mxu0 0
        %1489 = vmatpush1.bf16.msra.mxu0 %v1470
        %1490 = vmatprep.subr.bf16.mxu0 0
        %1491 = vmatpush1.bf16.msra.mxu0 %v1471
        %1492 = vmatprep.subr.bf16.mxu0 0
        %1493 = vmatpush1.bf16.msra.mxu0 %v1472
        %1494 = vmatprep.subr.bf16.mxu0 0
        %1495 = vmatpush1.bf16.msra.mxu0 %v1473
        %1496 = vmatprep.subr.bf16.mxu0 0
        %1497 = vmatpush1.bf16.msra.mxu0 %v1474
        %1498 = vmatprep.subr.bf16.mxu0 0
        %1499 = vmatpush1.bf16.msra.mxu0 %v1475
        %1500 = vmatprep.subr.bf16.mxu0 0
        %1501 = vmatpush1.bf16.msra.mxu0 0
        %1502 = vmatprep.subr.bf16.mxu0 0
        %1503 = vmatpush1.bf16.msra.mxu0 0
        %1504 = vmatprep.subr.bf16.mxu0 0
        %1505 = vmatpush1.bf16.msra.mxu0 0
        %1506 = vmatprep.subr.bf16.mxu0 0
        %1507 = vmatpush1.bf16.msra.mxu0 0
        %1508 = vmatprep.subr.bf16.mxu0 0
        %1509 = vmatpush1.bf16.msra.mxu0 0
        %1510 = vmatprep.subr.bf16.mxu0 0
        %1511 = vmatpush1.bf16.msra.mxu0 0
        %1512 = vmatprep.subr.bf16.mxu0 0
        %1513 = vmatpush1.bf16.msra.mxu0 0
        %1514 = vmatprep.subr.bf16.mxu0 0
        %1515 = vmatpush1.bf16.msra.mxu0 0
        %1516 = vmatprep.mubr.bf16.mxu0 0
        %1517 = vmatmul.mubr.bf16.gmra.mrb[0].mxu0 %v1412
        %v1518 = vpop.f32.mrb[0].mxu0
        %v1519 = vadd.f32 %v1434, %v1518
        %v1520 = vpop.f32.mrb[0].mxu0
        %v1521 = vpop.f32.mrb[0].mxu0
        %v1522 = vpop.f32.mrb[0].mxu0
        %1523 = vdwg.mxu0
        %1524 = vst [vmem:[%s547] sm:$0xff] %v1519
        %s1525 = sand.u32 %s303, 1
        %s1526 = scalar_lea.sflag [#allocation7], %s1525
        %s1527 = sand.u32 %s303, 1
        %s1528 = smul.addr %s1527, 8
        %s1529 = scalar_lea.vmem [#allocation17], %s1528
        // Predicated region
        $region97: #{tpu_custom_call.1} parent=63 // pred_check
          %p1530 = pneg %p313
        $region98: #{tpu_custom_call.1} parent=63 // pred_check_branch
          %1532 = sbr.rel (%p1530) target = $region100
        $region99: #{tpu_custom_call.1} parent=63 // pred_region
          %s1534 = ssub.s32 128, 128
          %1535 = vsyncadd %s1526, %s1534
          %s1536 = sadd.s32 %s38, %s37
          %s1537 = smul.addr %s1536, 128
          %s1538 = scalar_lea.hbm %s11, %s1537
          %s1540 = sshll.u32 %s1529, 4
          %s1541 = int_to_ptr.vmem [resolvable:$true] %s1540
          %1543 = dma.vmem_to_hbm [thread:$0]  %s1541, 128, %s1538, %s1526
        $region100: #{tpu_custom_call.1} parent=63 // pred_fallthru
          _
      $region64: #{tpu_custom_call.1} parent=5 // pred_fallthru
        _
      %p1544 = scmp.le.s32.totalorder 2, %s28
      // Predicated region
      $region101: #{tpu_custom_call.1} parent=5 // pred_check
        %p1545 = pneg %p1544
      $region102: #{tpu_custom_call.1} parent=5 // pred_check_branch
        %1547 = sbr.rel (%p1545) target = $region104
      $region103: #{tpu_custom_call.1} parent=5 // pred_region
        %s1548 = ssub.s32 %s28, 2
        // Predicated region
        $region105: #{tpu_custom_call.1} parent=103 // pred_check
          %p1549 = pneg %p319
        $region106: #{tpu_custom_call.1} parent=103 // pred_check_branch
          %1551 = sbr.rel (%p1549) target = $region108
        $region107: #{tpu_custom_call.1} parent=103 // pred_region
          %s1552 = sand.u32 %s304, 1
          %s1553 = scalar_lea.sflag [#allocation7], %s1552
          %s1554 = sand.u32 %s304, 1
          %s1555 = smul.addr %s1554, 8
          %s1556 = scalar_lea.vmem [#allocation17], %s1555
          %1557 = dma.done %s1553, 128
        $region108: #{tpu_custom_call.1} parent=103 // pred_fallthru
          _
      $region104: #{tpu_custom_call.1} parent=5 // pred_fallthru
        _
    $region6: #{tpu_custom_call.1} parent=1 // loop_footer
      %s32 = sadd.s32 1, %s28
    $region7: #{tpu_custom_call.1} parent=1 // loop_footer_branch
      %27 = sbr.rel target = $region3
    $region8: #{tpu_custom_call.1} parent=1 // loop_exit
      _
    %1558 = vsyncpa [#allocation6], 1
    %s1559 = scalar_lea.sflag [#allocation6], 1
    %1560 = vsyncpa %s1559, 1
    %1561 = vsyncpa [#allocation9], 1
    %s1562 = scalar_lea.sflag [#allocation9], 1
    %1563 = vsyncpa %s1562, 1
    %1564 = vsyncpa [#allocation12], 1
    %1565 = vsyncpa [#allocation15], 1
    %1566 = vsyncpa [#allocation7], 1
    %s1567 = scalar_lea.sflag [#allocation7], 1
    %1568 = vsyncpa %s1567, 1

// kernel: tpu_custom_call.1
$region0: #{tpu_custom_call.1}
  #allocation0 [shape = 'u32[]', space=smem, size = 0x4, offset = 0x4, fixed_abs, tag = 'smem constant byte address 0x4 - core index']
  #allocation1 [shape = 'u32[144,128]{1,0:T(1,128)}', space=vmem, size = 0x12000, scoped, tag = 'internal scratch']
  #allocation2 [shape = 'bf16[8,128]{1,0:T(8,128)(2,1)}', space=vmem, size = 0x800, scoped, tag = 'scratch operand']
  #allocation3 [shape = 'bf16[8,128]{1,0:T(8,128)(2,1)}', space=vmem, size = 0x800, scoped, tag = 'scratch operand']
  #allocation4 [shape = 'bf16[8,128]{1,0:T(8,128)(2,1)}', space=vmem, size = 0x800, scoped, tag = 'scratch operand']
  %s0 = inlined_call_operand.hbm [shape: bf16[2,8,128], index: 0, kind: input, shape index: {}]
  %s1 = inlined_call_operand.hbm [shape: bf16[2,8,128], index: 1, kind: input, shape index: {}]
  %s2 = inlined_call_operand.hbm [shape: bf16[2,8,128], index: 2, kind: input, shape index: {}]
  %s3 = inlined_call_operand.hbm [shape: bf16[128,128], index: 3, kind: input, shape index: {}]
  %s4 = inlined_call_operand.vmem [shape: f32[1,128], index: 4, kind: input, shape index: {}]
  %s5 = inlined_call_operand.hbm [shape: bf16[128,128], index: 5, kind: input, shape index: {}]
  %s6 = inlined_call_operand.vmem [shape: f32[1,128], index: 6, kind: input, shape index: {}]
  %s7 = inlined_call_operand.hbm [shape: bf16[128,128], index: 7, kind: input, shape index: {}]
  %s8 = inlined_call_operand.vmem [shape: f32[1,128], index: 8, kind: input, shape index: {}]
  %s9 = inlined_call_operand.hbm [shape: bf16[128,128], index: 9, kind: input, shape index: {}]
  %s10 = inlined_call_operand.vmem [shape: f32[1,128], index: 10, kind: input, shape index: {}]
  %s11 = inlined_call_operand.hbm [shape: f32[2,8,128], index: 11, kind: output, shape index: {}]
  %s12 = sld [smem:[#allocation0]]
  $region109: #{tpu_custom_call.1} parent=0
    _
  %s14 = ssub.s32 1, %s12
  %s15 = scalar_select 0, %s14, %s12
  $region1: #{tpu_custom_call.1} parent=0
    #allocation5 [shape = 'u8[4096]{0}', space=vmem, size = 0x1000, scoped, tag = 'input window, operand 0']
    #allocation6 [shape = 's32[2]{0}', space=sflag, size = 0x8, scoped, tag = 'scoped memory for tpu_custom_call.1']
    #allocation7 [shape = 's32[2]{0}', space=sflag, size = 0x8, scoped, tag = 'scoped memory for tpu_custom_call.1']
    #allocation8 [shape = 'u8[4096]{0}', space=vmem, size = 0x1000, scoped, tag = 'input window, operand 1']
    #allocation9 [shape = 's32[2]{0}', space=sflag, size = 0x8, scoped, tag = 'scoped memory for tpu_custom_call.1']
    #allocation10 [shape = 'u8[4096]{0}', space=vmem, size = 0x1000, scoped, tag = 'input window, operand 2']
    #allocation11 [shape = 'u8[32768]{0}', space=vmem, size = 0x8000, scoped, tag = 'input window, operand 3, single buffered']
    #allocation12 [shape = 's32[1]{0}', space=sflag, size = 0x4, scoped, tag = 'scoped memory for tpu_custom_call.1']
    #allocation13 [shape = 'u8[32768]{0}', space=vmem, size = 0x8000, scoped, tag = 'input window, operand 5, single buffered']
    #allocation14 [shape = 'u8[32768]{0}', space=vmem, size = 0x8000, scoped, tag = 'input window, operand 7, single buffered']
    #allocation15 [shape = 's32[1]{0}', space=sflag, size = 0x4, scoped, tag = 'scoped memory for tpu_custom_call.1']
    #allocation16 [shape = 'u8[32768]{0}', space=vmem, size = 0x8000, scoped, tag = 'input window, operand 9, single buffered']
    #allocation17 [shape = 'u8[8192]{0}', space=vmem, size = 0x2000, scoped, tag = 'output window, operand 0']
    %16 = vsyncpa [#allocation6], 0
    %s17 = scalar_lea.sflag [#allocation6], 1
    %18 = vsyncpa %s17, 0
    %19 = vsyncpa [#allocation9], 0
    %s20 = scalar_lea.sflag [#allocation9], 1
    %21 = vsyncpa %s20, 0
    %22 = vsyncpa [#allocation12], 0
    %23 = vsyncpa [#allocation15], 0
    %24 = vsyncpa [#allocation7], 0
    %s25 = scalar_lea.sflag [#allocation7], 1
    %26 = vsyncpa %s25, 0
    loop: start=0, step=1, limit=4
    $region2: #{tpu_custom_call.1} parent=1 // loop_pre_header
      _
    $region3: #{tpu_custom_call.1} parent=1 // loop_header
      %s28 = sphi 0, %s32
      %p29 = scmp.ge.s32.totalorder %s28, 4
      %s35 = sphi 0, %s47
      %s36 = sphi 0, %s43
      %s37 = sphi 0, %s35
      %s38 = sphi 0, %s36
      %s39 = sphi 0, %s37
      %s40 = sphi 0, %s38
      %s52 = sphi 0, %s54
      %s55 = sphi 0, %s52
      %s56 = sphi 0, %s55
      %s72 = sphi 0, %s56
      %s78 = sphi 0, %s80
      %s81 = sphi 0, %s78
      %s82 = sphi 0, %s81
      %s98 = sphi 0, %s82
      %s104 = sphi 0, %s106
      %s107 = sphi 0, %s104
      %s108 = sphi 0, %s107
      %s124 = sphi 0, %s108
      %s128 = sphi 0, %s128
      %s130 = sphi 0, %s128
      %s131 = sphi 0, %s130
      %s145 = sphi 0, %s131
      %s149 = sphi 0, %s149
      %s151 = sphi 0, %s149
      %s152 = sphi 0, %s151
      %s166 = sphi 0, %s152
      %s170 = sphi 0, %s170
      %s172 = sphi 0, %s170
      %s173 = sphi 0, %s172
      %s187 = sphi 0, %s173
      %s191 = sphi 0, %s191
      %s193 = sphi 0, %s191
      %s194 = sphi 0, %s193
      %s208 = sphi 0, %s194
      %s212 = sphi 0, %s212
      %s214 = sphi 0, %s212
      %s215 = sphi 0, %s214
      %s229 = sphi 0, %s215
      %s233 = sphi 0, %s233
      %s235 = sphi 0, %s233
      %s236 = sphi 0, %s235
      %s250 = sphi 0, %s236
      %s254 = sphi 0, %s254
      %s256 = sphi 0, %s254
      %s257 = sphi 0, %s256
      %s271 = sphi 0, %s257
      %s275 = sphi 0, %s275
      %s277 = sphi 0, %s275
      %s278 = sphi 0, %s277
      %s292 = sphi 0, %s278
      %s300 = sphi 0, %s302
      %s303 = sphi 0, %s300
      %s304 = sphi 0, %s303
      %s320 = sphi 0, %s304
    $region4: #{tpu_custom_call.1} parent=1 // loop_header_branch
      %31 = sbr.rel (%p29) target = $region8
    $region5: #{tpu_custom_call.1} parent=1 // loop_body
      %s33 = ssub.s32 %s28, 1
      %s34 = ssub.s32 %s28, 2
      %s41 = sadd.s32 1, %s36
      %p42 = scmp.ge.s32.totalorder %s41, 1
      %s43 = scalar_select %p42, 0, %s41
      %s44 = sadd.s32 1, %s35
      %s45 = scalar_select %p42, %s44, %s35
      %p46 = scmp.ge.s32.totalorder %s45, 2
      %s47 = scalar_select %p46, 0, %s45
      %s48 = ssub.s32 %s35, %s47
      %s49 = ssub.s32 %s36, %s43
      %s50 = sor.u32 %s48, %s49
      %p51 = scmp.eq.s32.totalorder %s50, 0
      %s53 = sadd.s32 %s52, 1
      %s54 = scalar_select %p51, %s52, %s53
      %p57 = pneg %p51
      %p58 = scmp.eq.s32.totalorder %s28, 1
      %p59 = por %p57, %p58
      %p60 = scmp.ne.s32.totalorder %s52, %s55
      %p61 = scmp.eq.s32.totalorder %s28, 0
      %p62 = por %p60, %p61
      %p63 = scmp.ne.s32.totalorder %s52, %s55
      %p64 = scmp.eq.s32.totalorder %s33, 1
      %p65 = por %p63, %p64
      %p66 = scmp.ne.s32.totalorder %s55, %s56
      %p67 = scmp.eq.s32.totalorder %s33, 0
      %p68 = por %p66, %p67
      %p69 = scmp.ne.s32.totalorder %s55, %s56
      %p70 = scmp.eq.s32.totalorder %s34, 1
      %p71 = por %p69, %p70
      %p73 = scmp.ne.s32.totalorder %s56, %s72
      %p74 = scmp.eq.s32.totalorder %s34, 0
      %p75 = por %p73, %p74
      %s76 = ssub.s32 %s35, %s47
      %p77 = scmp.eq.s32.totalorder %s76, 0
      %s79 = sadd.s32 %s78, 1
      %s80 = scalar_select %p77, %s78, %s79
      %p83 = pneg %p77
      %p84 = scmp.eq.s32.totalorder %s28, 1
      %p85 = por %p83, %p84
      %p86 = scmp.ne.s32.totalorder %s78, %s81
      %p87 = scmp.eq.s32.totalorder %s28, 0
      %p88 = por %p86, %p87
      %p89 = scmp.ne.s32.totalorder %s78, %s81
      %p90 = scmp.eq.s32.totalorder %s33, 1
      %p91 = por %p89, %p90
      %p92 = scmp.ne.s32.totalorder %s81, %s82
      %p93 = scmp.eq.s32.totalorder %s33, 0
      %p94 = por %p92, %p93
      %p95 = scmp.ne.s32.totalorder %s81, %s82
      %p96 = scmp.eq.s32.totalorder %s34, 1
      %p97 = por %p95, %p96
      %p99 = scmp.ne.s32.totalorder %s82, %s98
      %p100 = scmp.eq.s32.totalorder %s34, 0
      %p101 = por %p99, %p100
      %s102 = ssub.s32 %s35, %s47
      %p103 = scmp.eq.s32.totalorder %s102, 0
      %s105 = sadd.s32 %s104, 1
      %s106 = scalar_select %p103, %s104, %s105
      %p109 = pneg %p103
      %p110 = scmp.eq.s32.totalorder %s28, 1
      %p111 = por %p109, %p110
      %p112 = scmp.ne.s32.totalorder %s104, %s107
      %p113 = scmp.eq.s32.totalorder %s28, 0
      %p114 = por %p112, %p113
      %p115 = scmp.ne.s32.totalorder %s104, %s107
      %p116 = scmp.eq.s32.totalorder %s33, 1
      %p117 = por %p115, %p116
      %p118 = scmp.ne.s32.totalorder %s107, %s108
      %p119 = scmp.eq.s32.totalorder %s33, 0
      %p120 = por %p118, %p119
      %p121 = scmp.ne.s32.totalorder %s107, %s108
      %p122 = scmp.eq.s32.totalorder %s34, 1
      %p123 = por %p121, %p122
      %p125 = scmp.ne.s32.totalorder %s108, %s124
      %p126 = scmp.eq.s32.totalorder %s34, 0
      %p127 = por %p125, %p126
      %s129 = sadd.s32 %s128, 1
      %p132 = scmp.eq.s32.totalorder %s28, 1
      %p133 = scmp.ne.s32.totalorder %s128, %s130
      %p134 = scmp.eq.s32.totalorder %s28, 0
      %p135 = por %p133, %p134
      %p136 = scmp.ne.s32.totalorder %s128, %s130
      %p137 = scmp.eq.s32.totalorder %s33, 1
      %p138 = por %p136, %p137
      %p139 = scmp.ne.s32.totalorder %s130, %s131
      %p140 = scmp.eq.s32.totalorder %s33, 0
      %p141 = por %p139, %p140
      %p142 = scmp.ne.s32.totalorder %s130, %s131
      %p143 = scmp.eq.s32.totalorder %s34, 1
      %p144 = por %p142, %p143
      %p146 = scmp.ne.s32.totalorder %s131, %s145
      %p147 = scmp.eq.s32.totalorder %s34, 0
      %p148 = por %p146, %p147
      %s150 = sadd.s32 %s149, 1
      %p153 = scmp.eq.s32.totalorder %s28, 1
      %p154 = scmp.ne.s32.totalorder %s149, %s151
      %p155 = scmp.eq.s32.totalorder %s28, 0
      %p156 = por %p154, %p155
      %p157 = scmp.ne.s32.totalorder %s149, %s151
      %p158 = scmp.eq.s32.totalorder %s33, 1
      %p159 = por %p157, %p158
      %p160 = scmp.ne.s32.totalorder %s151, %s152
      %p161 = scmp.eq.s32.totalorder %s33, 0
      %p162 = por %p160, %p161
      %p163 = scmp.ne.s32.totalorder %s151, %s152
      %p164 = scmp.eq.s32.totalorder %s34, 1
      %p165 = por %p163, %p164
      %p167 = scmp.ne.s32.totalorder %s152, %s166
      %p168 = scmp.eq.s32.totalorder %s34, 0
      %p169 = por %p167, %p168
      %s171 = sadd.s32 %s170, 1
      %p174 = scmp.eq.s32.totalorder %s28, 1
      %p175 = scmp.ne.s32.totalorder %s170, %s172
      %p176 = scmp.eq.s32.totalorder %s28, 0
      %p177 = por %p175, %p176
      %p178 = scmp.ne.s32.totalorder %s170, %s172
      %p179 = scmp.eq.s32.totalorder %s33, 1
      %p180 = por %p178, %p179
      %p181 = scmp.ne.s32.totalorder %s172, %s173
      %p182 = scmp.eq.s32.totalorder %s33, 0
      %p183 = por %p181, %p182
      %p184 = scmp.ne.s32.totalorder %s172, %s173
      %p185 = scmp.eq.s32.totalorder %s34, 1
      %p186 = por %p184, %p185
      %p188 = scmp.ne.s32.totalorder %s173, %s187
      %p189 = scmp.eq.s32.totalorder %s34, 0
      %p190 = por %p188, %p189
      %s192 = sadd.s32 %s191, 1
      %p195 = scmp.eq.s32.totalorder %s28, 1
      %p196 = scmp.ne.s32.totalorder %s191, %s193
      %p197 = scmp.eq.s32.totalorder %s28, 0
      %p198 = por %p196, %p197
      %p199 = scmp.ne.s32.totalorder %s191, %s193
      %p200 = scmp.eq.s32.totalorder %s33, 1
      %p201 = por %p199, %p200
      %p202 = scmp.ne.s32.totalorder %s193, %s194
      %p203 = scmp.eq.s32.totalorder %s33, 0
      %p204 = por %p202, %p203
      %p205 = scmp.ne.s32.totalorder %s193, %s194
      %p206 = scmp.eq.s32.totalorder %s34, 1
      %p207 = por %p205, %p206
      %p209 = scmp.ne.s32.totalorder %s194, %s208
      %p210 = scmp.eq.s32.totalorder %s34, 0
      %p211 = por %p209, %p210
      %s213 = sadd.s32 %s212, 1
      %p216 = scmp.eq.s32.totalorder %s28, 1
      %p217 = scmp.ne.s32.totalorder %s212, %s214
      %p218 = scmp.eq.s32.totalorder %s28, 0
      %p219 = por %p217, %p218
      %p220 = scmp.ne.s32.totalorder %s212, %s214
      %p221 = scmp.eq.s32.totalorder %s33, 1
      %p222 = por %p220, %p221
      %p223 = scmp.ne.s32.totalorder %s214, %s215
      %p224 = scmp.eq.s32.totalorder %s33, 0
      %p225 = por %p223, %p224
      %p226 = scmp.ne.s32.totalorder %s214, %s215
      %p227 = scmp.eq.s32.totalorder %s34, 1
      %p228 = por %p226, %p227
      %p230 = scmp.ne.s32.totalorder %s215, %s229
      %p231 = scmp.eq.s32.totalorder %s34, 0
      %p232 = por %p230, %p231
      %s234 = sadd.s32 %s233, 1
      %p237 = scmp.eq.s32.totalorder %s28, 1
      %p238 = scmp.ne.s32.totalorder %s233, %s235
      %p239 = scmp.eq.s32.totalorder %s28, 0
      %p240 = por %p238, %p239
      %p241 = scmp.ne.s32.totalorder %s233, %s235
      %p242 = scmp.eq.s32.totalorder %s33, 1
      %p243 = por %p241, %p242
      %p244 = scmp.ne.s32.totalorder %s235, %s236
      %p245 = scmp.eq.s32.totalorder %s33, 0
      %p246 = por %p244, %p245
      %p247 = scmp.ne.s32.totalorder %s235, %s236
      %p248 = scmp.eq.s32.totalorder %s34, 1
      %p249 = por %p247, %p248
      %p251 = scmp.ne.s32.totalorder %s236, %s250
      %p252 = scmp.eq.s32.totalorder %s34, 0
      %p253 = por %p251, %p252
      %s255 = sadd.s32 %s254, 1
      %p258 = scmp.eq.s32.totalorder %s28, 1
      %p259 = scmp.ne.s32.totalorder %s254, %s256
      %p260 = scmp.eq.s32.totalorder %s28, 0
      %p261 = por %p259, %p260
      %p262 = scmp.ne.s32.totalorder %s254, %s256
      %p263 = scmp.eq.s32.totalorder %s33, 1
      %p264 = por %p262, %p263
      %p265 = scmp.ne.s32.totalorder %s256, %s257
      %p266 = scmp.eq.s32.totalorder %s33, 0
      %p267 = por %p265, %p266
      %p268 = scmp.ne.s32.totalorder %s256, %s257
      %p269 = scmp.eq.s32.totalorder %s34, 1
      %p270 = por %p268, %p269
      %p272 = scmp.ne.s32.totalorder %s257, %s271
      %p273 = scmp.eq.s32.totalorder %s34, 0
      %p274 = por %p272, %p273
      %s276 = sadd.s32 %s275, 1
      %p279 = scmp.eq.s32.totalorder %s28, 1
      %p280 = scmp.ne.s32.totalorder %s275, %s277
      %p281 = scmp.eq.s32.totalorder %s28, 0
      %p282 = por %p280, %p281
      %p283 = scmp.ne.s32.totalorder %s275, %s277
      %p284 = scmp.eq.s32.totalorder %s33, 1
      %p285 = por %p283, %p284
      %p286 = scmp.ne.s32.totalorder %s277, %s278
      %p287 = scmp.eq.s32.totalorder %s33, 0
      %p288 = por %p286, %p287
      %p289 = scmp.ne.s32.totalorder %s277, %s278
      %p290 = scmp.eq.s32.totalorder %s34, 1
      %p291 = por %p289, %p290
      %p293 = scmp.ne.s32.totalorder %s278, %s292
      %p294 = scmp.eq.s32.totalorder %s34, 0
      %p295 = por %p293, %p294
      %s296 = ssub.s32 %s35, %s47
      %s297 = ssub.s32 %s36, %s43
      %s298 = sor.u32 %s296, %s297
      %p299 = scmp.eq.s32.totalorder %s298, 0
      %s301 = sadd.s32 %s300, 1
      %s302 = scalar_select %p299, %s300, %s301
      %p305 = pneg %p299
      %p306 = scmp.eq.s32.totalorder %s28, 1
      %p307 = por %p305, %p306
      %p308 = scmp.ne.s32.totalorder %s300, %s303
      %p309 = scmp.eq.s32.totalorder %s28, 0
      %p310 = por %p308, %p309
      %p311 = scmp.ne.s32.totalorder %s300, %s303
      %p312 = scmp.eq.s32.totalorder %s33, 1
      %p313 = por %p311, %p312
      %p314 = scmp.ne.s32.totalorder %s303, %s304
      %p315 = scmp.eq.s32.totalorder %s33, 0
      %p316 = por %p314, %p315
      %p317 = scmp.ne.s32.totalorder %s303, %s304
      %p318 = scmp.eq.s32.totalorder %s34, 1
      %p319 = por %p317, %p318
      %p321 = scmp.ne.s32.totalorder %s304, %s320
      %p322 = scmp.eq.s32.totalorder %s34, 0
      %p323 = por %p321, %p322
      %p324 = scmp.le.s32.totalorder 1, %s28
      %p325 = scmp.lt.s32.totalorder %s28, 3
      %p326 = pnand %p324, %p325
      %p327 = pneg %p326
      // Predicated region
      $region9: #{tpu_custom_call.1} parent=5 // pred_check
        _
      $region10: #{tpu_custom_call.1} parent=5 // pred_check_branch
        %329 = sbr.rel (%p326) target = $region12
      $region11: #{tpu_custom_call.1} parent=5 // pred_region
        %s330 = ssub.s32 %s28, 1
        // Predicated region
        $region13: #{tpu_custom_call.1} parent=11 // pred_check
          %p331 = pneg %p141
        $region14: #{tpu_custom_call.1} parent=11 // pred_check_branch
          %333 = sbr.rel (%p331) target = $region16
        $region15: #{tpu_custom_call.1} parent=11 // pred_region
          %s335 = ssub.s32 1024, 1024
          %336 = vsyncadd [#allocation12], %s335
          %s337 = sshll.u32 [#allocation11], 4
          %s338 = int_to_ptr.vmem [resolvable:$true] %s337
          %343 = dma.hbm_to_vmem [thread:$0]  %s3, 1024, %s338, [#allocation12], 64, 64, 4
        $region16: #{tpu_custom_call.1} parent=11 // pred_fallthru
          _
        // Predicated region
        $region17: #{tpu_custom_call.1} parent=11 // pred_check
          %p344 = pneg %p162
        $region18: #{tpu_custom_call.1} parent=11 // pred_check_branch
          %346 = sbr.rel (%p344) target = $region20
        $region19: #{tpu_custom_call.1} parent=11 // pred_region
          _
        $region20: #{tpu_custom_call.1} parent=11 // pred_fallthru
          _
        // Predicated region
        $region21: #{tpu_custom_call.1} parent=11 // pred_check
          %p347 = pneg %p183
        $region22: #{tpu_custom_call.1} parent=11 // pred_check_branch
          %349 = sbr.rel (%p347) target = $region24
        $region23: #{tpu_custom_call.1} parent=11 // pred_region
          %s351 = ssub.s32 1024, 1024
          %352 = vsyncadd [#allocation12], %s351
          %s353 = sshll.u32 [#allocation13], 4
          %s354 = int_to_ptr.vmem [resolvable:$true] %s353
          %359 = dma.hbm_to_vmem [thread:$0]  %s5, 1024, %s354, [#allocation12], 64, 64, 4
        $region24: #{tpu_custom_call.1} parent=11 // pred_fallthru
          _
        // Predicated region
        $region25: #{tpu_custom_call.1} parent=11 // pred_check
          %p360 = pneg %p204
        $region26: #{tpu_custom_call.1} parent=11 // pred_check_branch
          %362 = sbr.rel (%p360) target = $region28
        $region27: #{tpu_custom_call.1} parent=11 // pred_region
          _
        $region28: #{tpu_custom_call.1} parent=11 // pred_fallthru
          _
        // Predicated region
        $region29: #{tpu_custom_call.1} parent=11 // pred_check
          %p363 = pneg %p225
        $region30: #{tpu_custom_call.1} parent=11 // pred_check_branch
          %365 = sbr.rel (%p363) target = $region32
        $region31: #{tpu_custom_call.1} parent=11 // pred_region
          %s367 = ssub.s32 1024, 1024
          %368 = vsyncadd [#allocation15], %s367
          %s369 = sshll.u32 [#allocation14], 4
          %s370 = int_to_ptr.vmem [resolvable:$true] %s369
          %375 = dma.hbm_to_vmem [thread:$0]  %s7, 1024, %s370, [#allocation15], 64, 64, 4
        $region32: #{tpu_custom_call.1} parent=11 // pred_fallthru
          _
        // Predicated region
        $region33: #{tpu_custom_call.1} parent=11 // pred_check
          %p376 = pneg %p246
        $region34: #{tpu_custom_call.1} parent=11 // pred_check_branch
          %378 = sbr.rel (%p376) target = $region36
        $region35: #{tpu_custom_call.1} parent=11 // pred_region
          _
        $region36: #{tpu_custom_call.1} parent=11 // pred_fallthru
          _
        // Predicated region
        $region37: #{tpu_custom_call.1} parent=11 // pred_check
          %p379 = pneg %p267
        $region38: #{tpu_custom_call.1} parent=11 // pred_check_branch
          %381 = sbr.rel (%p379) target = $region40
        $region39: #{tpu_custom_call.1} parent=11 // pred_region
          %s383 = ssub.s32 1024, 1024
          %384 = vsyncadd [#allocation15], %s383
          %s385 = sshll.u32 [#allocation16], 4
          %s386 = int_to_ptr.vmem [resolvable:$true] %s385
          %391 = dma.hbm_to_vmem [thread:$0]  %s9, 1024, %s386, [#allocation15], 64, 64, 4
        $region40: #{tpu_custom_call.1} parent=11 // pred_fallthru
          _
        // Predicated region
        $region41: #{tpu_custom_call.1} parent=11 // pred_check
          %p392 = pneg %p288
        $region42: #{tpu_custom_call.1} parent=11 // pred_check_branch
          %394 = sbr.rel (%p392) target = $region44
        $region43: #{tpu_custom_call.1} parent=11 // pred_region
          _
        $region44: #{tpu_custom_call.1} parent=11 // pred_fallthru
          _
      $region12: #{tpu_custom_call.1} parent=5 // pred_fallthru
        _
      %p395 = scmp.lt.s32.totalorder %s28, 2
      // Predicated region
      $region45: #{tpu_custom_call.1} parent=5 // pred_check
        %p396 = pneg %p395
      $region46: #{tpu_custom_call.1} parent=5 // pred_check_branch
        %398 = sbr.rel (%p396) target = $region48
      $region47: #{tpu_custom_call.1} parent=5 // pred_region
        // Predicated region
        $region49: #{tpu_custom_call.1} parent=47 // pred_check
          %p399 = pneg %p62
        $region50: #{tpu_custom_call.1} parent=47 // pred_check_branch
          %401 = sbr.rel (%p399) target = $region52
        $region51: #{tpu_custom_call.1} parent=47 // pred_region
          %s402 = sand.u32 %s52, 1
          %s403 = scalar_lea.sflag [#allocation6], %s402
          %s404 = sand.u32 %s52, 1
          %s405 = smul.addr %s404, 4
          %s406 = scalar_lea.vmem [#allocation5], %s405
          %s408 = ssub.s32 64, 64
          %409 = vsyncadd %s403, %s408
          %s410 = sadd.s32 %s36, %s35
          %s411 = smul.addr %s410, 64
          %s412 = scalar_lea.hbm %s0, %s411
          %s414 = sshll.u32 %s406, 4
          %s415 = int_to_ptr.vmem [resolvable:$true] %s414
          %417 = dma.hbm_to_vmem [thread:$0]  %s412, 64, %s415, %s403
        $region52: #{tpu_custom_call.1} parent=47 // pred_fallthru
          _
        // Predicated region
        $region53: #{tpu_custom_call.1} parent=47 // pred_check
          %p418 = pneg %p88
        $region54: #{tpu_custom_call.1} parent=47 // pred_check_branch
          %420 = sbr.rel (%p418) target = $region56
        $region55: #{tpu_custom_call.1} parent=47 // pred_region
          %s421 = sand.u32 %s28, 1
          %s422 = scalar_lea.sflag [#allocation9], %s421
          %s423 = sand.u32 %s78, 1
          %s424 = smul.addr %s423, 4
          %s425 = scalar_lea.vmem [#allocation8], %s424
          %s427 = ssub.s32 64, 64
          %428 = vsyncadd %s422, %s427
          %s429 = smul.addr %s35, 64
          %s430 = scalar_lea.hbm %s1, %s429
          %s432 = sshll.u32 %s425, 4
          %s433 = int_to_ptr.vmem [resolvable:$true] %s432
          %435 = dma.hbm_to_vmem [thread:$0]  %s430, 64, %s433, %s422
        $region56: #{tpu_custom_call.1} parent=47 // pred_fallthru
          _
        // Predicated region
        $region57: #{tpu_custom_call.1} parent=47 // pred_check
          %p436 = pneg %p114
        $region58: #{tpu_custom_call.1} parent=47 // pred_check_branch
          %438 = sbr.rel (%p436) target = $region60
        $region59: #{tpu_custom_call.1} parent=47 // pred_region
          %s439 = sand.u32 %s28, 1
          %s440 = scalar_lea.sflag [#allocation9], %s439
          %s441 = sand.u32 %s104, 1
          %s442 = smul.addr %s441, 4
          %s443 = scalar_lea.vmem [#allocation10], %s442
          %s445 = ssub.s32 64, 64
          %446 = vsyncadd %s440, %s445
          %s447 = smul.addr %s35, 64
          %s448 = scalar_lea.hbm %s2, %s447
          %s450 = sshll.u32 %s443, 4
          %s451 = int_to_ptr.vmem [resolvable:$true] %s450
          %453 = dma.hbm_to_vmem [thread:$0]  %s448, 64, %s451, %s440
        $region60: #{tpu_custom_call.1} parent=47 // pred_fallthru
          _
      $region48: #{tpu_custom_call.1} parent=5 // pred_fallthru
        _
      %p454 = scmp.le.s32.totalorder 1, %s28
      %p455 = scmp.lt.s32.totalorder %s28, 3
      %p456 = pnand %p454, %p455
      %p457 = pneg %p456
      // Predicated region
      $region61: #{tpu_custom_call.1} parent=5 // pred_check
        _
      $region62: #{tpu_custom_call.1} parent=5 // pred_check_branch
        %459 = sbr.rel (%p456) target = $region64
      $region63: #{tpu_custom_call.1} parent=5 // pred_region
        %s460 = ssub.s32 %s28, 1
        %s461 = sand.u32 %s55, 1
        %s462 = scalar_lea.sflag [#allocation6], %s461
        %s463 = sand.u32 %s55, 1
        %s464 = smul.addr %s463, 4
        %s465 = scalar_lea.vmem [#allocation5], %s464
        // Predicated region
        $region65: #{tpu_custom_call.1} parent=63 // pred_check
          %p466 = pneg %p68
        $region66: #{tpu_custom_call.1} parent=63 // pred_check_branch
          %468 = sbr.rel (%p466) target = $region68
        $region67: #{tpu_custom_call.1} parent=63 // pred_region
          %469 = dma.done %s462, 64
        $region68: #{tpu_custom_call.1} parent=63 // pred_fallthru
          _
        %s470 = sand.u32 %s33, 1
        %s471 = scalar_lea.sflag [#allocation9], %s470
        %s472 = sand.u32 %s81, 1
        %s473 = smul.addr %s472, 4
        %s474 = scalar_lea.vmem [#allocation8], %s473
        // Predicated region
        $region69: #{tpu_custom_call.1} parent=63 // pred_check
          %p475 = pneg %p94
        $region70: #{tpu_custom_call.1} parent=63 // pred_check_branch
          %477 = sbr.rel (%p475) target = $region72
        $region71: #{tpu_custom_call.1} parent=63 // pred_region
          %478 = dma.done %s471, 64
        $region72: #{tpu_custom_call.1} parent=63 // pred_fallthru
          _
        %s479 = sand.u32 %s33, 1
        %s480 = scalar_lea.sflag [#allocation9], %s479
        %s481 = sand.u32 %s107, 1
        %s482 = smul.addr %s481, 4
        %s483 = scalar_lea.vmem [#allocation10], %s482
        // Predicated region
        $region73: #{tpu_custom_call.1} parent=63 // pred_check
          %p484 = pneg %p120
        $region74: #{tpu_custom_call.1} parent=63 // pred_check_branch
          %486 = sbr.rel (%p484) target = $region76
        $region75: #{tpu_custom_call.1} parent=63 // pred_region
          %487 = dma.done %s480, 64
        $region76: #{tpu_custom_call.1} parent=63 // pred_fallthru
          _
        // Predicated region
        $region77: #{tpu_custom_call.1} parent=63 // pred_check
          %p488 = pneg %p141
        $region78: #{tpu_custom_call.1} parent=63 // pred_check_branch
          %490 = sbr.rel (%p488) target = $region80
        $region79: #{tpu_custom_call.1} parent=63 // pred_region
          %491 = dma.done [#allocation12], 1024
        $region80: #{tpu_custom_call.1} parent=63 // pred_fallthru
          _
        // Predicated region
        $region81: #{tpu_custom_call.1} parent=63 // pred_check
          %p492 = pneg %p183
        $region82: #{tpu_custom_call.1} parent=63 // pred_check_branch
          %494 = sbr.rel (%p492) target = $region84
        $region83: #{tpu_custom_call.1} parent=63 // pred_region
          %495 = dma.done [#allocation12], 1024
        $region84: #{tpu_custom_call.1} parent=63 // pred_fallthru
          _
        // Predicated region
        $region85: #{tpu_custom_call.1} parent=63 // pred_check
          %p496 = pneg %p225
        $region86: #{tpu_custom_call.1} parent=63 // pred_check_branch
          %498 = sbr.rel (%p496) target = $region88
        $region87: #{tpu_custom_call.1} parent=63 // pred_region
          %499 = dma.done [#allocation15], 1024
        $region88: #{tpu_custom_call.1} parent=63 // pred_fallthru
          _
        // Predicated region
        $region89: #{tpu_custom_call.1} parent=63 // pred_check
          %p500 = pneg %p267
        $region90: #{tpu_custom_call.1} parent=63 // pred_check_branch
          %502 = sbr.rel (%p500) target = $region92
        $region91: #{tpu_custom_call.1} parent=63 // pred_region
          %503 = dma.done [#allocation15], 1024
        $region92: #{tpu_custom_call.1} parent=63 // pred_fallthru
          _
        %s504 = sand.u32 %s55, 1
        %s505 = scalar_lea.sflag [#allocation6], %s504
        %s506 = sand.u32 %s55, 1
        %s507 = smul.addr %s506, 4
        %s508 = scalar_lea.vmem [#allocation5], %s507
        %p509 = pneg %p68
        %p510 = pneg %p65
        %s511 = sand.u32 %s33, 1
        %s512 = scalar_lea.sflag [#allocation9], %s511
        %s513 = sand.u32 %s81, 1
        %s514 = smul.addr %s513, 4
        %s515 = scalar_lea.vmem [#allocation8], %s514
        %p516 = pneg %p94
        %p517 = pneg %p91
        %s518 = sand.u32 %s33, 1
        %s519 = scalar_lea.sflag [#allocation9], %s518
        %s520 = sand.u32 %s107, 1
        %s521 = smul.addr %s520, 4
        %s522 = scalar_lea.vmem [#allocation10], %s521
        %p523 = pneg %p120
        %p524 = pneg %p117
        %p525 = pneg %p141
        %p526 = pneg %p138
        %p527 = pneg %p162
        %p528 = pneg %p159
        %p529 = pneg %p183
        %p530 = pneg %p180
        %p531 = pneg %p204
        %p532 = pneg %p201
        %p533 = pneg %p225
        %p534 = pneg %p222
        %p535 = pneg %p246
        %p536 = pneg %p243
        %p537 = pneg %p267
        %p538 = pneg %p264
        %p539 = pneg %p288
        %p540 = pneg %p285
        %p541 = pneg %p316
        %p542 = pneg %p313
        %s543 = sand.u32 %s303, 1
        %s544 = scalar_lea.sflag [#allocation7], %s543
        %s545 = sand.u32 %s303, 1
        %s546 = smul.addr %s545, 8
        %s547 = scalar_lea.vmem [#allocation17], %s546
        %p549 = scmp.eq.s32.totalorder %s38, 0
        // Predicated region
        $region93: #{tpu_custom_call.1} parent=63 // pred_check
          %p550 = pneg %p549
        $region94: #{tpu_custom_call.1} parent=63 // pred_check_branch
          %552 = sbr.rel (%p550) target = $region96
        $region95: #{tpu_custom_call.1} parent=63 // pred_region
          %v553 = vld [vmem:[%s474] sm:$0xf]
          %v554 = vld [vmem:[#allocation13] sm:$0xf]
          %v555 = vld [vmem:[#allocation13 + $0x4] sm:$0xf]
          %v556 = vld [vmem:[#allocation13 + $0x8] sm:$0xf]
          %v557 = vld [vmem:[#allocation13 + $0xc] sm:$0xf]
          %v558 = vld [vmem:[#allocation13 + $0x10] sm:$0xf]
          %v559 = vld [vmem:[#allocation13 + $0x14] sm:$0xf]
          %v560 = vld [vmem:[#allocation13 + $0x18] sm:$0xf]
          %v561 = vld [vmem:[#allocation13 + $0x1c] sm:$0xf]
          %v562 = vld [vmem:[#allocation13 + $0x20] sm:$0xf]
          %v563 = vld [vmem:[#allocation13 + $0x24] sm:$0xf]
          %v564 = vld [vmem:[#allocation13 + $0x28] sm:$0xf]
          %v565 = vld [vmem:[#allocation13 + $0x2c] sm:$0xf]
          %v566 = vld [vmem:[#allocation13 + $0x30] sm:$0xf]
          %v567 = vld [vmem:[#allocation13 + $0x34] sm:$0xf]
          %v568 = vld [vmem:[#allocation13 + $0x38] sm:$0xf]
          %v569 = vld [vmem:[#allocation13 + $0x3c] sm:$0xf]
          %v570 = vld [vmem:[%s6] sm:$0x1]
          %v572 = vlaneseq
          %v573 = vshrl.u32 %v572, 7
          %v574 = vsub.s32 0, %v573
          %v575 = vrot.slane %v570, %v574
          %v593 = vunpack.c.l.b16 %v554
          %v594 = vunpack.c.l.b16 %v555
          %v595 = vunpack.c.l.b16 %v556
          %v596 = vunpack.c.l.b16 %v557
          %v597 = vunpack.c.l.b16 %v558
          %v598 = vunpack.c.l.b16 %v559
          %v599 = vunpack.c.l.b16 %v560
          %v600 = vunpack.c.l.b16 %v561
          %v601 = vunpack.c.l.b16 %v562
          %v602 = vunpack.c.l.b16 %v563
          %v603 = vunpack.c.l.b16 %v564
          %v604 = vunpack.c.l.b16 %v565
          %v605 = vunpack.c.l.b16 %v566
          %v606 = vunpack.c.l.b16 %v567
          %v607 = vunpack.c.l.b16 %v568
          %v608 = vunpack.c.l.b16 %v569
          %v609 = vpack.c.b16 %v594, %v593
          %v610 = vpack.c.b16 %v596, %v595
          %v611 = vpack.c.b16 %v598, %v597
          %v612 = vpack.c.b16 %v600, %v599
          %v613 = vpack.c.b16 %v602, %v601
          %v614 = vpack.c.b16 %v604, %v603
          %v615 = vpack.c.b16 %v606, %v605
          %v616 = vpack.c.b16 %v608, %v607
          %625 = vmatprep.subr.bf16.mxu0 0
          %626 = vmatpush1.bf16.msra.mxu0 %v609
          %627 = vmatprep.subr.bf16.mxu0 0
          %628 = vmatpush1.bf16.msra.mxu0 %v610
          %629 = vmatprep.subr.bf16.mxu0 0
          %630 = vmatpush1.bf16.msra.mxu0 %v611
          %631 = vmatprep.subr.bf16.mxu0 0
          %632 = vmatpush1.bf16.msra.mxu0 %v612
          %633 = vmatprep.subr.bf16.mxu0 0
          %634 = vmatpush1.bf16.msra.mxu0 %v613
          %635 = vmatprep.subr.bf16.mxu0 0
          %636 = vmatpush1.bf16.msra.mxu0 %v614
          %637 = vmatprep.subr.bf16.mxu0 0
          %638 = vmatpush1.bf16.msra.mxu0 %v615
          %639 = vmatprep.subr.bf16.mxu0 0
          %640 = vmatpush1.bf16.msra.mxu0 %v616
          %641 = vmatprep.subr.bf16.mxu0 0
          %642 = vmatpush1.bf16.msra.mxu0 0
          %643 = vmatprep.subr.bf16.mxu0 0
          %644 = vmatpush1.bf16.msra.mxu0 0
          %645 = vmatprep.subr.bf16.mxu0 0
          %646 = vmatpush1.bf16.msra.mxu0 0
          %647 = vmatprep.subr.bf16.mxu0 0
          %648 = vmatpush1.bf16.msra.mxu0 0
          %649 = vmatprep.subr.bf16.mxu0 0
          %650 = vmatpush1.bf16.msra.mxu0 0
          %651 = vmatprep.subr.bf16.mxu0 0
          %652 = vmatpush1.bf16.msra.mxu0 0
          %653 = vmatprep.subr.bf16.mxu0 0
          %654 = vmatpush1.bf16.msra.mxu0 0
          %655 = vmatprep.subr.bf16.mxu0 0
          %656 = vmatpush1.bf16.msra.mxu0 0
          %657 = vmatprep.mubr.bf16.mxu0 0
          %658 = vmatmul.mubr.bf16.gmra.mrb[0].mxu0 %v553
          %v659 = vpop.f32.mrb[0].mxu0
          %v660 = vadd.f32 %v575, %v659
          %v661 = vpop.f32.mrb[0].mxu0
          %v662 = vpop.f32.mrb[0].mxu0
          %v663 = vpop.f32.mrb[0].mxu0
          %664 = vdwg.mxu0
          %v665 = vpack.c.bf16 %v660, %v660
          %666 = vst [vmem:[#allocation2] sm:$0xf] %v665
          %v667 = vld [vmem:[%s483] sm:$0xf]
          %v668 = vld [vmem:[#allocation14] sm:$0xf]
          %v669 = vld [vmem:[#allocation14 + $0x4] sm:$0xf]
          %v670 = vld [vmem:[#allocation14 + $0x8] sm:$0xf]
          %v671 = vld [vmem:[#allocation14 + $0xc] sm:$0xf]
          %v672 = vld [vmem:[#allocation14 + $0x10] sm:$0xf]
          %v673 = vld [vmem:[#allocation14 + $0x14] sm:$0xf]
          %v674 = vld [vmem:[#allocation14 + $0x18] sm:$0xf]
          %v675 = vld [vmem:[#allocation14 + $0x1c] sm:$0xf]
          %v676 = vld [vmem:[#allocation14 + $0x20] sm:$0xf]
          %v677 = vld [vmem:[#allocation14 + $0x24] sm:$0xf]
          %v678 = vld [vmem:[#allocation14 + $0x28] sm:$0xf]
          %v679 = vld [vmem:[#allocation14 + $0x2c] sm:$0xf]
          %v680 = vld [vmem:[#allocation14 + $0x30] sm:$0xf]
          %v681 = vld [vmem:[#allocation14 + $0x34] sm:$0xf]
          %v682 = vld [vmem:[#allocation14 + $0x38] sm:$0xf]
          %v683 = vld [vmem:[#allocation14 + $0x3c] sm:$0xf]
          %v684 = vld [vmem:[%s8] sm:$0x1]
          %v686 = vlaneseq
          %v687 = vshrl.u32 %v686, 7
          %v688 = vsub.s32 0, %v687
          %v689 = vrot.slane %v684, %v688
          %v707 = vunpack.c.l.b16 %v668
          %v708 = vunpack.c.l.b16 %v669
          %v709 = vunpack.c.l.b16 %v670
          %v710 = vunpack.c.l.b16 %v671
          %v711 = vunpack.c.l.b16 %v672
          %v712 = vunpack.c.l.b16 %v673
          %v713 = vunpack.c.l.b16 %v674
          %v714 = vunpack.c.l.b16 %v675
          %v715 = vunpack.c.l.b16 %v676
          %v716 = vunpack.c.l.b16 %v677
          %v717 = vunpack.c.l.b16 %v678
          %v718 = vunpack.c.l.b16 %v679
          %v719 = vunpack.c.l.b16 %v680
          %v720 = vunpack.c.l.b16 %v681
          %v721 = vunpack.c.l.b16 %v682
          %v722 = vunpack.c.l.b16 %v683
          %v723 = vpack.c.b16 %v708, %v707
          %v724 = vpack.c.b16 %v710, %v709
          %v725 = vpack.c.b16 %v712, %v711
          %v726 = vpack.c.b16 %v714, %v713
          %v727 = vpack.c.b16 %v716, %v715
          %v728 = vpack.c.b16 %v718, %v717
          %v729 = vpack.c.b16 %v720, %v719
          %v730 = vpack.c.b16 %v722, %v721
          %739 = vmatprep.subr.bf16.mxu0 0
          %740 = vmatpush1.bf16.msra.mxu0 %v723
          %741 = vmatprep.subr.bf16.mxu0 0
          %742 = vmatpush1.bf16.msra.mxu0 %v724
          %743 = vmatprep.subr.bf16.mxu0 0
          %744 = vmatpush1.bf16.msra.mxu0 %v725
          %745 = vmatprep.subr.bf16.mxu0 0
          %746 = vmatpush1.bf16.msra.mxu0 %v726
          %747 = vmatprep.subr.bf16.mxu0 0
          %748 = vmatpush1.bf16.msra.mxu0 %v727
          %749 = vmatprep.subr.bf16.mxu0 0
          %750 = vmatpush1.bf16.msra.mxu0 %v728
          %751 = vmatprep.subr.bf16.mxu0 0
          %752 = vmatpush1.bf16.msra.mxu0 %v729
          %753 = vmatprep.subr.bf16.mxu0 0
          %754 = vmatpush1.bf16.msra.mxu0 %v730
          %755 = vmatprep.subr.bf16.mxu0 0
          %756 = vmatpush1.bf16.msra.mxu0 0
          %757 = vmatprep.subr.bf16.mxu0 0
          %758 = vmatpush1.bf16.msra.mxu0 0
          %759 = vmatprep.subr.bf16.mxu0 0
          %760 = vmatpush1.bf16.msra.mxu0 0
          %761 = vmatprep.subr.bf16.mxu0 0
          %762 = vmatpush1.bf16.msra.mxu0 0
          %763 = vmatprep.subr.bf16.mxu0 0
          %764 = vmatpush1.bf16.msra.mxu0 0
          %765 = vmatprep.subr.bf16.mxu0 0
          %766 = vmatpush1.bf16.msra.mxu0 0
          %767 = vmatprep.subr.bf16.mxu0 0
          %768 = vmatpush1.bf16.msra.mxu0 0
          %769 = vmatprep.subr.bf16.mxu0 0
          %770 = vmatpush1.bf16.msra.mxu0 0
          %771 = vmatprep.mubr.bf16.mxu0 0
          %772 = vmatmul.mubr.bf16.gmra.mrb[0].mxu0 %v667
          %v773 = vpop.f32.mrb[0].mxu0
          %v774 = vadd.f32 %v689, %v773
          %v775 = vpop.f32.mrb[0].mxu0
          %v776 = vpop.f32.mrb[0].mxu0
          %v777 = vpop.f32.mrb[0].mxu0
          %778 = vdwg.mxu0
          %v779 = vpack.c.bf16 %v774, %v774
          %780 = vst [vmem:[#allocation3] sm:$0xf] %v779
        $region96: #{tpu_custom_call.1} parent=63 // pred_fallthru
          _
        %v781 = vld [vmem:[%s465] sm:$0xf]
        %v782 = vld [vmem:[#allocation11] sm:$0xf]
        %v783 = vld [vmem:[#allocation11 + $0x4] sm:$0xf]
        %v784 = vld [vmem:[#allocation11 + $0x8] sm:$0xf]
        %v785 = vld [vmem:[#allocation11 + $0xc] sm:$0xf]
        %v786 = vld [vmem:[#allocation11 + $0x10] sm:$0xf]
        %v787 = vld [vmem:[#allocation11 + $0x14] sm:$0xf]
        %v788 = vld [vmem:[#allocation11 + $0x18] sm:$0xf]
        %v789 = vld [vmem:[#allocation11 + $0x1c] sm:$0xf]
        %v790 = vld [vmem:[#allocation11 + $0x20] sm:$0xf]
        %v791 = vld [vmem:[#allocation11 + $0x24] sm:$0xf]
        %v792 = vld [vmem:[#allocation11 + $0x28] sm:$0xf]
        %v793 = vld [vmem:[#allocation11 + $0x2c] sm:$0xf]
        %v794 = vld [vmem:[#allocation11 + $0x30] sm:$0xf]
        %v795 = vld [vmem:[#allocation11 + $0x34] sm:$0xf]
        %v796 = vld [vmem:[#allocation11 + $0x38] sm:$0xf]
        %v797 = vld [vmem:[#allocation11 + $0x3c] sm:$0xf]
        %v798 = vld [vmem:[%s4] sm:$0x1]
        %v800 = vlaneseq
        %v801 = vshrl.u32 %v800, 7
        %v802 = vsub.s32 0, %v801
        %v803 = vrot.slane %v798, %v802
        %v821 = vunpack.c.l.b16 %v782
        %v822 = vunpack.c.l.b16 %v783
        %v823 = vunpack.c.l.b16 %v784
        %v824 = vunpack.c.l.b16 %v785
        %v825 = vunpack.c.l.b16 %v786
        %v826 = vunpack.c.l.b16 %v787
        %v827 = vunpack.c.l.b16 %v788
        %v828 = vunpack.c.l.b16 %v789
        %v829 = vunpack.c.l.b16 %v790
        %v830 = vunpack.c.l.b16 %v791
        %v831 = vunpack.c.l.b16 %v792
        %v832 = vunpack.c.l.b16 %v793
        %v833 = vunpack.c.l.b16 %v794
        %v834 = vunpack.c.l.b16 %v795
        %v835 = vunpack.c.l.b16 %v796
        %v836 = vunpack.c.l.b16 %v797
        %v837 = vpack.c.b16 %v822, %v821
        %v838 = vpack.c.b16 %v824, %v823
        %v839 = vpack.c.b16 %v826, %v825
        %v840 = vpack.c.b16 %v828, %v827
        %v841 = vpack.c.b16 %v830, %v829
        %v842 = vpack.c.b16 %v832, %v831
        %v843 = vpack.c.b16 %v834, %v833
        %v844 = vpack.c.b16 %v836, %v835
        %853 = vmatprep.subr.bf16.mxu0 0
        %854 = vmatpush1.bf16.msra.mxu0 %v837
        %855 = vmatprep.subr.bf16.mxu0 0
        %856 = vmatpush1.bf16.msra.mxu0 %v838
        %857 = vmatprep.subr.bf16.mxu0 0
        %858 = vmatpush1.bf16.msra.mxu0 %v839
        %859 = vmatprep.subr.bf16.mxu0 0
        %860 = vmatpush1.bf16.msra.mxu0 %v840
        %861 = vmatprep.subr.bf16.mxu0 0
        %862 = vmatpush1.bf16.msra.mxu0 %v841
        %863 = vmatprep.subr.bf16.mxu0 0
        %864 = vmatpush1.bf16.msra.mxu0 %v842
        %865 = vmatprep.subr.bf16.mxu0 0
        %866 = vmatpush1.bf16.msra.mxu0 %v843
        %867 = vmatprep.subr.bf16.mxu0 0
        %868 = vmatpush1.bf16.msra.mxu0 %v844
        %869 = vmatprep.subr.bf16.mxu0 0
        %870 = vmatpush1.bf16.msra.mxu0 0
        %871 = vmatprep.subr.bf16.mxu0 0
        %872 = vmatpush1.bf16.msra.mxu0 0
        %873 = vmatprep.subr.bf16.mxu0 0
        %874 = vmatpush1.bf16.msra.mxu0 0
        %875 = vmatprep.subr.bf16.mxu0 0
        %876 = vmatpush1.bf16.msra.mxu0 0
        %877 = vmatprep.subr.bf16.mxu0 0
        %878 = vmatpush1.bf16.msra.mxu0 0
        %879 = vmatprep.subr.bf16.mxu0 0
        %880 = vmatpush1.bf16.msra.mxu0 0
        %881 = vmatprep.subr.bf16.mxu0 0
        %882 = vmatpush1.bf16.msra.mxu0 0
        %883 = vmatprep.subr.bf16.mxu0 0
        %884 = vmatpush1.bf16.msra.mxu0 0
        %885 = vmatprep.mubr.bf16.mxu0 0
        %886 = vmatmul.mubr.bf16.gmra.mrb[0].mxu0 %v781
        %v887 = vpop.f32.mrb[0].mxu0
        %v888 = vadd.f32 %v803, %v887
        %v889 = vpop.f32.mrb[0].mxu0
        %v890 = vpop.f32.mrb[0].mxu0
        %v891 = vpop.f32.mrb[0].mxu0
        %892 = vdwg.mxu0
        %v893 = vpack.c.bf16 %v888, %v888
        %v894 = vld [vmem:[#allocation2] sm:$0xf]
        %v895 = vld [vmem:[#allocation3] sm:$0xf]
        %vm896 = vcmask 261120
        %v898 = vsel %vm896, %v893, 0
        %v901 = vsel %vm896, %v894, 0
        %903 = vmatprep.subr.bf16.mxu0 0
        %904 = vmatpush1.bf16.xpose.msra.mxu0 %v901
        %905 = vmatprep.subr.bf16.mxu0 0
        %906 = vmatpush1.bf16.xpose.msra.mxu0 0
        %907 = vmatprep.subr.bf16.mxu0 0
        %908 = vmatpush1.bf16.xpose.msra.mxu0 0
        %909 = vmatprep.subr.bf16.mxu0 0
        %910 = vmatpush1.bf16.xpose.msra.mxu0 0
        %911 = vmatprep.subr.bf16.mxu0 0
        %912 = vmatpush1.bf16.xpose.msra.mxu0 0
        %913 = vmatprep.subr.bf16.mxu0 0
        %914 = vmatpush1.bf16.xpose.msra.mxu0 0
        %915 = vmatprep.subr.bf16.mxu0 0
        %916 = vmatpush1.bf16.xpose.msra.mxu0 0
        %917 = vmatprep.subr.bf16.mxu0 0
        %918 = vmatpush1.bf16.xpose.msra.mxu0 0
        %919 = vmatprep.subr.bf16.mxu0 0
        %920 = vmatpush1.bf16.xpose.msra.mxu0 0
        %921 = vmatprep.subr.bf16.mxu0 0
        %922 = vmatpush1.bf16.xpose.msra.mxu0 0
        %923 = vmatprep.subr.bf16.mxu0 0
        %924 = vmatpush1.bf16.xpose.msra.mxu0 0
        %925 = vmatprep.subr.bf16.mxu0 0
        %926 = vmatpush1.bf16.xpose.msra.mxu0 0
        %927 = vmatprep.subr.bf16.mxu0 0
        %928 = vmatpush1.bf16.xpose.msra.mxu0 0
        %929 = vmatprep.subr.bf16.mxu0 0
        %930 = vmatpush1.bf16.xpose.msra.mxu0 0
        %931 = vmatprep.subr.bf16.mxu0 0
        %932 = vmatpush1.bf16.xpose.msra.mxu0 0
        %933 = vmatprep.subr.bf16.mxu0 0
        %934 = vmatpush1.bf16.xpose.msra.mxu0 0
        %935 = vmatprep.mubr.bf16.mxu0 0
        %936 = vmatmul.mubr.bf16.gmra.mrb[0].mxu0 %v898
        %v937 = vpop.f32.mrb[0].mxu0
        %v938 = vadd.f32 0.0, %v937
        %v939 = vpop.f32.mrb[0].mxu0
        %v940 = vpop.f32.mrb[0].mxu0
        %v941 = vpop.f32.mrb[0].mxu0
        %942 = vdwg.mxu0
        %vm943 = vcmask 64512
        %v944 = vsel %vm943, %v938, -inf
        %945 = vmax.xlane.f32.xlu0 %v944
        %v946 = vpop.xlane.xlu0 %945
        %v947 = vsub.f32 -inf, %v946
        %v948 = vmul.f32 %v947, 1.442695
        %v949 = vpow.pop %v948
        %v950 = vsub.f32 %v938, %v946
        %v951 = vmul.f32 %v950, 1.442695
        %v952 = vpow.pop %v951
        %v953 = vmul.f32 %v949, 0.0
        %v954 = vsel %vm943, %v952, 0.0
        %955 = vadd.xlane.f32.xlu0 %v954
        %v956 = vpop.xlane.xlu0 %955
        %v957 = vadd.f32 %v953, %v956
        %v958 = vpack.c.bf16 %v952, %v952
        %v960 = vsel %vm943, %v958, 0
        %vm962 = vcmask 1043456
        %v964 = vsel %vm962, %v895, 0
        %966 = vmatprep.subr.bf16.mxu0 0
        %967 = vmatpush1.bf16.msra.mxu0 %v964
        %968 = vmatprep.subr.bf16.mxu0 0
        %969 = vmatpush1.bf16.msra.mxu0 0
        %970 = vmatprep.subr.bf16.mxu0 0
        %971 = vmatpush1.bf16.msra.mxu0 0
        %972 = vmatprep.subr.bf16.mxu0 0
        %973 = vmatpush1.bf16.msra.mxu0 0
        %974 = vmatprep.subr.bf16.mxu0 0
        %975 = vmatpush1.bf16.msra.mxu0 0
        %976 = vmatprep.subr.bf16.mxu0 0
        %977 = vmatpush1.bf16.msra.mxu0 0
        %978 = vmatprep.subr.bf16.mxu0 0
        %979 = vmatpush1.bf16.msra.mxu0 0
        %980 = vmatprep.subr.bf16.mxu0 0
        %981 = vmatpush1.bf16.msra.mxu0 0
        %982 = vmatprep.subr.bf16.mxu0 0
        %983 = vmatpush1.bf16.msra.mxu0 0
        %984 = vmatprep.subr.bf16.mxu0 0
        %985 = vmatpush1.bf16.msra.mxu0 0
        %986 = vmatprep.subr.bf16.mxu0 0
        %987 = vmatpush1.bf16.msra.mxu0 0
        %988 = vmatprep.subr.bf16.mxu0 0
        %989 = vmatpush1.bf16.msra.mxu0 0
        %990 = vmatprep.subr.bf16.mxu0 0
        %991 = vmatpush1.bf16.msra.mxu0 0
        %992 = vmatprep.subr.bf16.mxu0 0
        %993 = vmatpush1.bf16.msra.mxu0 0
        %994 = vmatprep.subr.bf16.mxu0 0
        %995 = vmatpush1.bf16.msra.mxu0 0
        %996 = vmatprep.subr.bf16.mxu0 0
        %997 = vmatpush1.bf16.msra.mxu0 0
        %998 = vmatprep.mubr.bf16.mxu0 0
        %999 = vmatmul.mubr.bf16.gmra.mrb[0].mxu0 %v960
        %v1000 = vpop.f32.mrb[0].mxu0
        %v1001 = vadd.f32 0.0, %v1000
        %v1002 = vpop.f32.mrb[0].mxu0
        %v1003 = vpop.f32.mrb[0].mxu0
        %v1004 = vpop.f32.mrb[0].mxu0
        %1005 = vdwg.mxu0
        %v1006 = vadd.f32 %v953, %v1001
        %v1007 = vrcp.pop %v957
        %v1008 = vmul.f32 %v1006, %v1007
        %v1009 = vpack.c.bf16 %v1008, %v1008
        %vm1010 = vcmask 257024
        %1011 = vst.msk [vmem:[#allocation4] sm:$0xf] %vm1010, %v1009
        %v1012 = vld [vmem:[#allocation2] sm:$0xf]
        %v1013 = vld [vmem:[#allocation3] sm:$0xf]
        %1015 = vrot.lane.b32.xlu0 %v893, 96
        %v1016 = vpop.permute.xlu0 %1015
        %v1018 = vunpack.c.l.b16 %v1012
        %v1019 = vpack.c.b16 %v1018, %v1018
        %1020 = vrot.lane.b32.xlu0 %v1019, 96
        %v1021 = vpop.permute.xlu0 %1020
        %v1023 = vsel %vm896, %v1016, 0
        %v1026 = vsel %vm896, %v1021, 0
        %1028 = vmatprep.subr.bf16.mxu0 0
        %1029 = vmatpush1.bf16.xpose.msra.mxu0 %v1026
        %1030 = vmatprep.subr.bf16.mxu0 0
        %1031 = vmatpush1.bf16.xpose.msra.mxu0 0
        %1032 = vmatprep.subr.bf16.mxu0 0
        %1033 = vmatpush1.bf16.xpose.msra.mxu0 0
        %1034 = vmatprep.subr.bf16.mxu0 0
        %1035 = vmatpush1.bf16.xpose.msra.mxu0 0
        %1036 = vmatprep.subr.bf16.mxu0 0
        %1037 = vmatpush1.bf16.xpose.msra.mxu0 0
        %1038 = vmatprep.subr.bf16.mxu0 0
        %1039 = vmatpush1.bf16.xpose.msra.mxu0 0
        %1040 = vmatprep.subr.bf16.mxu0 0
        %1041 = vmatpush1.bf16.xpose.msra.mxu0 0
        %1042 = vmatprep.subr.bf16.mxu0 0
        %1043 = vmatpush1.bf16.xpose.msra.mxu0 0
        %1044 = vmatprep.subr.bf16.mxu0 0
        %1045 = vmatpush1.bf16.xpose.msra.mxu0 0
        %1046 = vmatprep.subr.bf16.mxu0 0
        %1047 = vmatpush1.bf16.xpose.msra.mxu0 0
        %1048 = vmatprep.subr.bf16.mxu0 0
        %1049 = vmatpush1.bf16.xpose.msra.mxu0 0
        %1050 = vmatprep.subr.bf16.mxu0 0
        %1051 = vmatpush1.bf16.xpose.msra.mxu0 0
        %1052 = vmatprep.subr.bf16.mxu0 0
        %1053 = vmatpush1.bf16.xpose.msra.mxu0 0
        %1054 = vmatprep.subr.bf16.mxu0 0
        %1055 = vmatpush1.bf16.xpose.msra.mxu0 0
        %1056 = vmatprep.subr.bf16.mxu0 0
        %1057 = vmatpush1.bf16.xpose.msra.mxu0 0
        %1058 = vmatprep.subr.bf16.mxu0 0
        %1059 = vmatpush1.bf16.xpose.msra.mxu0 0
        %1060 = vmatprep.mubr.bf16.mxu0 0
        %1061 = vmatmul.mubr.bf16.gmra.mrb[0].mxu0 %v1023
        %v1062 = vpop.f32.mrb[0].mxu0
        %v1063 = vadd.f32 0.0, %v1062
        %v1064 = vpop.f32.mrb[0].mxu0
        %v1065 = vpop.f32.mrb[0].mxu0
        %v1066 = vpop.f32.mrb[0].mxu0
        %1067 = vdwg.mxu0
        %v1068 = vsel %vm943, %v1063, -inf
        %1069 = vmax.xlane.f32.xlu0 %v1068
        %v1070 = vpop.xlane.xlu0 %1069
        %v1071 = vsub.f32 -inf, %v1070
        %v1072 = vmul.f32 %v1071, 1.442695
        %v1073 = vpow.pop %v1072
        %v1074 = vsub.f32 %v1063, %v1070
        %v1075 = vmul.f32 %v1074, 1.442695
        %v1076 = vpow.pop %v1075
        %v1077 = vmul.f32 %v1073, 0.0
        %v1078 = vsel %vm943, %v1076, 0.0
        %1079 = vadd.xlane.f32.xlu0 %v1078
        %v1080 = vpop.xlane.xlu0 %1079
        %v1081 = vadd.f32 %v1077, %v1080
        %v1082 = vpack.c.bf16 %v1076, %v1076
        %v1084 = vunpack.c.l.b16 %v1013
        %v1085 = vpack.c.b16 %v1084, %v1084
        %1086 = vrot.lane.b32.xlu0 %v1085, 96
        %v1087 = vpop.permute.xlu0 %1086
        %v1089 = vsel %vm943, %v1082, 0
        %v1092 = vsel %vm962, %v1087, 0
        %1094 = vmatprep.subr.bf16.mxu0 0
        %1095 = vmatpush1.bf16.msra.mxu0 %v1092
        %1096 = vmatprep.subr.bf16.mxu0 0
        %1097 = vmatpush1.bf16.msra.mxu0 0
        %1098 = vmatprep.subr.bf16.mxu0 0
        %1099 = vmatpush1.bf16.msra.mxu0 0
        %1100 = vmatprep.subr.bf16.mxu0 0
        %1101 = vmatpush1.bf16.msra.mxu0 0
        %1102 = vmatprep.subr.bf16.mxu0 0
        %1103 = vmatpush1.bf16.msra.mxu0 0
        %1104 = vmatprep.subr.bf16.mxu0 0
        %1105 = vmatpush1.bf16.msra.mxu0 0
        %1106 = vmatprep.subr.bf16.mxu0 0
        %1107 = vmatpush1.bf16.msra.mxu0 0
        %1108 = vmatprep.subr.bf16.mxu0 0
        %1109 = vmatpush1.bf16.msra.mxu0 0
        %1110 = vmatprep.subr.bf16.mxu0 0
        %1111 = vmatpush1.bf16.msra.mxu0 0
        %1112 = vmatprep.subr.bf16.mxu0 0
        %1113 = vmatpush1.bf16.msra.mxu0 0
        %1114 = vmatprep.subr.bf16.mxu0 0
        %1115 = vmatpush1.bf16.msra.mxu0 0
        %1116 = vmatprep.subr.bf16.mxu0 0
        %1117 = vmatpush1.bf16.msra.mxu0 0
        %1118 = vmatprep.subr.bf16.mxu0 0
        %1119 = vmatpush1.bf16.msra.mxu0 0
        %1120 = vmatprep.subr.bf16.mxu0 0
        %1121 = vmatpush1.bf16.msra.mxu0 0
        %1122 = vmatprep.subr.bf16.mxu0 0
        %1123 = vmatpush1.bf16.msra.mxu0 0
        %1124 = vmatprep.subr.bf16.mxu0 0
        %1125 = vmatpush1.bf16.msra.mxu0 0
        %1126 = vmatprep.mubr.bf16.mxu0 0
        %1127 = vmatmul.mubr.bf16.gmra.mrb[0].mxu0 %v1089
        %v1128 = vpop.f32.mrb[0].mxu0
        %v1129 = vadd.f32 0.0, %v1128
        %v1130 = vpop.f32.mrb[0].mxu0
        %v1131 = vpop.f32.mrb[0].mxu0
        %v1132 = vpop.f32.mrb[0].mxu0
        %1133 = vdwg.mxu0
        %v1134 = vadd.f32 %v1077, %v1129
        %v1135 = vrcp.pop %v1081
        %v1136 = vmul.f32 %v1134, %v1135
        %v1137 = vpack.c.bf16 %v1136, %v1136
        %v1139 = vunpack.c.l.b16 %v1137
        %v1140 = vpack.c.b16 %v1139, %v1139
        %1141 = vrot.lane.b32.xlu0 %v1140, 32
        %v1142 = vpop.permute.xlu0 %1141
        %vm1144 = vcmask 519424
        %1145 = vst.msk [vmem:[#allocation4] sm:$0xf] %vm1144, %v1142
        %v1146 = vld [vmem:[#allocation2] sm:$0xf]
        %v1147 = vld [vmem:[#allocation3] sm:$0xf]
        %1148 = vrot.lane.b32.xlu0 %v893, 64
        %v1149 = vpop.permute.xlu0 %1148
        %v1151 = vunpack.c.l.b16 %v1146
        %v1152 = vpack.c.b16 %v1151, %v1151
        %1153 = vrot.lane.b32.xlu0 %v1152, 64
        %v1154 = vpop.permute.xlu0 %1153
        %v1156 = vsel %vm896, %v1149, 0
        %v1159 = vsel %vm896, %v1154, 0
        %1161 = vmatprep.subr.bf16.mxu0 0
        %1162 = vmatpush1.bf16.xpose.msra.mxu0 %v1159
        %1163 = vmatprep.subr.bf16.mxu0 0
        %1164 = vmatpush1.bf16.xpose.msra.mxu0 0
        %1165 = vmatprep.subr.bf16.mxu0 0
        %1166 = vmatpush1.bf16.xpose.msra.mxu0 0
        %1167 = vmatprep.subr.bf16.mxu0 0
        %1168 = vmatpush1.bf16.xpose.msra.mxu0 0
        %1169 = vmatprep.subr.bf16.mxu0 0
        %1170 = vmatpush1.bf16.xpose.msra.mxu0 0
        %1171 = vmatprep.subr.bf16.mxu0 0
        %1172 = vmatpush1.bf16.xpose.msra.mxu0 0
        %1173 = vmatprep.subr.bf16.mxu0 0
        %1174 = vmatpush1.bf16.xpose.msra.mxu0 0
        %1175 = vmatprep.subr.bf16.mxu0 0
        %1176 = vmatpush1.bf16.xpose.msra.mxu0 0
        %1177 = vmatprep.subr.bf16.mxu0 0
        %1178 = vmatpush1.bf16.xpose.msra.mxu0 0
        %1179 = vmatprep.subr.bf16.mxu0 0
        %1180 = vmatpush1.bf16.xpose.msra.mxu0 0
        %1181 = vmatprep.subr.bf16.mxu0 0
        %1182 = vmatpush1.bf16.xpose.msra.mxu0 0
        %1183 = vmatprep.subr.bf16.mxu0 0
        %1184 = vmatpush1.bf16.xpose.msra.mxu0 0
        %1185 = vmatprep.subr.bf16.mxu0 0
        %1186 = vmatpush1.bf16.xpose.msra.mxu0 0
        %1187 = vmatprep.subr.bf16.mxu0 0
        %1188 = vmatpush1.bf16.xpose.msra.mxu0 0
        %1189 = vmatprep.subr.bf16.mxu0 0
        %1190 = vmatpush1.bf16.xpose.msra.mxu0 0
        %1191 = vmatprep.subr.bf16.mxu0 0
        %1192 = vmatpush1.bf16.xpose.msra.mxu0 0
        %1193 = vmatprep.mubr.bf16.mxu0 0
        %1194 = vmatmul.mubr.bf16.gmra.mrb[0].mxu0 %v1156
        %v1195 = vpop.f32.mrb[0].mxu0
        %v1196 = vadd.f32 0.0, %v1195
        %v1197 = vpop.f32.mrb[0].mxu0
        %v1198 = vpop.f32.mrb[0].mxu0
        %v1199 = vpop.f32.mrb[0].mxu0
        %1200 = vdwg.mxu0
        %v1201 = vsel %vm943, %v1196, -inf
        %1202 = vmax.xlane.f32.xlu0 %v1201
        %v1203 = vpop.xlane.xlu0 %1202
        %v1204 = vsub.f32 -inf, %v1203
        %v1205 = vmul.f32 %v1204, 1.442695
        %v1206 = vpow.pop %v1205
        %v1207 = vsub.f32 %v1196, %v1203
        %v1208 = vmul.f32 %v1207, 1.442695
        %v1209 = vpow.pop %v1208
        %v1210 = vmul.f32 %v1206, 0.0
        %v1211 = vsel %vm943, %v1209, 0.0
        %1212 = vadd.xlane.f32.xlu0 %v1211
        %v1213 = vpop.xlane.xlu0 %1212
        %v1214 = vadd.f32 %v1210, %v1213
        %v1215 = vpack.c.bf16 %v1209, %v1209
        %v1217 = vunpack.c.l.b16 %v1147
        %v1218 = vpack.c.b16 %v1217, %v1217
        %1219 = vrot.lane.b32.xlu0 %v1218, 64
        %v1220 = vpop.permute.xlu0 %1219
        %v1222 = vsel %vm943, %v1215, 0
        %v1225 = vsel %vm962, %v1220, 0
        %1227 = vmatprep.subr.bf16.mxu0 0
        %1228 = vmatpush1.bf16.msra.mxu0 %v1225
        %1229 = vmatprep.subr.bf16.mxu0 0
        %1230 = vmatpush1.bf16.msra.mxu0 0
        %1231 = vmatprep.subr.bf16.mxu0 0
        %1232 = vmatpush1.bf16.msra.mxu0 0
        %1233 = vmatprep.subr.bf16.mxu0 0
        %1234 = vmatpush1.bf16.msra.mxu0 0
        %1235 = vmatprep.subr.bf16.mxu0 0
        %1236 = vmatpush1.bf16.msra.mxu0 0
        %1237 = vmatprep.subr.bf16.mxu0 0
        %1238 = vmatpush1.bf16.msra.mxu0 0
        %1239 = vmatprep.subr.bf16.mxu0 0
        %1240 = vmatpush1.bf16.msra.mxu0 0
        %1241 = vmatprep.subr.bf16.mxu0 0
        %1242 = vmatpush1.bf16.msra.mxu0 0
        %1243 = vmatprep.subr.bf16.mxu0 0
        %1244 = vmatpush1.bf16.msra.mxu0 0
        %1245 = vmatprep.subr.bf16.mxu0 0
        %1246 = vmatpush1.bf16.msra.mxu0 0
        %1247 = vmatprep.subr.bf16.mxu0 0
        %1248 = vmatpush1.bf16.msra.mxu0 0
        %1249 = vmatprep.subr.bf16.mxu0 0
        %1250 = vmatpush1.bf16.msra.mxu0 0
        %1251 = vmatprep.subr.bf16.mxu0 0
        %1252 = vmatpush1.bf16.msra.mxu0 0
        %1253 = vmatprep.subr.bf16.mxu0 0
        %1254 = vmatpush1.bf16.msra.mxu0 0
        %1255 = vmatprep.subr.bf16.mxu0 0
        %1256 = vmatpush1.bf16.msra.mxu0 0
        %1257 = vmatprep.subr.bf16.mxu0 0
        %1258 = vmatpush1.bf16.msra.mxu0 0
        %1259 = vmatprep.mubr.bf16.mxu0 0
        %1260 = vmatmul.mubr.bf16.gmra.mrb[0].mxu0 %v1222
        %v1261 = vpop.f32.mrb[0].mxu0
        %v1262 = vadd.f32 0.0, %v1261
        %v1263 = vpop.f32.mrb[0].mxu0
        %v1264 = vpop.f32.mrb[0].mxu0
        %v1265 = vpop.f32.mrb[0].mxu0
        %1266 = vdwg.mxu0
        %v1267 = vadd.f32 %v1210, %v1262
        %v1268 = vrcp.pop %v1214
        %v1269 = vmul.f32 %v1267, %v1268
        %v1270 = vpack.c.bf16 %v1269, %v1269
        %v1272 = vunpack.c.l.b16 %v1270
        %v1273 = vpack.c.b16 %v1272, %v1272
        %1274 = vrot.lane.b32.xlu0 %v1273, 64
        %v1275 = vpop.permute.xlu0 %1274
        %vm1277 = vcmask 781824
        %1278 = vst.msk [vmem:[#allocation4] sm:$0xf] %vm1277, %v1275
        %v1279 = vld [vmem:[#allocation2] sm:$0xf]
        %v1280 = vld [vmem:[#allocation3] sm:$0xf]
        %1281 = vrot.lane.b32.xlu0 %v893, 32
        %v1282 = vpop.permute.xlu0 %1281
        %v1284 = vunpack.c.l.b16 %v1279
        %v1285 = vpack.c.b16 %v1284, %v1284
        %1286 = vrot.lane.b32.xlu0 %v1285, 32
        %v1287 = vpop.permute.xlu0 %1286
        %v1289 = vsel %vm896, %v1282, 0
        %v1292 = vsel %vm896, %v1287, 0
        %1294 = vmatprep.subr.bf16.mxu0 0
        %1295 = vmatpush1.bf16.xpose.msra.mxu0 %v1292
        %1296 = vmatprep.subr.bf16.mxu0 0
        %1297 = vmatpush1.bf16.xpose.msra.mxu0 0
        %1298 = vmatprep.subr.bf16.mxu0 0
        %1299 = vmatpush1.bf16.xpose.msra.mxu0 0
        %1300 = vmatprep.subr.bf16.mxu0 0
        %1301 = vmatpush1.bf16.xpose.msra.mxu0 0
        %1302 = vmatprep.subr.bf16.mxu0 0
        %1303 = vmatpush1.bf16.xpose.msra.mxu0 0
        %1304 = vmatprep.subr.bf16.mxu0 0
        %1305 = vmatpush1.bf16.xpose.msra.mxu0 0
        %1306 = vmatprep.subr.bf16.mxu0 0
        %1307 = vmatpush1.bf16.xpose.msra.mxu0 0
        %1308 = vmatprep.subr.bf16.mxu0 0
        %1309 = vmatpush1.bf16.xpose.msra.mxu0 0
        %1310 = vmatprep.subr.bf16.mxu0 0
        %1311 = vmatpush1.bf16.xpose.msra.mxu0 0
        %1312 = vmatprep.subr.bf16.mxu0 0
        %1313 = vmatpush1.bf16.xpose.msra.mxu0 0
        %1314 = vmatprep.subr.bf16.mxu0 0
        %1315 = vmatpush1.bf16.xpose.msra.mxu0 0
        %1316 = vmatprep.subr.bf16.mxu0 0
        %1317 = vmatpush1.bf16.xpose.msra.mxu0 0
        %1318 = vmatprep.subr.bf16.mxu0 0
        %1319 = vmatpush1.bf16.xpose.msra.mxu0 0
        %1320 = vmatprep.subr.bf16.mxu0 0
        %1321 = vmatpush1.bf16.xpose.msra.mxu0 0
        %1322 = vmatprep.subr.bf16.mxu0 0
        %1323 = vmatpush1.bf16.xpose.msra.mxu0 0
        %1324 = vmatprep.subr.bf16.mxu0 0
        %1325 = vmatpush1.bf16.xpose.msra.mxu0 0
        %1326 = vmatprep.mubr.bf16.mxu0 0
        %1327 = vmatmul.mubr.bf16.gmra.mrb[0].mxu0 %v1289
        %v1328 = vpop.f32.mrb[0].mxu0
        %v1329 = vadd.f32 0.0, %v1328
        %v1330 = vpop.f32.mrb[0].mxu0
        %v1331 = vpop.f32.mrb[0].mxu0
        %v1332 = vpop.f32.mrb[0].mxu0
        %1333 = vdwg.mxu0
        %v1334 = vsel %vm943, %v1329, -inf
        %1335 = vmax.xlane.f32.xlu0 %v1334
        %v1336 = vpop.xlane.xlu0 %1335
        %v1337 = vsub.f32 -inf, %v1336
        %v1338 = vmul.f32 %v1337, 1.442695
        %v1339 = vpow.pop %v1338
        %v1340 = vsub.f32 %v1329, %v1336
        %v1341 = vmul.f32 %v1340, 1.442695
        %v1342 = vpow.pop %v1341
        %v1343 = vmul.f32 %v1339, 0.0
        %v1344 = vsel %vm943, %v1342, 0.0
        %1345 = vadd.xlane.f32.xlu0 %v1344
        %v1346 = vpop.xlane.xlu0 %1345
        %v1347 = vadd.f32 %v1343, %v1346
        %v1348 = vpack.c.bf16 %v1342, %v1342
        %v1350 = vunpack.c.l.b16 %v1280
        %v1351 = vpack.c.b16 %v1350, %v1350
        %1352 = vrot.lane.b32.xlu0 %v1351, 32
        %v1353 = vpop.permute.xlu0 %1352
        %v1355 = vsel %vm943, %v1348, 0
        %v1358 = vsel %vm962, %v1353, 0
        %1360 = vmatprep.subr.bf16.mxu0 0
        %1361 = vmatpush1.bf16.msra.mxu0 %v1358
        %1362 = vmatprep.subr.bf16.mxu0 0
        %1363 = vmatpush1.bf16.msra.mxu0 0
        %1364 = vmatprep.subr.bf16.mxu0 0
        %1365 = vmatpush1.bf16.msra.mxu0 0
        %1366 = vmatprep.subr.bf16.mxu0 0
        %1367 = vmatpush1.bf16.msra.mxu0 0
        %1368 = vmatprep.subr.bf16.mxu0 0
        %1369 = vmatpush1.bf16.msra.mxu0 0
        %1370 = vmatprep.subr.bf16.mxu0 0
        %1371 = vmatpush1.bf16.msra.mxu0 0
        %1372 = vmatprep.subr.bf16.mxu0 0
        %1373 = vmatpush1.bf16.msra.mxu0 0
        %1374 = vmatprep.subr.bf16.mxu0 0
        %1375 = vmatpush1.bf16.msra.mxu0 0
        %1376 = vmatprep.subr.bf16.mxu0 0
        %1377 = vmatpush1.bf16.msra.mxu0 0
        %1378 = vmatprep.subr.bf16.mxu0 0
        %1379 = vmatpush1.bf16.msra.mxu0 0
        %1380 = vmatprep.subr.bf16.mxu0 0
        %1381 = vmatpush1.bf16.msra.mxu0 0
        %1382 = vmatprep.subr.bf16.mxu0 0
        %1383 = vmatpush1.bf16.msra.mxu0 0
        %1384 = vmatprep.subr.bf16.mxu0 0
        %1385 = vmatpush1.bf16.msra.mxu0 0
        %1386 = vmatprep.subr.bf16.mxu0 0
        %1387 = vmatpush1.bf16.msra.mxu0 0
        %1388 = vmatprep.subr.bf16.mxu0 0
        %1389 = vmatpush1.bf16.msra.mxu0 0
        %1390 = vmatprep.subr.bf16.mxu0 0
        %1391 = vmatpush1.bf16.msra.mxu0 0
        %1392 = vmatprep.mubr.bf16.mxu0 0
        %1393 = vmatmul.mubr.bf16.gmra.mrb[0].mxu0 %v1355
        %v1394 = vpop.f32.mrb[0].mxu0
        %v1395 = vadd.f32 0.0, %v1394
        %v1396 = vpop.f32.mrb[0].mxu0
        %v1397 = vpop.f32.mrb[0].mxu0
        %v1398 = vpop.f32.mrb[0].mxu0
        %1399 = vdwg.mxu0
        %v1400 = vadd.f32 %v1343, %v1395
        %v1401 = vrcp.pop %v1347
        %v1402 = vmul.f32 %v1400, %v1401
        %v1403 = vpack.c.bf16 %v1402, %v1402
        %v1405 = vunpack.c.l.b16 %v1403
        %v1406 = vpack.c.b16 %v1405, %v1405
        %1407 = vrot.lane.b32.xlu0 %v1406, 96
        %v1408 = vpop.permute.xlu0 %1407
        %vm1410 = vcmask 1044224
        %1411 = vst.msk [vmem:[#allocation4] sm:$0xf] %vm1410, %v1408
        %v1412 = vld [vmem:[#allocation4] sm:$0xf]
        %v1413 = vld [vmem:[#allocation16] sm:$0xf]
        %v1414 = vld [vmem:[#allocation16 + $0x4] sm:$0xf]
        %v1415 = vld [vmem:[#allocation16 + $0x8] sm:$0xf]
        %v1416 = vld [vmem:[#allocation16 + $0xc] sm:$0xf]
        %v1417 = vld [vmem:[#allocation16 + $0x10] sm:$0xf]
        %v1418 = vld [vmem:[#allocation16 + $0x14] sm:$0xf]
        %v1419 = vld [vmem:[#allocation16 + $0x18] sm:$0xf]
        %v1420 = vld [vmem:[#allocation16 + $0x1c] sm:$0xf]
        %v1421 = vld [vmem:[#allocation16 + $0x20] sm:$0xf]
        %v1422 = vld [vmem:[#allocation16 + $0x24] sm:$0xf]
        %v1423 = vld [vmem:[#allocation16 + $0x28] sm:$0xf]
        %v1424 = vld [vmem:[#allocation16 + $0x2c] sm:$0xf]
        %v1425 = vld [vmem:[#allocation16 + $0x30] sm:$0xf]
        %v1426 = vld [vmem:[#allocation16 + $0x34] sm:$0xf]
        %v1427 = vld [vmem:[#allocation16 + $0x38] sm:$0xf]
        %v1428 = vld [vmem:[#allocation16 + $0x3c] sm:$0xf]
        %v1429 = vld [vmem:[%s10] sm:$0x1]
        %v1431 = vlaneseq
        %v1432 = vshrl.u32 %v1431, 7
        %v1433 = vsub.s32 0, %v1432
        %v1434 = vrot.slane %v1429, %v1433
        %v1452 = vunpack.c.l.b16 %v1413
        %v1453 = vunpack.c.l.b16 %v1414
        %v1454 = vunpack.c.l.b16 %v1415
        %v1455 = vunpack.c.l.b16 %v1416
        %v1456 = vunpack.c.l.b16 %v1417
        %v1457 = vunpack.c.l.b16 %v1418
        %v1458 = vunpack.c.l.b16 %v1419
        %v1459 = vunpack.c.l.b16 %v1420
        %v1460 = vunpack.c.l.b16 %v1421
        %v1461 = vunpack.c.l.b16 %v1422
        %v1462 = vunpack.c.l.b16 %v1423
        %v1463 = vunpack.c.l.b16 %v1424
        %v1464 = vunpack.c.l.b16 %v1425
        %v1465 = vunpack.c.l.b16 %v1426
        %v1466 = vunpack.c.l.b16 %v1427
        %v1467 = vunpack.c.l.b16 %v1428
        %v1468 = vpack.c.b16 %v1453, %v1452
        %v1469 = vpack.c.b16 %v1455, %v1454
        %v1470 = vpack.c.b16 %v1457, %v1456
        %v1471 = vpack.c.b16 %v1459, %v1458
        %v1472 = vpack.c.b16 %v1461, %v1460
        %v1473 = vpack.c.b16 %v1463, %v1462
        %v1474 = vpack.c.b16 %v1465, %v1464
        %v1475 = vpack.c.b16 %v1467, %v1466
        %1484 = vmatprep.subr.bf16.mxu0 0
        %1485 = vmatpush1.bf16.msra.mxu0 %v1468
        %1486 = vmatprep.subr.bf16.mxu0 0
        %1487 = vmatpush1.bf16.msra.mxu0 %v1469
        %1488 = vmatprep.subr.bf16.mxu0 0
        %1489 = vmatpush1.bf16.msra.mxu0 %v1470
        %1490 = vmatprep.subr.bf16.mxu0 0
        %1491 = vmatpush1.bf16.msra.mxu0 %v1471
        %1492 = vmatprep.subr.bf16.mxu0 0
        %1493 = vmatpush1.bf16.msra.mxu0 %v1472
        %1494 = vmatprep.subr.bf16.mxu0 0
        %1495 = vmatpush1.bf16.msra.mxu0 %v1473
        %1496 = vmatprep.subr.bf16.mxu0 0
        %1497 = vmatpush1.bf16.msra.mxu0 %v1474
        %1498 = vmatprep.subr.bf16.mxu0 0
        %1499 = vmatpush1.bf16.msra.mxu0 %v1475
        %1500 = vmatprep.subr.bf16.mxu0 0
        %1501 = vmatpush1.bf16.msra.mxu0 0
        %1502 = vmatprep.subr.bf16.mxu0 0
        %1503 = vmatpush1.bf16.msra.mxu0 0
        %1504 = vmatprep.subr.bf16.mxu0 0
        %1505 = vmatpush1.bf16.msra.mxu0 0
        %1506 = vmatprep.subr.bf16.mxu0 0
        %1507 = vmatpush1.bf16.msra.mxu0 0
        %1508 = vmatprep.subr.bf16.mxu0 0
        %1509 = vmatpush1.bf16.msra.mxu0 0
        %1510 = vmatprep.subr.bf16.mxu0 0
        %1511 = vmatpush1.bf16.msra.mxu0 0
        %1512 = vmatprep.subr.bf16.mxu0 0
        %1513 = vmatpush1.bf16.msra.mxu0 0
        %1514 = vmatprep.subr.bf16.mxu0 0
        %1515 = vmatpush1.bf16.msra.mxu0 0
        %1516 = vmatprep.mubr.bf16.mxu0 0
        %1517 = vmatmul.mubr.bf16.gmra.mrb[0].mxu0 %v1412
        %v1518 = vpop.f32.mrb[0].mxu0
        %v1519 = vadd.f32 %v1434, %v1518
        %v1520 = vpop.f32.mrb[0].mxu0
        %v1521 = vpop.f32.mrb[0].mxu0
        %v1522 = vpop.f32.mrb[0].mxu0
        %1523 = vdwg.mxu0
        %1524 = vst [vmem:[%s547] sm:$0xff] %v1519
        %s1525 = sand.u32 %s303, 1
        %s1526 = scalar_lea.sflag [#allocation7], %s1525
        %s1527 = sand.u32 %s303, 1
        %s1528 = smul.addr %s1527, 8
        %s1529 = scalar_lea.vmem [#allocation17], %s1528
        // Predicated region
        $region97: #{tpu_custom_call.1} parent=63 // pred_check
          %p1530 = pneg %p313
        $region98: #{tpu_custom_call.1} parent=63 // pred_check_branch
          %1532 = sbr.rel (%p1530) target = $region100
        $region99: #{tpu_custom_call.1} parent=63 // pred_region
          %s1534 = ssub.s32 128, 128
          %1535 = vsyncadd %s1526, %s1534
          %s1536 = sadd.s32 %s38, %s37
          %s1537 = smul.addr %s1536, 128
          %s1538 = scalar_lea.hbm %s11, %s1537
          %s1540 = sshll.u32 %s1529, 4
          %s1541 = int_to_ptr.vmem [resolvable:$true] %s1540
          %1543 = dma.vmem_to_hbm [thread:$0]  %s1541, 128, %s1538, %s1526
        $region100: #{tpu_custom_call.1} parent=63 // pred_fallthru
          _
      $region64: #{tpu_custom_call.1} parent=5 // pred_fallthru
        _
      %p1544 = scmp.le.s32.totalorder 2, %s28
      // Predicated region
      $region101: #{tpu_custom_call.1} parent=5 // pred_check
        %p1545 = pneg %p1544
      $region102: #{tpu_custom_call.1} parent=5 // pred_check_branch
        %1547 = sbr.rel (%p1545) target = $region104
      $region103: #{tpu_custom_call.1} parent=5 // pred_region
        %s1548 = ssub.s32 %s28, 2
        // Predicated region
        $region105: #{tpu_custom_call.1} parent=103 // pred_check
          %p1549 = pneg %p319
        $region106: #{tpu_custom_call.1} parent=103 // pred_check_branch
          %1551 = sbr.rel (%p1549) target = $region108
        $region107: #{tpu_custom_call.1} parent=103 // pred_region
          %s1552 = sand.u32 %s304, 1
          %s1553 = scalar_lea.sflag [#allocation7], %s1552
          %s1554 = sand.u32 %s304, 1
          %s1555 = smul.addr %s1554, 8
          %s1556 = scalar_lea.vmem [#allocation17], %s1555
          %1557 = dma.done %s1553, 128
        $region108: #{tpu_custom_call.1} parent=103 // pred_fallthru
          _
      $region104: #{tpu_custom_call.1} parent=5 // pred_fallthru
        _
    $region6: #{tpu_custom_call.1} parent=1 // loop_footer
      %s32 = sadd.s32 1, %s28
    $region7: #{tpu_custom_call.1} parent=1 // loop_footer_branch
      %27 = sbr.rel target = $region3
    $region8: #{tpu_custom_call.1} parent=1 // loop_exit
      _
    %1558 = vsyncpa [#allocation6], 1
    %s1559 = scalar_lea.sflag [#allocation6], 1
    %1560 = vsyncpa %s1559, 1
    %1561 = vsyncpa [#allocation9], 1
    %s1562 = scalar_lea.sflag [#allocation9], 1
    %1563 = vsyncpa %s1562, 1
    %1564 = vsyncpa [#allocation12], 1
    %1565 = vsyncpa [#allocation15], 1
    %1566 = vsyncpa [#allocation7], 1
    %s1567 = scalar_lea.sflag [#allocation7], 1
    %1568 = vsyncpa %s1567, 1

</llo_original>
